<compile_context>
chip_gen: v7x
topology: tpu7x:2x2x1
jax: 0.10.0
libtpu: 0.0.40
codegen_flags: <defaults>
</compile_context>

<pallas_src>
import functools

import numpy as np
import jax
import jax.numpy as jnp
from jax.experimental import pallas as pl
from jax.experimental.pallas import tpu as pltpu


# ----------------------------------------------------------------------------
# The fused Pallas kernel
# ----------------------------------------------------------------------------
def _gen_fused_kernel(x_ref, w1_ref, w2_ref, w3_ref, g1_ref, b1_ref, g2_ref,
                      b2_ref, o_ref, a1_ref, a2_ref, *, B, nz, nf, nf2, nc, act):
    f32 = jnp.float32
    eps = 1e-5

    # Zero the padded / zero-dilated staging buffers (borders stay 0).
    a1_ref[...] = jnp.zeros(a1_ref.shape, f32)
    a2_ref[...] = jnp.zeros(a2_ref.shape, f32)

    g1 = g1_ref[...]            # (1, nf)
    b1 = b1_ref[...]
    g2 = g2_ref[...]            # (1, nf2)
    b2 = b2_ref[...]
    w2m = w2_ref[...]           # (16*nf, nf2)
    w3m = [w3_ref[s] for s in range(4)]   # 4 x (4*nf2, nc)

    # ---------------- layer 1: ConvT(nz, nf, 4, 1, 0) on a 1x1 input --------
    # == one dense matmul; column layout is (h, w, co).
    h1 = jnp.dot(x_ref[...], w1_ref[...], preferred_element_type=f32)   # (B, 16*nf)
    slabs = [h1[:, p * nf:(p + 1) * nf] for p in range(16)]             # 16 x (B, nf)

    # BatchNorm (training-mode batch stats over (B,4,4)) + ReLU.
    n1 = 16 * B
    tot1 = slabs[0]
    for p in range(1, 16):
        tot1 = tot1 + slabs[p]
    mean1 = jnp.sum(tot1, axis=0, keepdims=True) * (1.0 / n1)           # (1, nf)
    cen1 = [s - mean1 for s in slabs]
    sq1 = cen1[0] * cen1[0]
    for p in range(1, 16):
        sq1 = sq1 + cen1[p] * cen1[p]
    var1 = jnp.sum(sq1, axis=0, keepdims=True) * (1.0 / n1)
    scale1 = g1 * jax.lax.rsqrt(var1 + eps)

    # Scatter the normalized 4x4 map into the zero-dilated, zero-padded
    # staging buffer consumed by layer 2 (dilation stride 2, pad 2 -> 11x11).
    for p in range(16):
        y = jnp.maximum(cen1[p] * scale1 + b1, 0.0)                     # (B, nf)
        ih = 2 + 2 * (p // 4)
        iw = 2 + 2 * (p % 4)
        for b in range(B):
            a1_ref[b, ih, iw:iw + 1, :] = y[b:b + 1, :]

    # ---------------- layer 2: ConvT(nf, nf2, 4, 2, 1): 4x4 -> 8x8 ----------
    # stride-1 correlation of the dilated+padded input with the flipped
    # kernel, as ONE im2col matmul per image (contraction 4*4*nf = 512).
    r2 = []
    for b in range(B):
        xp = a1_ref[b]                                                  # (11, 11, nf)
        taps = []
        for kh in range(4):
            for kw in range(4):
                taps.append(xp[kh:kh + 8, kw:kw + 8, :].reshape(64, nf))
        lhs = jnp.concatenate(taps, axis=1)                             # (64, 16*nf)
        r2.append(jnp.dot(lhs, w2m, preferred_element_type=f32))        # (64, nf2)

    # BatchNorm + ReLU.
    n2 = 64 * B
    tot2 = r2[0]
    for b in range(1, B):
        tot2 = tot2 + r2[b]
    mean2 = jnp.sum(tot2, axis=0, keepdims=True) * (1.0 / n2)           # (1, nf2)
    cen2 = [r - mean2 for r in r2]
    sq2 = cen2[0] * cen2[0]
    for b in range(1, B):
        sq2 = sq2 + cen2[b] * cen2[b]
    var2 = jnp.sum(sq2, axis=0, keepdims=True) * (1.0 / n2)
    scale2 = g2 * jax.lax.rsqrt(var2 + eps)

    # Store the 8x8 map, 1-padded (interior sublane-aligned at column 8).
    for b in range(B):
        y2 = jnp.maximum(cen2[b] * scale2 + b2, 0.0)                    # (64, nf2)
        a2_ref[b, 1:9, 8:16, :] = y2.reshape(8, 8, nf2)

    # ---------------- layer 3: ConvT(nf2, nc, 4, 2, 1): 8x8 -> 16x16 --------
    # phase-split (sub-pixel): output phase (sh, sw) is a stride-1 2x2-tap
    # correlation of the UNdilated 1-padded input -> no zero-FLOPs.
    cols = []
    for b in range(B):
        xp2 = a2_ref[b]                                                 # (10, 24, nf2)
        for sh in range(2):
            for sw in range(2):
                taps = []
                for dh in range(2):
                    for dw in range(2):
                        h0 = sh + dh
                        w0 = 7 + sw + dw
                        taps.append(xp2[h0:h0 + 8, w0:w0 + 8, :].reshape(64, nf2))
                lhs = jnp.concatenate(taps, axis=1)                     # (64, 4*nf2)
                cols.append(jnp.dot(lhs, w3m[sh * 2 + sw],
                                    preferred_element_type=f32))        # (64, nc)

    out = jnp.concatenate(cols, axis=1)                                 # (64, B*4*nc)
    if act == 'tanh':
        out = jnp.tanh(out)
    elif act == 'sigmoid':
        out = jax.nn.sigmoid(out)
    o_ref[...] = out.astype(o_ref.dtype)


# ----------------------------------------------------------------------------
# Parameter init (mirrors Gen.__init__ + weights_init) + matmul-ready layouts
# ----------------------------------------------------------------------------
def _phase_weight_mats(w_pt):
    """(Cin, Cout, 4, 4) ConvT stride-2 pad-1 weight -> (4, 4*Cin, Cout):
    phase (sh, sw), tap (dh, dw) uses kernel index kh=3-sh-2*dh, kw=3-sw-2*dw."""
    mats = []
    for sh in range(2):
        for sw in range(2):
            blocks = []
            for dh in range(2):
                for dw in range(2):
                    blocks.append(w_pt[:, :, 3 - sh - 2 * dh, 3 - sw - 2 * dw])
            mats.append(jnp.concatenate(blocks, axis=0))                # (4*Cin, Cout)
    return jnp.stack(mats, axis=0)


def init_gen_params(key, nz=16, ngf=8, nc=1, w=16, k=4):
    nb_blocks = int(np.log(w) / np.log(2)) - 3
    assert nb_blocks == 1 and k == 4, "fused kernel is specialized to w=16"
    nf = ngf * 2 ** (nb_blocks + 1)      # 32
    nf2 = nf // 2                        # 16

    k1, k2, k3, kg1, kg2 = jax.random.split(key, 5)
    w1_pt = (0.02 * jax.random.normal(k1, (nz, nf, k, k))).astype(jnp.float32)
    w2_pt = (0.02 * jax.random.normal(k2, (nf, nf2, k, k))).astype(jnp.float32)
    w3_pt = (0.02 * jax.random.normal(k3, (nf2, nc, k, k))).astype(jnp.float32)
    g1 = (1.0 + 0.02 * jax.random.normal(kg1, (nf,))).astype(jnp.float32)
    g2 = (1.0 + 0.02 * jax.random.normal(kg2, (nf2,))).astype(jnp.float32)
    b1 = jnp.zeros((nf,), jnp.float32)
    b2 = jnp.zeros((nf2,), jnp.float32)

    return dict(
        # raw PyTorch-layout params (used by the pure-JAX reference)
        w1_pt=w1_pt, w2_pt=w2_pt, w3_pt=w3_pt,
        gamma1=g1, beta1=b1, gamma2=g2, beta2=b2,
        # matmul-ready layouts, hoisted to init (no in-kernel weight relayout)
        w1_mat=jnp.transpose(w1_pt, (0, 2, 3, 1)).reshape(nz, k * k * nf),
        w2_mat=jnp.transpose(w2_pt[:, :, ::-1, ::-1], (2, 3, 0, 1)).reshape(k * k * nf, nf2),
        w3_phases=_phase_weight_mats(w3_pt),
        g1_row=g1.reshape(1, nf), b1_row=b1.reshape(1, nf),
        g2_row=g2.reshape(1, nf2), b2_row=b2.reshape(1, nf2),
    )


# ----------------------------------------------------------------------------
# Public forward pass (NCHW in / NCHW out, like the PyTorch module)
# ----------------------------------------------------------------------------
def gen_forward(params, x_nchw, act='tanh'):
    B, nz = x_nchw.shape[0], x_nchw.shape[1]
    nf = params['g1_row'].shape[1]
    nf2 = params['g2_row'].shape[1]
    nc = params['w3_phases'].shape[2]

    x2d = x_nchw.reshape(B, nz).astype(jnp.float32)

    kernel = functools.partial(_gen_fused_kernel, B=B, nz=nz, nf=nf, nf2=nf2,
                               nc=nc, act=act)

    def full(shape):
        return pl.BlockSpec(shape, lambda i, _n=len(shape): (0,) * _n)

    o = pl.pallas_call(
        kernel,
        out_shape=jax.ShapeDtypeStruct((64, B * 4 * nc), jnp.float32),
        grid=(1,),
        in_specs=[
            full((B, nz)),
            full((nz, 16 * nf)),
            full((16 * nf, nf2)),
            full((4, 4 * nf2, nc)),
            full((1, nf)), full((1, nf)),
            full((1, nf2)), full((1, nf2)),
        ],
        out_specs=full((64, B * 4 * nc)),
        scratch_shapes=[
            pltpu.VMEM((B, 11, 11, nf), jnp.float32),    # dilated+padded layer-1 out
            pltpu.VMEM((B, 10, 24, nf2), jnp.float32),   # 1-padded layer-2 out
        ],
        compiler_params=pltpu.CompilerParams(
            dimension_semantics=("arbitrary",)),
    )(x2d, params['w1_mat'], params['w2_mat'], params['w3_phases'],
      params['g1_row'], params['b1_row'], params['g2_row'], params['b2_row'])

    # De-interleave phases / restore NCHW — pure layout plumbing in the wrapper.
    o = o.reshape(8, 8, B, 2, 2, nc)           # (qh, qw, b, sh, sw, co)
    o = jnp.transpose(o, (2, 5, 0, 3, 1, 4))   # (b, co, qh, sh, qw, sw)
    return o.reshape(B, nc, 16, 16)


# ----------------------------------------------------------------------------
# Pure-JAX reference (for the in-script correctness check)
# ----------------------------------------------------------------------------
def _corr_hwio(w_pt):
    return jnp.transpose(w_pt[:, :, ::-1, ::-1], (2, 3, 0, 1))


def gen_forward_ref(params, x_nchw, act='tanh'):
    x = jnp.transpose(x_nchw, (0, 2, 3, 1))
    layers = [
        (params['w1_pt'], 1, 0, params['gamma1'], params['beta1']),
        (params['w2_pt'], 2, 1, params['gamma2'], params['beta2']),
        (params['w3_pt'], 2, 1, None, None),
    ]
    for w_pt, s, p, g, bta in layers:
        k = w_pt.shape[-1]
        x = jax.lax.conv_general_dilated(
            x, _corr_hwio(w_pt), window_strides=(1, 1),
            padding=[(k - 1 - p, k - 1 - p)] * 2, lhs_dilation=(s, s),
            dimension_numbers=('NHWC', 'HWIO', 'NHWC'))
        if g is not None:
            mean = jnp.mean(x, axis=(0, 1, 2), keepdims=True)
            var = jnp.mean((x - mean) ** 2, axis=(0, 1, 2), keepdims=True)
            x = (x - mean) * jax.lax.rsqrt(var + 1e-5) * g + bta
            x = jnp.maximum(x, 0.0)
        elif act == 'tanh':
            x = jnp.tanh(x)
        elif act == 'sigmoid':
            x = jax.nn.sigmoid(x)
    return jnp.transpose(x, (0, 3, 1, 2))


# ----------------------------------------------------------------------------
if __name__ == "__main__":
    nz, ngf, nc, w, batch = 16, 8, 1, 16, 2

    key = jax.random.PRNGKey(0)
    key, kx, kp = jax.random.split(key, 3)
    x = jax.random.normal(kx, (batch, nz, 1, 1), dtype=jnp.float32)   # NCHW
    params = init_gen_params(kp, nz=nz, ngf=ngf, nc=nc, w=w)

    out = jax.block_until_ready(gen_forward(params, x, act='tanh'))
    assert out.shape == (batch, nc, w, w), out.shape

    ref = jax.block_until_ready(gen_forward_ref(params, x, act='tanh'))
    np.testing.assert_allclose(np.asarray(out), np.asarray(ref),
                               atol=2e-3, rtol=2e-3)

    print("KERNEL_OK")
</pallas_src>

<mosaic_0001>
module attributes {stable_mosaic.version = 11 : i64} {
  func.func @_gen_fused_kernel(%arg0: i32, %arg1: memref<2x16xf32, #tpu.memory_space<vmem>>, %arg2: memref<16x512xf32, #tpu.memory_space<vmem>>, %arg3: memref<512x16xf32, #tpu.memory_space<vmem>>, %arg4: memref<4x64x1xf32, #tpu.memory_space<vmem>>, %arg5: memref<1x32xf32, #tpu.memory_space<vmem>>, %arg6: memref<1x32xf32, #tpu.memory_space<vmem>>, %arg7: memref<1x16xf32, #tpu.memory_space<vmem>>, %arg8: memref<1x16xf32, #tpu.memory_space<vmem>>, %arg9: memref<64x8xf32, #tpu.memory_space<vmem>>, %arg10: memref<2x11x11x32xf32, #tpu.memory_space<vmem>>, %arg11: memref<2x10x24x16xf32, #tpu.memory_space<vmem>>) attributes {dimension_semantics = [#tpu.dimension_semantics<arbitrary>], iteration_bounds = array<i64: 1>, scalar_prefetch = 0 : i64, scratch_operands = 2 : i64, tpu.core_type = #tpu.core_type<tc>, window_params = [{pipeline_mode = #tpu.pipeline_mode<synchronous>, transform_indices = @transform_0, window_bounds = array<i64: 2, 16>}, {pipeline_mode = #tpu.pipeline_mode<synchronous>, transform_indices = @transform_1, window_bounds = array<i64: 16, 512>}, {pipeline_mode = #tpu.pipeline_mode<synchronous>, transform_indices = @transform_2, window_bounds = array<i64: 512, 16>}, {pipeline_mode = #tpu.pipeline_mode<synchronous>, transform_indices = @transform_3, window_bounds = array<i64: 4, 64, 1>}, {pipeline_mode = #tpu.pipeline_mode<synchronous>, transform_indices = @transform_4, window_bounds = array<i64: 1, 32>}, {pipeline_mode = #tpu.pipeline_mode<synchronous>, transform_indices = @transform_5, window_bounds = array<i64: 1, 32>}, {pipeline_mode = #tpu.pipeline_mode<synchronous>, transform_indices = @transform_6, window_bounds = array<i64: 1, 16>}, {pipeline_mode = #tpu.pipeline_mode<synchronous>, transform_indices = @transform_7, window_bounds = array<i64: 1, 16>}, {pipeline_mode = #tpu.pipeline_mode<synchronous>, transform_indices = @transform_8, window_bounds = array<i64: 64, 8>}]} {
    %cst = arith.constant 0.000000e+00 : f32
    %0 = vector.broadcast %cst : f32 to vector<2x11x11x32xf32>
    %c0 = arith.constant 0 : index
    %c0_0 = arith.constant 0 : index
    %c0_1 = arith.constant 0 : index
    %c0_2 = arith.constant 0 : index
    %1 = vector.load %arg10[%c0, %c0_0, %c0_1, %c0_2] : memref<2x11x11x32xf32, #tpu.memory_space<vmem>>, vector<2x11x11x32xf32>
    tpu.vector_store %arg10[%c0, %c0_0, %c0_1, %c0_2], %0 {strides = array<i32>} : memref<2x11x11x32xf32, #tpu.memory_space<vmem>>, vector<2x11x11x32xf32>,
    %cst_3 = arith.constant 0.000000e+00 : f32
    %2 = vector.broadcast %cst_3 : f32 to vector<2x10x24x16xf32>
    %c0_4 = arith.constant 0 : index
    %c0_5 = arith.constant 0 : index
    %c0_6 = arith.constant 0 : index
    %c0_7 = arith.constant 0 : index
    %3 = vector.load %arg11[%c0_4, %c0_5, %c0_6, %c0_7] : memref<2x10x24x16xf32, #tpu.memory_space<vmem>>, vector<2x10x24x16xf32>
    tpu.vector_store %arg11[%c0_4, %c0_5, %c0_6, %c0_7], %2 {strides = array<i32>} : memref<2x10x24x16xf32, #tpu.memory_space<vmem>>, vector<2x10x24x16xf32>,
    %c0_8 = arith.constant 0 : index
    %c0_9 = arith.constant 0 : index
    %4 = vector.load %arg5[%c0_8, %c0_9] : memref<1x32xf32, #tpu.memory_space<vmem>>, vector<1x32xf32>
    %c0_10 = arith.constant 0 : index
    %c0_11 = arith.constant 0 : index
    %5 = vector.load %arg6[%c0_10, %c0_11] : memref<1x32xf32, #tpu.memory_space<vmem>>, vector<1x32xf32>
    %c0_12 = arith.constant 0 : index
    %c0_13 = arith.constant 0 : index
    %6 = vector.load %arg7[%c0_12, %c0_13] : memref<1x16xf32, #tpu.memory_space<vmem>>, vector<1x16xf32>
    %c0_14 = arith.constant 0 : index
    %c0_15 = arith.constant 0 : index
    %7 = vector.load %arg8[%c0_14, %c0_15] : memref<1x16xf32, #tpu.memory_space<vmem>>, vector<1x16xf32>
    %c0_16 = arith.constant 0 : index
    %c0_17 = arith.constant 0 : index
    %8 = vector.load %arg3[%c0_16, %c0_17] : memref<512x16xf32, #tpu.memory_space<vmem>>, vector<512x16xf32>
    %c0_18 = arith.constant 0 : index
    %c0_19 = arith.constant 0 : index
    %c0_20 = arith.constant 0 : index
    %9 = vector.load %arg4[%c0_18, %c0_19, %c0_20] : memref<4x64x1xf32, #tpu.memory_space<vmem>>, vector<1x64x1xf32>
    %10 = vector.shape_cast %9 : vector<1x64x1xf32> to vector<64x1xf32>
    %c1 = arith.constant 1 : index
    %c0_21 = arith.constant 0 : index
    %c0_22 = arith.constant 0 : index
    %11 = vector.load %arg4[%c1, %c0_21, %c0_22] : memref<4x64x1xf32, #tpu.memory_space<vmem>>, vector<1x64x1xf32>
    %12 = vector.shape_cast %11 : vector<1x64x1xf32> to vector<64x1xf32>
    %c2 = arith.constant 2 : index
    %c0_23 = arith.constant 0 : index
    %c0_24 = arith.constant 0 : index
    %13 = vector.load %arg4[%c2, %c0_23, %c0_24] : memref<4x64x1xf32, #tpu.memory_space<vmem>>, vector<1x64x1xf32>
    %14 = vector.shape_cast %13 : vector<1x64x1xf32> to vector<64x1xf32>
    %c3 = arith.constant 3 : index
    %c0_25 = arith.constant 0 : index
    %c0_26 = arith.constant 0 : index
    %15 = vector.load %arg4[%c3, %c0_25, %c0_26] : memref<4x64x1xf32, #tpu.memory_space<vmem>>, vector<1x64x1xf32>
    %16 = vector.shape_cast %15 : vector<1x64x1xf32> to vector<64x1xf32>
    %c0_27 = arith.constant 0 : index
    %c0_28 = arith.constant 0 : index
    %17 = vector.load %arg1[%c0_27, %c0_28] : memref<2x16xf32, #tpu.memory_space<vmem>>, vector<2x16xf32>
    %c0_29 = arith.constant 0 : index
    %c0_30 = arith.constant 0 : index
    %18 = vector.load %arg2[%c0_29, %c0_30] : memref<16x512xf32, #tpu.memory_space<vmem>>, vector<16x512xf32>
    %cst_31 = arith.constant dense<0.000000e+00> : vector<2x512xf32>
    %19 = tpu.matmul %17, %18, %cst_31 {dimension_numbers = #tpu.dot_dimension_numbers<[1], [0], [0], [1], [0, 0, 1, 1], [], []>} : vector<2x16xf32>, vector<16x512xf32>, vector<2x512xf32> -> vector<2x512xf32>
    %20 = vector.extract_strided_slice %19 {offsets = [0, 0], sizes = [2, 32], strides = [1, 1]} : vector<2x512xf32> to vector<2x32xf32>
    %21 = vector.extract_strided_slice %19 {offsets = [0, 32], sizes = [2, 32], strides = [1, 1]} : vector<2x512xf32> to vector<2x32xf32>
    %22 = vector.extract_strided_slice %19 {offsets = [0, 64], sizes = [2, 32], strides = [1, 1]} : vector<2x512xf32> to vector<2x32xf32>
    %23 = vector.extract_strided_slice %19 {offsets = [0, 96], sizes = [2, 32], strides = [1, 1]} : vector<2x512xf32> to vector<2x32xf32>
    %24 = vector.extract_strided_slice %19 {offsets = [0, 128], sizes = [2, 32], strides = [1, 1]} : vector<2x512xf32> to vector<2x32xf32>
    %25 = vector.extract_strided_slice %19 {offsets = [0, 160], sizes = [2, 32], strides = [1, 1]} : vector<2x512xf32> to vector<2x32xf32>
    %26 = vector.extract_strided_slice %19 {offsets = [0, 192], sizes = [2, 32], strides = [1, 1]} : vector<2x512xf32> to vector<2x32xf32>
    %27 = vector.extract_strided_slice %19 {offsets = [0, 224], sizes = [2, 32], strides = [1, 1]} : vector<2x512xf32> to vector<2x32xf32>
    %28 = vector.extract_strided_slice %19 {offsets = [0, 256], sizes = [2, 32], strides = [1, 1]} : vector<2x512xf32> to vector<2x32xf32>
    %29 = vector.extract_strided_slice %19 {offsets = [0, 288], sizes = [2, 32], strides = [1, 1]} : vector<2x512xf32> to vector<2x32xf32>
    %30 = vector.extract_strided_slice %19 {offsets = [0, 320], sizes = [2, 32], strides = [1, 1]} : vector<2x512xf32> to vector<2x32xf32>
    %31 = vector.extract_strided_slice %19 {offsets = [0, 352], sizes = [2, 32], strides = [1, 1]} : vector<2x512xf32> to vector<2x32xf32>
    %32 = vector.extract_strided_slice %19 {offsets = [0, 384], sizes = [2, 32], strides = [1, 1]} : vector<2x512xf32> to vector<2x32xf32>
    %33 = vector.extract_strided_slice %19 {offsets = [0, 416], sizes = [2, 32], strides = [1, 1]} : vector<2x512xf32> to vector<2x32xf32>
    %34 = vector.extract_strided_slice %19 {offsets = [0, 448], sizes = [2, 32], strides = [1, 1]} : vector<2x512xf32> to vector<2x32xf32>
    %35 = vector.extract_strided_slice %19 {offsets = [0, 480], sizes = [2, 32], strides = [1, 1]} : vector<2x512xf32> to vector<2x32xf32>
    %36 = arith.addf %20, %21 : vector<2x32xf32>
    %37 = arith.addf %36, %22 : vector<2x32xf32>
    %38 = arith.addf %37, %23 : vector<2x32xf32>
    %39 = arith.addf %38, %24 : vector<2x32xf32>
    %40 = arith.addf %39, %25 : vector<2x32xf32>
    %41 = arith.addf %40, %26 : vector<2x32xf32>
    %42 = arith.addf %41, %27 : vector<2x32xf32>
    %43 = arith.addf %42, %28 : vector<2x32xf32>
    %44 = arith.addf %43, %29 : vector<2x32xf32>
    %45 = arith.addf %44, %30 : vector<2x32xf32>
    %46 = arith.addf %45, %31 : vector<2x32xf32>
    %47 = arith.addf %46, %32 : vector<2x32xf32>
    %48 = arith.addf %47, %33 : vector<2x32xf32>
    %49 = arith.addf %48, %34 : vector<2x32xf32>
    %50 = arith.addf %49, %35 : vector<2x32xf32>
    %cst_32 = arith.constant dense<0.000000e+00> : vector<32xf32>
    %51 = vector.multi_reduction <add>, %50, %cst_32 [0] : vector<2x32xf32> to vector<32xf32>
    %52 = vector.shape_cast %51 : vector<32xf32> to vector<1x32xf32>
    %cst_33 = arith.constant 3.125000e-02 : f32
    %53 = vector.broadcast %cst_33 : f32 to vector<1x32xf32>
    %54 = arith.mulf %52, %53 : vector<1x32xf32>
    %55 = vector.broadcast %54 : vector<1x32xf32> to vector<2x32xf32>
    %56 = arith.subf %20, %55 : vector<2x32xf32>
    %57 = vector.broadcast %54 : vector<1x32xf32> to vector<2x32xf32>
    %58 = arith.subf %21, %57 : vector<2x32xf32>
    %59 = vector.broadcast %54 : vector<1x32xf32> to vector<2x32xf32>
    %60 = arith.subf %22, %59 : vector<2x32xf32>
    %61 = vector.broadcast %54 : vector<1x32xf32> to vector<2x32xf32>
    %62 = arith.subf %23, %61 : vector<2x32xf32>
    %63 = vector.broadcast %54 : vector<1x32xf32> to vector<2x32xf32>
    %64 = arith.subf %24, %63 : vector<2x32xf32>
    %65 = vector.broadcast %54 : vector<1x32xf32> to vector<2x32xf32>
    %66 = arith.subf %25, %65 : vector<2x32xf32>
    %67 = vector.broadcast %54 : vector<1x32xf32> to vector<2x32xf32>
    %68 = arith.subf %26, %67 : vector<2x32xf32>
    %69 = vector.broadcast %54 : vector<1x32xf32> to vector<2x32xf32>
    %70 = arith.subf %27, %69 : vector<2x32xf32>
    %71 = vector.broadcast %54 : vector<1x32xf32> to vector<2x32xf32>
    %72 = arith.subf %28, %71 : vector<2x32xf32>
    %73 = vector.broadcast %54 : vector<1x32xf32> to vector<2x32xf32>
    %74 = arith.subf %29, %73 : vector<2x32xf32>
    %75 = vector.broadcast %54 : vector<1x32xf32> to vector<2x32xf32>
    %76 = arith.subf %30, %75 : vector<2x32xf32>
    %77 = vector.broadcast %54 : vector<1x32xf32> to vector<2x32xf32>
    %78 = arith.subf %31, %77 : vector<2x32xf32>
    %79 = vector.broadcast %54 : vector<1x32xf32> to vector<2x32xf32>
    %80 = arith.subf %32, %79 : vector<2x32xf32>
    %81 = vector.broadcast %54 : vector<1x32xf32> to vector<2x32xf32>
    %82 = arith.subf %33, %81 : vector<2x32xf32>
    %83 = vector.broadcast %54 : vector<1x32xf32> to vector<2x32xf32>
    %84 = arith.subf %34, %83 : vector<2x32xf32>
    %85 = vector.broadcast %54 : vector<1x32xf32> to vector<2x32xf32>
    %86 = arith.subf %35, %85 : vector<2x32xf32>
    %87 = arith.mulf %56, %56 : vector<2x32xf32>
    %88 = arith.mulf %58, %58 : vector<2x32xf32>
    %89 = arith.addf %87, %88 : vector<2x32xf32>
    %90 = arith.mulf %60, %60 : vector<2x32xf32>
    %91 = arith.addf %89, %90 : vector<2x32xf32>
    %92 = arith.mulf %62, %62 : vector<2x32xf32>
    %93 = arith.addf %91, %92 : vector<2x32xf32>
    %94 = arith.mulf %64, %64 : vector<2x32xf32>
    %95 = arith.addf %93, %94 : vector<2x32xf32>
    %96 = arith.mulf %66, %66 : vector<2x32xf32>
    %97 = arith.addf %95, %96 : vector<2x32xf32>
    %98 = arith.mulf %68, %68 : vector<2x32xf32>
    %99 = arith.addf %97, %98 : vector<2x32xf32>
    %100 = arith.mulf %70, %70 : vector<2x32xf32>
    %101 = arith.addf %99, %100 : vector<2x32xf32>
    %102 = arith.mulf %72, %72 : vector<2x32xf32>
    %103 = arith.addf %101, %102 : vector<2x32xf32>
    %104 = arith.mulf %74, %74 : vector<2x32xf32>
    %105 = arith.addf %103, %104 : vector<2x32xf32>
    %106 = arith.mulf %76, %76 : vector<2x32xf32>
    %107 = arith.addf %105, %106 : vector<2x32xf32>
    %108 = arith.mulf %78, %78 : vector<2x32xf32>
    %109 = arith.addf %107, %108 : vector<2x32xf32>
    %110 = arith.mulf %80, %80 : vector<2x32xf32>
    %111 = arith.addf %109, %110 : vector<2x32xf32>
    %112 = arith.mulf %82, %82 : vector<2x32xf32>
    %113 = arith.addf %111, %112 : vector<2x32xf32>
    %114 = arith.mulf %84, %84 : vector<2x32xf32>
    %115 = arith.addf %113, %114 : vector<2x32xf32>
    %116 = arith.mulf %86, %86 : vector<2x32xf32>
    %117 = arith.addf %115, %116 : vector<2x32xf32>
    %cst_34 = arith.constant dense<0.000000e+00> : vector<32xf32>
    %118 = vector.multi_reduction <add>, %117, %cst_34 [0] : vector<2x32xf32> to vector<32xf32>
    %119 = vector.shape_cast %118 : vector<32xf32> to vector<1x32xf32>
    %cst_35 = arith.constant 3.125000e-02 : f32
    %120 = vector.broadcast %cst_35 : f32 to vector<1x32xf32>
    %121 = arith.mulf %119, %120 : vector<1x32xf32>
    %cst_36 = arith.constant 9.99999974E-6 : f32
    %122 = vector.broadcast %cst_36 : f32 to vector<1x32xf32>
    %123 = arith.addf %121, %122 : vector<1x32xf32>
    %124 = math.rsqrt %123 : vector<1x32xf32>
    %125 = arith.mulf %4, %124 : vector<1x32xf32>
    %126 = vector.broadcast %125 : vector<1x32xf32> to vector<2x32xf32>
    %127 = arith.mulf %56, %126 : vector<2x32xf32>
    %128 = vector.broadcast %5 : vector<1x32xf32> to vector<2x32xf32>
    %129 = arith.addf %127, %128 : vector<2x32xf32>
    %cst_37 = arith.constant 0.000000e+00 : f32
    %130 = vector.broadcast %cst_37 : f32 to vector<2x32xf32>
    %131 = arith.maximumf %129, %130 : vector<2x32xf32>
    %132 = vector.extract_strided_slice %131 {offsets = [0, 0], sizes = [1, 32], strides = [1, 1]} : vector<2x32xf32> to vector<1x32xf32>
    %c0_38 = arith.constant 0 : index
    %c2_39 = arith.constant 2 : index
    %c2_40 = arith.constant 2 : index
    %c0_41 = arith.constant 0 : index
    %133 = vector.load %arg10[%c0_38, %c2_39, %c2_40, %c0_41] : memref<2x11x11x32xf32, #tpu.memory_space<vmem>>, vector<1x1x1x32xf32>
    %134 = vector.shape_cast %133 : vector<1x1x1x32xf32> to vector<1x32xf32>
    %135 = vector.shape_cast %132 : vector<1x32xf32> to vector<1x1x1x32xf32>
    tpu.vector_store %arg10[%c0_38, %c2_39, %c2_40, %c0_41], %135 {strides = array<i32>} : memref<2x11x11x32xf32, #tpu.memory_space<vmem>>, vector<1x1x1x32xf32>,
    %136 = vector.extract_strided_slice %131 {offsets = [1, 0], sizes = [1, 32], strides = [1, 1]} : vector<2x32xf32> to vector<1x32xf32>
    %c1_42 = arith.constant 1 : index
    %c2_43 = arith.constant 2 : index
    %c2_44 = arith.constant 2 : index
    %c0_45 = arith.constant 0 : index
    %137 = vector.load %arg10[%c1_42, %c2_43, %c2_44, %c0_45] : memref<2x11x11x32xf32, #tpu.memory_space<vmem>>, vector<1x1x1x32xf32>
    %138 = vector.shape_cast %137 : vector<1x1x1x32xf32> to vector<1x32xf32>
    %139 = vector.shape_cast %136 : vector<1x32xf32> to vector<1x1x1x32xf32>
    tpu.vector_store %arg10[%c1_42, %c2_43, %c2_44, %c0_45], %139 {strides = array<i32>} : memref<2x11x11x32xf32, #tpu.memory_space<vmem>>, vector<1x1x1x32xf32>,
    %140 = vector.broadcast %125 : vector<1x32xf32> to vector<2x32xf32>
    %141 = arith.mulf %58, %140 : vector<2x32xf32>
    %142 = vector.broadcast %5 : vector<1x32xf32> to vector<2x32xf32>
    %143 = arith.addf %141, %142 : vector<2x32xf32>
    %cst_46 = arith.constant 0.000000e+00 : f32
    %144 = vector.broadcast %cst_46 : f32 to vector<2x32xf32>
    %145 = arith.maximumf %143, %144 : vector<2x32xf32>
    %146 = vector.extract_strided_slice %145 {offsets = [0, 0], sizes = [1, 32], strides = [1, 1]} : vector<2x32xf32> to vector<1x32xf32>
    %c0_47 = arith.constant 0 : index
    %c2_48 = arith.constant 2 : index
    %c4 = arith.constant 4 : index
    %c0_49 = arith.constant 0 : index
    %147 = vector.load %arg10[%c0_47, %c2_48, %c4, %c0_49] : memref<2x11x11x32xf32, #tpu.memory_space<vmem>>, vector<1x1x1x32xf32>
    %148 = vector.shape_cast %147 : vector<1x1x1x32xf32> to vector<1x32xf32>
    %149 = vector.shape_cast %146 : vector<1x32xf32> to vector<1x1x1x32xf32>
    tpu.vector_store %arg10[%c0_47, %c2_48, %c4, %c0_49], %149 {strides = array<i32>} : memref<2x11x11x32xf32, #tpu.memory_space<vmem>>, vector<1x1x1x32xf32>,
    %150 = vector.extract_strided_slice %145 {offsets = [1, 0], sizes = [1, 32], strides = [1, 1]} : vector<2x32xf32> to vector<1x32xf32>
    %c1_50 = arith.constant 1 : index
    %c2_51 = arith.constant 2 : index
    %c4_52 = arith.constant 4 : index
    %c0_53 = arith.constant 0 : index
    %151 = vector.load %arg10[%c1_50, %c2_51, %c4_52, %c0_53] : memref<2x11x11x32xf32, #tpu.memory_space<vmem>>, vector<1x1x1x32xf32>
    %152 = vector.shape_cast %151 : vector<1x1x1x32xf32> to vector<1x32xf32>
    %153 = vector.shape_cast %150 : vector<1x32xf32> to vector<1x1x1x32xf32>
    tpu.vector_store %arg10[%c1_50, %c2_51, %c4_52, %c0_53], %153 {strides = array<i32>} : memref<2x11x11x32xf32, #tpu.memory_space<vmem>>, vector<1x1x1x32xf32>,
    %154 = vector.broadcast %125 : vector<1x32xf32> to vector<2x32xf32>
    %155 = arith.mulf %60, %154 : vector<2x32xf32>
    %156 = vector.broadcast %5 : vector<1x32xf32> to vector<2x32xf32>
    %157 = arith.addf %155, %156 : vector<2x32xf32>
    %cst_54 = arith.constant 0.000000e+00 : f32
    %158 = vector.broadcast %cst_54 : f32 to vector<2x32xf32>
    %159 = arith.maximumf %157, %158 : vector<2x32xf32>
    %160 = vector.extract_strided_slice %159 {offsets = [0, 0], sizes = [1, 32], strides = [1, 1]} : vector<2x32xf32> to vector<1x32xf32>
    %c0_55 = arith.constant 0 : index
    %c2_56 = arith.constant 2 : index
    %c6 = arith.constant 6 : index
    %c0_57 = arith.constant 0 : index
    %161 = vector.load %arg10[%c0_55, %c2_56, %c6, %c0_57] : memref<2x11x11x32xf32, #tpu.memory_space<vmem>>, vector<1x1x1x32xf32>
    %162 = vector.shape_cast %161 : vector<1x1x1x32xf32> to vector<1x32xf32>
    %163 = vector.shape_cast %160 : vector<1x32xf32> to vector<1x1x1x32xf32>
    tpu.vector_store %arg10[%c0_55, %c2_56, %c6, %c0_57], %163 {strides = array<i32>} : memref<2x11x11x32xf32, #tpu.memory_space<vmem>>, vector<1x1x1x32xf32>,
    %164 = vector.extract_strided_slice %159 {offsets = [1, 0], sizes = [1, 32], strides = [1, 1]} : vector<2x32xf32> to vector<1x32xf32>
    %c1_58 = arith.constant 1 : index
    %c2_59 = arith.constant 2 : index
    %c6_60 = arith.constant 6 : index
    %c0_61 = arith.constant 0 : index
    %165 = vector.load %arg10[%c1_58, %c2_59, %c6_60, %c0_61] : memref<2x11x11x32xf32, #tpu.memory_space<vmem>>, vector<1x1x1x32xf32>
    %166 = vector.shape_cast %165 : vector<1x1x1x32xf32> to vector<1x32xf32>
    %167 = vector.shape_cast %164 : vector<1x32xf32> to vector<1x1x1x32xf32>
    tpu.vector_store %arg10[%c1_58, %c2_59, %c6_60, %c0_61], %167 {strides = array<i32>} : memref<2x11x11x32xf32, #tpu.memory_space<vmem>>, vector<1x1x1x32xf32>,
    %168 = vector.broadcast %125 : vector<1x32xf32> to vector<2x32xf32>
    %169 = arith.mulf %62, %168 : vector<2x32xf32>
    %170 = vector.broadcast %5 : vector<1x32xf32> to vector<2x32xf32>
    %171 = arith.addf %169, %170 : vector<2x32xf32>
    %cst_62 = arith.constant 0.000000e+00 : f32
    %172 = vector.broadcast %cst_62 : f32 to vector<2x32xf32>
    %173 = arith.maximumf %171, %172 : vector<2x32xf32>
    %174 = vector.extract_strided_slice %173 {offsets = [0, 0], sizes = [1, 32], strides = [1, 1]} : vector<2x32xf32> to vector<1x32xf32>
    %c0_63 = arith.constant 0 : index
    %c2_64 = arith.constant 2 : index
    %c8 = arith.constant 8 : index
    %c0_65 = arith.constant 0 : index
    %175 = vector.load %arg10[%c0_63, %c2_64, %c8, %c0_65] : memref<2x11x11x32xf32, #tpu.memory_space<vmem>>, vector<1x1x1x32xf32>
    %176 = vector.shape_cast %175 : vector<1x1x1x32xf32> to vector<1x32xf32>
    %177 = vector.shape_cast %174 : vector<1x32xf32> to vector<1x1x1x32xf32>
    tpu.vector_store %arg10[%c0_63, %c2_64, %c8, %c0_65], %177 {strides = array<i32>} : memref<2x11x11x32xf32, #tpu.memory_space<vmem>>, vector<1x1x1x32xf32>,
    %178 = vector.extract_strided_slice %173 {offsets = [1, 0], sizes = [1, 32], strides = [1, 1]} : vector<2x32xf32> to vector<1x32xf32>
    %c1_66 = arith.constant 1 : index
    %c2_67 = arith.constant 2 : index
    %c8_68 = arith.constant 8 : index
    %c0_69 = arith.constant 0 : index
    %179 = vector.load %arg10[%c1_66, %c2_67, %c8_68, %c0_69] : memref<2x11x11x32xf32, #tpu.memory_space<vmem>>, vector<1x1x1x32xf32>
    %180 = vector.shape_cast %179 : vector<1x1x1x32xf32> to vector<1x32xf32>
    %181 = vector.shape_cast %178 : vector<1x32xf32> to vector<1x1x1x32xf32>
    tpu.vector_store %arg10[%c1_66, %c2_67, %c8_68, %c0_69], %181 {strides = array<i32>} : memref<2x11x11x32xf32, #tpu.memory_space<vmem>>, vector<1x1x1x32xf32>,
    %182 = vector.broadcast %125 : vector<1x32xf32> to vector<2x32xf32>
    %183 = arith.mulf %64, %182 : vector<2x32xf32>
    %184 = vector.broadcast %5 : vector<1x32xf32> to vector<2x32xf32>
    %185 = arith.addf %183, %184 : vector<2x32xf32>
    %cst_70 = arith.constant 0.000000e+00 : f32
    %186 = vector.broadcast %cst_70 : f32 to vector<2x32xf32>
    %187 = arith.maximumf %185, %186 : vector<2x32xf32>
    %188 = vector.extract_strided_slice %187 {offsets = [0, 0], sizes = [1, 32], strides = [1, 1]} : vector<2x32xf32> to vector<1x32xf32>
    %c0_71 = arith.constant 0 : index
    %c4_72 = arith.constant 4 : index
    %c2_73 = arith.constant 2 : index
    %c0_74 = arith.constant 0 : index
    %189 = vector.load %arg10[%c0_71, %c4_72, %c2_73, %c0_74] : memref<2x11x11x32xf32, #tpu.memory_space<vmem>>, vector<1x1x1x32xf32>
    %190 = vector.shape_cast %189 : vector<1x1x1x32xf32> to vector<1x32xf32>
    %191 = vector.shape_cast %188 : vector<1x32xf32> to vector<1x1x1x32xf32>
    tpu.vector_store %arg10[%c0_71, %c4_72, %c2_73, %c0_74], %191 {strides = array<i32>} : memref<2x11x11x32xf32, #tpu.memory_space<vmem>>, vector<1x1x1x32xf32>,
    %192 = vector.extract_strided_slice %187 {offsets = [1, 0], sizes = [1, 32], strides = [1, 1]} : vector<2x32xf32> to vector<1x32xf32>
    %c1_75 = arith.constant 1 : index
    %c4_76 = arith.constant 4 : index
    %c2_77 = arith.constant 2 : index
    %c0_78 = arith.constant 0 : index
    %193 = vector.load %arg10[%c1_75, %c4_76, %c2_77, %c0_78] : memref<2x11x11x32xf32, #tpu.memory_space<vmem>>, vector<1x1x1x32xf32>
    %194 = vector.shape_cast %193 : vector<1x1x1x32xf32> to vector<1x32xf32>
    %195 = vector.shape_cast %192 : vector<1x32xf32> to vector<1x1x1x32xf32>
    tpu.vector_store %arg10[%c1_75, %c4_76, %c2_77, %c0_78], %195 {strides = array<i32>} : memref<2x11x11x32xf32, #tpu.memory_space<vmem>>, vector<1x1x1x32xf32>,
    %196 = vector.broadcast %125 : vector<1x32xf32> to vector<2x32xf32>
    %197 = arith.mulf %66, %196 : vector<2x32xf32>
    %198 = vector.broadcast %5 : vector<1x32xf32> to vector<2x32xf32>
    %199 = arith.addf %197, %198 : vector<2x32xf32>
    %cst_79 = arith.constant 0.000000e+00 : f32
    %200 = vector.broadcast %cst_79 : f32 to vector<2x32xf32>
    %201 = arith.maximumf %199, %200 : vector<2x32xf32>
    %202 = vector.extract_strided_slice %201 {offsets = [0, 0], sizes = [1, 32], strides = [1, 1]} : vector<2x32xf32> to vector<1x32xf32>
    %c0_80 = arith.constant 0 : index
    %c4_81 = arith.constant 4 : index
    %c4_82 = arith.constant 4 : index
    %c0_83 = arith.constant 0 : index
    %203 = vector.load %arg10[%c0_80, %c4_81, %c4_82, %c0_83] : memref<2x11x11x32xf32, #tpu.memory_space<vmem>>, vector<1x1x1x32xf32>
    %204 = vector.shape_cast %203 : vector<1x1x1x32xf32> to vector<1x32xf32>
    %205 = vector.shape_cast %202 : vector<1x32xf32> to vector<1x1x1x32xf32>
    tpu.vector_store %arg10[%c0_80, %c4_81, %c4_82, %c0_83], %205 {strides = array<i32>} : memref<2x11x11x32xf32, #tpu.memory_space<vmem>>, vector<1x1x1x32xf32>,
    %206 = vector.extract_strided_slice %201 {offsets = [1, 0], sizes = [1, 32], strides = [1, 1]} : vector<2x32xf32> to vector<1x32xf32>
    %c1_84 = arith.constant 1 : index
    %c4_85 = arith.constant 4 : index
    %c4_86 = arith.constant 4 : index
    %c0_87 = arith.constant 0 : index
    %207 = vector.load %arg10[%c1_84, %c4_85, %c4_86, %c0_87] : memref<2x11x11x32xf32, #tpu.memory_space<vmem>>, vector<1x1x1x32xf32>
    %208 = vector.shape_cast %207 : vector<1x1x1x32xf32> to vector<1x32xf32>
    %209 = vector.shape_cast %206 : vector<1x32xf32> to vector<1x1x1x32xf32>
    tpu.vector_store %arg10[%c1_84, %c4_85, %c4_86, %c0_87], %209 {strides = array<i32>} : memref<2x11x11x32xf32, #tpu.memory_space<vmem>>, vector<1x1x1x32xf32>,
    %210 = vector.broadcast %125 : vector<1x32xf32> to vector<2x32xf32>
    %211 = arith.mulf %68, %210 : vector<2x32xf32>
    %212 = vector.broadcast %5 : vector<1x32xf32> to vector<2x32xf32>
    %213 = arith.addf %211, %212 : vector<2x32xf32>
    %cst_88 = arith.constant 0.000000e+00 : f32
    %214 = vector.broadcast %cst_88 : f32 to vector<2x32xf32>
    %215 = arith.maximumf %213, %214 : vector<2x32xf32>
    %216 = vector.extract_strided_slice %215 {offsets = [0, 0], sizes = [1, 32], strides = [1, 1]} : vector<2x32xf32> to vector<1x32xf32>
    %c0_89 = arith.constant 0 : index
    %c4_90 = arith.constant 4 : index
    %c6_91 = arith.constant 6 : index
    %c0_92 = arith.constant 0 : index
    %217 = vector.load %arg10[%c0_89, %c4_90, %c6_91, %c0_92] : memref<2x11x11x32xf32, #tpu.memory_space<vmem>>, vector<1x1x1x32xf32>
    %218 = vector.shape_cast %217 : vector<1x1x1x32xf32> to vector<1x32xf32>
    %219 = vector.shape_cast %216 : vector<1x32xf32> to vector<1x1x1x32xf32>
    tpu.vector_store %arg10[%c0_89, %c4_90, %c6_91, %c0_92], %219 {strides = array<i32>} : memref<2x11x11x32xf32, #tpu.memory_space<vmem>>, vector<1x1x1x32xf32>,
    %220 = vector.extract_strided_slice %215 {offsets = [1, 0], sizes = [1, 32], strides = [1, 1]} : vector<2x32xf32> to vector<1x32xf32>
    %c1_93 = arith.constant 1 : index
    %c4_94 = arith.constant 4 : index
    %c6_95 = arith.constant 6 : index
    %c0_96 = arith.constant 0 : index
    %221 = vector.load %arg10[%c1_93, %c4_94, %c6_95, %c0_96] : memref<2x11x11x32xf32, #tpu.memory_space<vmem>>, vector<1x1x1x32xf32>
    %222 = vector.shape_cast %221 : vector<1x1x1x32xf32> to vector<1x32xf32>
    %223 = vector.shape_cast %220 : vector<1x32xf32> to vector<1x1x1x32xf32>
    tpu.vector_store %arg10[%c1_93, %c4_94, %c6_95, %c0_96], %223 {strides = array<i32>} : memref<2x11x11x32xf32, #tpu.memory_space<vmem>>, vector<1x1x1x32xf32>,
    %224 = vector.broadcast %125 : vector<1x32xf32> to vector<2x32xf32>
    %225 = arith.mulf %70, %224 : vector<2x32xf32>
    %226 = vector.broadcast %5 : vector<1x32xf32> to vector<2x32xf32>
    %227 = arith.addf %225, %226 : vector<2x32xf32>
    %cst_97 = arith.constant 0.000000e+00 : f32
    %228 = vector.broadcast %cst_97 : f32 to vector<2x32xf32>
    %229 = arith.maximumf %227, %228 : vector<2x32xf32>
    %230 = vector.extract_strided_slice %229 {offsets = [0, 0], sizes = [1, 32], strides = [1, 1]} : vector<2x32xf32> to vector<1x32xf32>
    %c0_98 = arith.constant 0 : index
    %c4_99 = arith.constant 4 : index
    %c8_100 = arith.constant 8 : index
    %c0_101 = arith.constant 0 : index
    %231 = vector.load %arg10[%c0_98, %c4_99, %c8_100, %c0_101] : memref<2x11x11x32xf32, #tpu.memory_space<vmem>>, vector<1x1x1x32xf32>
    %232 = vector.shape_cast %231 : vector<1x1x1x32xf32> to vector<1x32xf32>
    %233 = vector.shape_cast %230 : vector<1x32xf32> to vector<1x1x1x32xf32>
    tpu.vector_store %arg10[%c0_98, %c4_99, %c8_100, %c0_101], %233 {strides = array<i32>} : memref<2x11x11x32xf32, #tpu.memory_space<vmem>>, vector<1x1x1x32xf32>,
    %234 = vector.extract_strided_slice %229 {offsets = [1, 0], sizes = [1, 32], strides = [1, 1]} : vector<2x32xf32> to vector<1x32xf32>
    %c1_102 = arith.constant 1 : index
    %c4_103 = arith.constant 4 : index
    %c8_104 = arith.constant 8 : index
    %c0_105 = arith.constant 0 : index
    %235 = vector.load %arg10[%c1_102, %c4_103, %c8_104, %c0_105] : memref<2x11x11x32xf32, #tpu.memory_space<vmem>>, vector<1x1x1x32xf32>
    %236 = vector.shape_cast %235 : vector<1x1x1x32xf32> to vector<1x32xf32>
    %237 = vector.shape_cast %234 : vector<1x32xf32> to vector<1x1x1x32xf32>
    tpu.vector_store %arg10[%c1_102, %c4_103, %c8_104, %c0_105], %237 {strides = array<i32>} : memref<2x11x11x32xf32, #tpu.memory_space<vmem>>, vector<1x1x1x32xf32>,
    %238 = vector.broadcast %125 : vector<1x32xf32> to vector<2x32xf32>
    %239 = arith.mulf %72, %238 : vector<2x32xf32>
    %240 = vector.broadcast %5 : vector<1x32xf32> to vector<2x32xf32>
    %241 = arith.addf %239, %240 : vector<2x32xf32>
    %cst_106 = arith.constant 0.000000e+00 : f32
    %242 = vector.broadcast %cst_106 : f32 to vector<2x32xf32>
    %243 = arith.maximumf %241, %242 : vector<2x32xf32>
    %244 = vector.extract_strided_slice %243 {offsets = [0, 0], sizes = [1, 32], strides = [1, 1]} : vector<2x32xf32> to vector<1x32xf32>
    %c0_107 = arith.constant 0 : index
    %c6_108 = arith.constant 6 : index
    %c2_109 = arith.constant 2 : index
    %c0_110 = arith.constant 0 : index
    %245 = vector.load %arg10[%c0_107, %c6_108, %c2_109, %c0_110] : memref<2x11x11x32xf32, #tpu.memory_space<vmem>>, vector<1x1x1x32xf32>
    %246 = vector.shape_cast %245 : vector<1x1x1x32xf32> to vector<1x32xf32>
    %247 = vector.shape_cast %244 : vector<1x32xf32> to vector<1x1x1x32xf32>
    tpu.vector_store %arg10[%c0_107, %c6_108, %c2_109, %c0_110], %247 {strides = array<i32>} : memref<2x11x11x32xf32, #tpu.memory_space<vmem>>, vector<1x1x1x32xf32>,
    %248 = vector.extract_strided_slice %243 {offsets = [1, 0], sizes = [1, 32], strides = [1, 1]} : vector<2x32xf32> to vector<1x32xf32>
    %c1_111 = arith.constant 1 : index
    %c6_112 = arith.constant 6 : index
    %c2_113 = arith.constant 2 : index
    %c0_114 = arith.constant 0 : index
    %249 = vector.load %arg10[%c1_111, %c6_112, %c2_113, %c0_114] : memref<2x11x11x32xf32, #tpu.memory_space<vmem>>, vector<1x1x1x32xf32>
    %250 = vector.shape_cast %249 : vector<1x1x1x32xf32> to vector<1x32xf32>
    %251 = vector.shape_cast %248 : vector<1x32xf32> to vector<1x1x1x32xf32>
    tpu.vector_store %arg10[%c1_111, %c6_112, %c2_113, %c0_114], %251 {strides = array<i32>} : memref<2x11x11x32xf32, #tpu.memory_space<vmem>>, vector<1x1x1x32xf32>,
    %252 = vector.broadcast %125 : vector<1x32xf32> to vector<2x32xf32>
    %253 = arith.mulf %74, %252 : vector<2x32xf32>
    %254 = vector.broadcast %5 : vector<1x32xf32> to vector<2x32xf32>
    %255 = arith.addf %253, %254 : vector<2x32xf32>
    %cst_115 = arith.constant 0.000000e+00 : f32
    %256 = vector.broadcast %cst_115 : f32 to vector<2x32xf32>
    %257 = arith.maximumf %255, %256 : vector<2x32xf32>
    %258 = vector.extract_strided_slice %257 {offsets = [0, 0], sizes = [1, 32], strides = [1, 1]} : vector<2x32xf32> to vector<1x32xf32>
    %c0_116 = arith.constant 0 : index
    %c6_117 = arith.constant 6 : index
    %c4_118 = arith.constant 4 : index
    %c0_119 = arith.constant 0 : index
    %259 = vector.load %arg10[%c0_116, %c6_117, %c4_118, %c0_119] : memref<2x11x11x32xf32, #tpu.memory_space<vmem>>, vector<1x1x1x32xf32>
    %260 = vector.shape_cast %259 : vector<1x1x1x32xf32> to vector<1x32xf32>
    %261 = vector.shape_cast %258 : vector<1x32xf32> to vector<1x1x1x32xf32>
    tpu.vector_store %arg10[%c0_116, %c6_117, %c4_118, %c0_119], %261 {strides = array<i32>} : memref<2x11x11x32xf32, #tpu.memory_space<vmem>>, vector<1x1x1x32xf32>,
    %262 = vector.extract_strided_slice %257 {offsets = [1, 0], sizes = [1, 32], strides = [1, 1]} : vector<2x32xf32> to vector<1x32xf32>
    %c1_120 = arith.constant 1 : index
    %c6_121 = arith.constant 6 : index
    %c4_122 = arith.constant 4 : index
    %c0_123 = arith.constant 0 : index
    %263 = vector.load %arg10[%c1_120, %c6_121, %c4_122, %c0_123] : memref<2x11x11x32xf32, #tpu.memory_space<vmem>>, vector<1x1x1x32xf32>
    %264 = vector.shape_cast %263 : vector<1x1x1x32xf32> to vector<1x32xf32>
    %265 = vector.shape_cast %262 : vector<1x32xf32> to vector<1x1x1x32xf32>
    tpu.vector_store %arg10[%c1_120, %c6_121, %c4_122, %c0_123], %265 {strides = array<i32>} : memref<2x11x11x32xf32, #tpu.memory_space<vmem>>, vector<1x1x1x32xf32>,
    %266 = vector.broadcast %125 : vector<1x32xf32> to vector<2x32xf32>
    %267 = arith.mulf %76, %266 : vector<2x32xf32>
    %268 = vector.broadcast %5 : vector<1x32xf32> to vector<2x32xf32>
    %269 = arith.addf %267, %268 : vector<2x32xf32>
    %cst_124 = arith.constant 0.000000e+00 : f32
    %270 = vector.broadcast %cst_124 : f32 to vector<2x32xf32>
    %271 = arith.maximumf %269, %270 : vector<2x32xf32>
    %272 = vector.extract_strided_slice %271 {offsets = [0, 0], sizes = [1, 32], strides = [1, 1]} : vector<2x32xf32> to vector<1x32xf32>
    %c0_125 = arith.constant 0 : index
    %c6_126 = arith.constant 6 : index
    %c6_127 = arith.constant 6 : index
    %c0_128 = arith.constant 0 : index
    %273 = vector.load %arg10[%c0_125, %c6_126, %c6_127, %c0_128] : memref<2x11x11x32xf32, #tpu.memory_space<vmem>>, vector<1x1x1x32xf32>
    %274 = vector.shape_cast %273 : vector<1x1x1x32xf32> to vector<1x32xf32>
    %275 = vector.shape_cast %272 : vector<1x32xf32> to vector<1x1x1x32xf32>
    tpu.vector_store %arg10[%c0_125, %c6_126, %c6_127, %c0_128], %275 {strides = array<i32>} : memref<2x11x11x32xf32, #tpu.memory_space<vmem>>, vector<1x1x1x32xf32>,
    %276 = vector.extract_strided_slice %271 {offsets = [1, 0], sizes = [1, 32], strides = [1, 1]} : vector<2x32xf32> to vector<1x32xf32>
    %c1_129 = arith.constant 1 : index
    %c6_130 = arith.constant 6 : index
    %c6_131 = arith.constant 6 : index
    %c0_132 = arith.constant 0 : index
    %277 = vector.load %arg10[%c1_129, %c6_130, %c6_131, %c0_132] : memref<2x11x11x32xf32, #tpu.memory_space<vmem>>, vector<1x1x1x32xf32>
    %278 = vector.shape_cast %277 : vector<1x1x1x32xf32> to vector<1x32xf32>
    %279 = vector.shape_cast %276 : vector<1x32xf32> to vector<1x1x1x32xf32>
    tpu.vector_store %arg10[%c1_129, %c6_130, %c6_131, %c0_132], %279 {strides = array<i32>} : memref<2x11x11x32xf32, #tpu.memory_space<vmem>>, vector<1x1x1x32xf32>,
    %280 = vector.broadcast %125 : vector<1x32xf32> to vector<2x32xf32>
    %281 = arith.mulf %78, %280 : vector<2x32xf32>
    %282 = vector.broadcast %5 : vector<1x32xf32> to vector<2x32xf32>
    %283 = arith.addf %281, %282 : vector<2x32xf32>
    %cst_133 = arith.constant 0.000000e+00 : f32
    %284 = vector.broadcast %cst_133 : f32 to vector<2x32xf32>
    %285 = arith.maximumf %283, %284 : vector<2x32xf32>
    %286 = vector.extract_strided_slice %285 {offsets = [0, 0], sizes = [1, 32], strides = [1, 1]} : vector<2x32xf32> to vector<1x32xf32>
    %c0_134 = arith.constant 0 : index
    %c6_135 = arith.constant 6 : index
    %c8_136 = arith.constant 8 : index
    %c0_137 = arith.constant 0 : index
    %287 = vector.load %arg10[%c0_134, %c6_135, %c8_136, %c0_137] : memref<2x11x11x32xf32, #tpu.memory_space<vmem>>, vector<1x1x1x32xf32>
    %288 = vector.shape_cast %287 : vector<1x1x1x32xf32> to vector<1x32xf32>
    %289 = vector.shape_cast %286 : vector<1x32xf32> to vector<1x1x1x32xf32>
    tpu.vector_store %arg10[%c0_134, %c6_135, %c8_136, %c0_137], %289 {strides = array<i32>} : memref<2x11x11x32xf32, #tpu.memory_space<vmem>>, vector<1x1x1x32xf32>,
    %290 = vector.extract_strided_slice %285 {offsets = [1, 0], sizes = [1, 32], strides = [1, 1]} : vector<2x32xf32> to vector<1x32xf32>
    %c1_138 = arith.constant 1 : index
    %c6_139 = arith.constant 6 : index
    %c8_140 = arith.constant 8 : index
    %c0_141 = arith.constant 0 : index
    %291 = vector.load %arg10[%c1_138, %c6_139, %c8_140, %c0_141] : memref<2x11x11x32xf32, #tpu.memory_space<vmem>>, vector<1x1x1x32xf32>
    %292 = vector.shape_cast %291 : vector<1x1x1x32xf32> to vector<1x32xf32>
    %293 = vector.shape_cast %290 : vector<1x32xf32> to vector<1x1x1x32xf32>
    tpu.vector_store %arg10[%c1_138, %c6_139, %c8_140, %c0_141], %293 {strides = array<i32>} : memref<2x11x11x32xf32, #tpu.memory_space<vmem>>, vector<1x1x1x32xf32>,
    %294 = vector.broadcast %125 : vector<1x32xf32> to vector<2x32xf32>
    %295 = arith.mulf %80, %294 : vector<2x32xf32>
    %296 = vector.broadcast %5 : vector<1x32xf32> to vector<2x32xf32>
    %297 = arith.addf %295, %296 : vector<2x32xf32>
    %cst_142 = arith.constant 0.000000e+00 : f32
    %298 = vector.broadcast %cst_142 : f32 to vector<2x32xf32>
    %299 = arith.maximumf %297, %298 : vector<2x32xf32>
    %300 = vector.extract_strided_slice %299 {offsets = [0, 0], sizes = [1, 32], strides = [1, 1]} : vector<2x32xf32> to vector<1x32xf32>
    %c0_143 = arith.constant 0 : index
    %c8_144 = arith.constant 8 : index
    %c2_145 = arith.constant 2 : index
    %c0_146 = arith.constant 0 : index
    %301 = vector.load %arg10[%c0_143, %c8_144, %c2_145, %c0_146] : memref<2x11x11x32xf32, #tpu.memory_space<vmem>>, vector<1x1x1x32xf32>
    %302 = vector.shape_cast %301 : vector<1x1x1x32xf32> to vector<1x32xf32>
    %303 = vector.shape_cast %300 : vector<1x32xf32> to vector<1x1x1x32xf32>
    tpu.vector_store %arg10[%c0_143, %c8_144, %c2_145, %c0_146], %303 {strides = array<i32>} : memref<2x11x11x32xf32, #tpu.memory_space<vmem>>, vector<1x1x1x32xf32>,
    %304 = vector.extract_strided_slice %299 {offsets = [1, 0], sizes = [1, 32], strides = [1, 1]} : vector<2x32xf32> to vector<1x32xf32>
    %c1_147 = arith.constant 1 : index
    %c8_148 = arith.constant 8 : index
    %c2_149 = arith.constant 2 : index
    %c0_150 = arith.constant 0 : index
    %305 = vector.load %arg10[%c1_147, %c8_148, %c2_149, %c0_150] : memref<2x11x11x32xf32, #tpu.memory_space<vmem>>, vector<1x1x1x32xf32>
    %306 = vector.shape_cast %305 : vector<1x1x1x32xf32> to vector<1x32xf32>
    %307 = vector.shape_cast %304 : vector<1x32xf32> to vector<1x1x1x32xf32>
    tpu.vector_store %arg10[%c1_147, %c8_148, %c2_149, %c0_150], %307 {strides = array<i32>} : memref<2x11x11x32xf32, #tpu.memory_space<vmem>>, vector<1x1x1x32xf32>,
    %308 = vector.broadcast %125 : vector<1x32xf32> to vector<2x32xf32>
    %309 = arith.mulf %82, %308 : vector<2x32xf32>
    %310 = vector.broadcast %5 : vector<1x32xf32> to vector<2x32xf32>
    %311 = arith.addf %309, %310 : vector<2x32xf32>
    %cst_151 = arith.constant 0.000000e+00 : f32
    %312 = vector.broadcast %cst_151 : f32 to vector<2x32xf32>
    %313 = arith.maximumf %311, %312 : vector<2x32xf32>
    %314 = vector.extract_strided_slice %313 {offsets = [0, 0], sizes = [1, 32], strides = [1, 1]} : vector<2x32xf32> to vector<1x32xf32>
    %c0_152 = arith.constant 0 : index
    %c8_153 = arith.constant 8 : index
    %c4_154 = arith.constant 4 : index
    %c0_155 = arith.constant 0 : index
    %315 = vector.load %arg10[%c0_152, %c8_153, %c4_154, %c0_155] : memref<2x11x11x32xf32, #tpu.memory_space<vmem>>, vector<1x1x1x32xf32>
    %316 = vector.shape_cast %315 : vector<1x1x1x32xf32> to vector<1x32xf32>
    %317 = vector.shape_cast %314 : vector<1x32xf32> to vector<1x1x1x32xf32>
    tpu.vector_store %arg10[%c0_152, %c8_153, %c4_154, %c0_155], %317 {strides = array<i32>} : memref<2x11x11x32xf32, #tpu.memory_space<vmem>>, vector<1x1x1x32xf32>,
    %318 = vector.extract_strided_slice %313 {offsets = [1, 0], sizes = [1, 32], strides = [1, 1]} : vector<2x32xf32> to vector<1x32xf32>
    %c1_156 = arith.constant 1 : index
    %c8_157 = arith.constant 8 : index
    %c4_158 = arith.constant 4 : index
    %c0_159 = arith.constant 0 : index
    %319 = vector.load %arg10[%c1_156, %c8_157, %c4_158, %c0_159] : memref<2x11x11x32xf32, #tpu.memory_space<vmem>>, vector<1x1x1x32xf32>
    %320 = vector.shape_cast %319 : vector<1x1x1x32xf32> to vector<1x32xf32>
    %321 = vector.shape_cast %318 : vector<1x32xf32> to vector<1x1x1x32xf32>
    tpu.vector_store %arg10[%c1_156, %c8_157, %c4_158, %c0_159], %321 {strides = array<i32>} : memref<2x11x11x32xf32, #tpu.memory_space<vmem>>, vector<1x1x1x32xf32>,
    %322 = vector.broadcast %125 : vector<1x32xf32> to vector<2x32xf32>
    %323 = arith.mulf %84, %322 : vector<2x32xf32>
    %324 = vector.broadcast %5 : vector<1x32xf32> to vector<2x32xf32>
    %325 = arith.addf %323, %324 : vector<2x32xf32>
    %cst_160 = arith.constant 0.000000e+00 : f32
    %326 = vector.broadcast %cst_160 : f32 to vector<2x32xf32>
    %327 = arith.maximumf %325, %326 : vector<2x32xf32>
    %328 = vector.extract_strided_slice %327 {offsets = [0, 0], sizes = [1, 32], strides = [1, 1]} : vector<2x32xf32> to vector<1x32xf32>
    %c0_161 = arith.constant 0 : index
    %c8_162 = arith.constant 8 : index
    %c6_163 = arith.constant 6 : index
    %c0_164 = arith.constant 0 : index
    %329 = vector.load %arg10[%c0_161, %c8_162, %c6_163, %c0_164] : memref<2x11x11x32xf32, #tpu.memory_space<vmem>>, vector<1x1x1x32xf32>
    %330 = vector.shape_cast %329 : vector<1x1x1x32xf32> to vector<1x32xf32>
    %331 = vector.shape_cast %328 : vector<1x32xf32> to vector<1x1x1x32xf32>
    tpu.vector_store %arg10[%c0_161, %c8_162, %c6_163, %c0_164], %331 {strides = array<i32>} : memref<2x11x11x32xf32, #tpu.memory_space<vmem>>, vector<1x1x1x32xf32>,
    %332 = vector.extract_strided_slice %327 {offsets = [1, 0], sizes = [1, 32], strides = [1, 1]} : vector<2x32xf32> to vector<1x32xf32>
    %c1_165 = arith.constant 1 : index
    %c8_166 = arith.constant 8 : index
    %c6_167 = arith.constant 6 : index
    %c0_168 = arith.constant 0 : index
    %333 = vector.load %arg10[%c1_165, %c8_166, %c6_167, %c0_168] : memref<2x11x11x32xf32, #tpu.memory_space<vmem>>, vector<1x1x1x32xf32>
    %334 = vector.shape_cast %333 : vector<1x1x1x32xf32> to vector<1x32xf32>
    %335 = vector.shape_cast %332 : vector<1x32xf32> to vector<1x1x1x32xf32>
    tpu.vector_store %arg10[%c1_165, %c8_166, %c6_167, %c0_168], %335 {strides = array<i32>} : memref<2x11x11x32xf32, #tpu.memory_space<vmem>>, vector<1x1x1x32xf32>,
    %336 = vector.broadcast %125 : vector<1x32xf32> to vector<2x32xf32>
    %337 = arith.mulf %86, %336 : vector<2x32xf32>
    %338 = vector.broadcast %5 : vector<1x32xf32> to vector<2x32xf32>
    %339 = arith.addf %337, %338 : vector<2x32xf32>
    %cst_169 = arith.constant 0.000000e+00 : f32
    %340 = vector.broadcast %cst_169 : f32 to vector<2x32xf32>
    %341 = arith.maximumf %339, %340 : vector<2x32xf32>
    %342 = vector.extract_strided_slice %341 {offsets = [0, 0], sizes = [1, 32], strides = [1, 1]} : vector<2x32xf32> to vector<1x32xf32>
    %c0_170 = arith.constant 0 : index
    %c8_171 = arith.constant 8 : index
    %c8_172 = arith.constant 8 : index
    %c0_173 = arith.constant 0 : index
    %343 = vector.load %arg10[%c0_170, %c8_171, %c8_172, %c0_173] : memref<2x11x11x32xf32, #tpu.memory_space<vmem>>, vector<1x1x1x32xf32>
    %344 = vector.shape_cast %343 : vector<1x1x1x32xf32> to vector<1x32xf32>
    %345 = vector.shape_cast %342 : vector<1x32xf32> to vector<1x1x1x32xf32>
    tpu.vector_store %arg10[%c0_170, %c8_171, %c8_172, %c0_173], %345 {strides = array<i32>} : memref<2x11x11x32xf32, #tpu.memory_space<vmem>>, vector<1x1x1x32xf32>,
    %346 = vector.extract_strided_slice %341 {offsets = [1, 0], sizes = [1, 32], strides = [1, 1]} : vector<2x32xf32> to vector<1x32xf32>
    %c1_174 = arith.constant 1 : index
    %c8_175 = arith.constant 8 : index
    %c8_176 = arith.constant 8 : index
    %c0_177 = arith.constant 0 : index
    %347 = vector.load %arg10[%c1_174, %c8_175, %c8_176, %c0_177] : memref<2x11x11x32xf32, #tpu.memory_space<vmem>>, vector<1x1x1x32xf32>
    %348 = vector.shape_cast %347 : vector<1x1x1x32xf32> to vector<1x32xf32>
    %349 = vector.shape_cast %346 : vector<1x32xf32> to vector<1x1x1x32xf32>
    tpu.vector_store %arg10[%c1_174, %c8_175, %c8_176, %c0_177], %349 {strides = array<i32>} : memref<2x11x11x32xf32, #tpu.memory_space<vmem>>, vector<1x1x1x32xf32>,
    %c0_178 = arith.constant 0 : index
    %c0_179 = arith.constant 0 : index
    %c0_180 = arith.constant 0 : index
    %c0_181 = arith.constant 0 : index
    %350 = vector.load %arg10[%c0_178, %c0_179, %c0_180, %c0_181] : memref<2x11x11x32xf32, #tpu.memory_space<vmem>>, vector<1x11x11x32xf32>
    %351 = vector.shape_cast %350 : vector<1x11x11x32xf32> to vector<11x11x32xf32>
    %352 = vector.extract_strided_slice %351 {offsets = [0, 0, 0], sizes = [8, 8, 32], strides = [1, 1, 1]} : vector<11x11x32xf32> to vector<8x8x32xf32>
    %353 = vector.shape_cast %352 : vector<8x8x32xf32> to vector<64x32xf32>
    %354 = vector.extract_strided_slice %351 {offsets = [0, 1, 0], sizes = [8, 8, 32], strides = [1, 1, 1]} : vector<11x11x32xf32> to vector<8x8x32xf32>
    %355 = vector.shape_cast %354 : vector<8x8x32xf32> to vector<64x32xf32>
    %356 = vector.extract_strided_slice %351 {offsets = [0, 2, 0], sizes = [8, 8, 32], strides = [1, 1, 1]} : vector<11x11x32xf32> to vector<8x8x32xf32>
    %357 = vector.shape_cast %356 : vector<8x8x32xf32> to vector<64x32xf32>
    %358 = vector.extract_strided_slice %351 {offsets = [0, 3, 0], sizes = [8, 8, 32], strides = [1, 1, 1]} : vector<11x11x32xf32> to vector<8x8x32xf32>
    %359 = vector.shape_cast %358 : vector<8x8x32xf32> to vector<64x32xf32>
    %360 = vector.extract_strided_slice %351 {offsets = [1, 0, 0], sizes = [8, 8, 32], strides = [1, 1, 1]} : vector<11x11x32xf32> to vector<8x8x32xf32>
    %361 = vector.shape_cast %360 : vector<8x8x32xf32> to vector<64x32xf32>
    %362 = vector.extract_strided_slice %351 {offsets = [1, 1, 0], sizes = [8, 8, 32], strides = [1, 1, 1]} : vector<11x11x32xf32> to vector<8x8x32xf32>
    %363 = vector.shape_cast %362 : vector<8x8x32xf32> to vector<64x32xf32>
    %364 = vector.extract_strided_slice %351 {offsets = [1, 2, 0], sizes = [8, 8, 32], strides = [1, 1, 1]} : vector<11x11x32xf32> to vector<8x8x32xf32>
    %365 = vector.shape_cast %364 : vector<8x8x32xf32> to vector<64x32xf32>
    %366 = vector.extract_strided_slice %351 {offsets = [1, 3, 0], sizes = [8, 8, 32], strides = [1, 1, 1]} : vector<11x11x32xf32> to vector<8x8x32xf32>
    %367 = vector.shape_cast %366 : vector<8x8x32xf32> to vector<64x32xf32>
    %368 = vector.extract_strided_slice %351 {offsets = [2, 0, 0], sizes = [8, 8, 32], strides = [1, 1, 1]} : vector<11x11x32xf32> to vector<8x8x32xf32>
    %369 = vector.shape_cast %368 : vector<8x8x32xf32> to vector<64x32xf32>
    %370 = vector.extract_strided_slice %351 {offsets = [2, 1, 0], sizes = [8, 8, 32], strides = [1, 1, 1]} : vector<11x11x32xf32> to vector<8x8x32xf32>
    %371 = vector.shape_cast %370 : vector<8x8x32xf32> to vector<64x32xf32>
    %372 = vector.extract_strided_slice %351 {offsets = [2, 2, 0], sizes = [8, 8, 32], strides = [1, 1, 1]} : vector<11x11x32xf32> to vector<8x8x32xf32>
    %373 = vector.shape_cast %372 : vector<8x8x32xf32> to vector<64x32xf32>
    %374 = vector.extract_strided_slice %351 {offsets = [2, 3, 0], sizes = [8, 8, 32], strides = [1, 1, 1]} : vector<11x11x32xf32> to vector<8x8x32xf32>
    %375 = vector.shape_cast %374 : vector<8x8x32xf32> to vector<64x32xf32>
    %376 = vector.extract_strided_slice %351 {offsets = [3, 0, 0], sizes = [8, 8, 32], strides = [1, 1, 1]} : vector<11x11x32xf32> to vector<8x8x32xf32>
    %377 = vector.shape_cast %376 : vector<8x8x32xf32> to vector<64x32xf32>
    %378 = vector.extract_strided_slice %351 {offsets = [3, 1, 0], sizes = [8, 8, 32], strides = [1, 1, 1]} : vector<11x11x32xf32> to vector<8x8x32xf32>
    %379 = vector.shape_cast %378 : vector<8x8x32xf32> to vector<64x32xf32>
    %380 = vector.extract_strided_slice %351 {offsets = [3, 2, 0], sizes = [8, 8, 32], strides = [1, 1, 1]} : vector<11x11x32xf32> to vector<8x8x32xf32>
    %381 = vector.shape_cast %380 : vector<8x8x32xf32> to vector<64x32xf32>
    %382 = vector.extract_strided_slice %351 {offsets = [3, 3, 0], sizes = [8, 8, 32], strides = [1, 1, 1]} : vector<11x11x32xf32> to vector<8x8x32xf32>
    %383 = vector.shape_cast %382 : vector<8x8x32xf32> to vector<64x32xf32>
    %384 = tpu.concatenate %353, %355, %357, %359, %361, %363, %365, %367, %369, %371, %373, %375, %377, %379, %381, %383 in 1 : vector<64x32xf32>, vector<64x32xf32>, vector<64x32xf32>, vector<64x32xf32>, vector<64x32xf32>, vector<64x32xf32>, vector<64x32xf32>, vector<64x32xf32>, vector<64x32xf32>, vector<64x32xf32>, vector<64x32xf32>, vector<64x32xf32>, vector<64x32xf32>, vector<64x32xf32>, vector<64x32xf32>, vector<64x32xf32> -> vector<64x512xf32>
    %cst_182 = arith.constant dense<0.000000e+00> : vector<64x16xf32>
    %385 = tpu.matmul %384, %8, %cst_182 {dimension_numbers = #tpu.dot_dimension_numbers<[1], [0], [0], [1], [0, 0, 1, 1], [], []>} : vector<64x512xf32>, vector<512x16xf32>, vector<64x16xf32> -> vector<64x16xf32>
    %c1_183 = arith.constant 1 : index
    %c0_184 = arith.constant 0 : index
    %c0_185 = arith.constant 0 : index
    %c0_186 = arith.constant 0 : index
    %386 = vector.load %arg10[%c1_183, %c0_184, %c0_185, %c0_186] : memref<2x11x11x32xf32, #tpu.memory_space<vmem>>, vector<1x11x11x32xf32>
    %387 = vector.shape_cast %386 : vector<1x11x11x32xf32> to vector<11x11x32xf32>
    %388 = vector.extract_strided_slice %387 {offsets = [0, 0, 0], sizes = [8, 8, 32], strides = [1, 1, 1]} : vector<11x11x32xf32> to vector<8x8x32xf32>
    %389 = vector.shape_cast %388 : vector<8x8x32xf32> to vector<64x32xf32>
    %390 = vector.extract_strided_slice %387 {offsets = [0, 1, 0], sizes = [8, 8, 32], strides = [1, 1, 1]} : vector<11x11x32xf32> to vector<8x8x32xf32>
    %391 = vector.shape_cast %390 : vector<8x8x32xf32> to vector<64x32xf32>
    %392 = vector.extract_strided_slice %387 {offsets = [0, 2, 0], sizes = [8, 8, 32], strides = [1, 1, 1]} : vector<11x11x32xf32> to vector<8x8x32xf32>
    %393 = vector.shape_cast %392 : vector<8x8x32xf32> to vector<64x32xf32>
    %394 = vector.extract_strided_slice %387 {offsets = [0, 3, 0], sizes = [8, 8, 32], strides = [1, 1, 1]} : vector<11x11x32xf32> to vector<8x8x32xf32>
    %395 = vector.shape_cast %394 : vector<8x8x32xf32> to vector<64x32xf32>
    %396 = vector.extract_strided_slice %387 {offsets = [1, 0, 0], sizes = [8, 8, 32], strides = [1, 1, 1]} : vector<11x11x32xf32> to vector<8x8x32xf32>
    %397 = vector.shape_cast %396 : vector<8x8x32xf32> to vector<64x32xf32>
    %398 = vector.extract_strided_slice %387 {offsets = [1, 1, 0], sizes = [8, 8, 32], strides = [1, 1, 1]} : vector<11x11x32xf32> to vector<8x8x32xf32>
    %399 = vector.shape_cast %398 : vector<8x8x32xf32> to vector<64x32xf32>
    %400 = vector.extract_strided_slice %387 {offsets = [1, 2, 0], sizes = [8, 8, 32], strides = [1, 1, 1]} : vector<11x11x32xf32> to vector<8x8x32xf32>
    %401 = vector.shape_cast %400 : vector<8x8x32xf32> to vector<64x32xf32>
    %402 = vector.extract_strided_slice %387 {offsets = [1, 3, 0], sizes = [8, 8, 32], strides = [1, 1, 1]} : vector<11x11x32xf32> to vector<8x8x32xf32>
    %403 = vector.shape_cast %402 : vector<8x8x32xf32> to vector<64x32xf32>
    %404 = vector.extract_strided_slice %387 {offsets = [2, 0, 0], sizes = [8, 8, 32], strides = [1, 1, 1]} : vector<11x11x32xf32> to vector<8x8x32xf32>
    %405 = vector.shape_cast %404 : vector<8x8x32xf32> to vector<64x32xf32>
    %406 = vector.extract_strided_slice %387 {offsets = [2, 1, 0], sizes = [8, 8, 32], strides = [1, 1, 1]} : vector<11x11x32xf32> to vector<8x8x32xf32>
    %407 = vector.shape_cast %406 : vector<8x8x32xf32> to vector<64x32xf32>
    %408 = vector.extract_strided_slice %387 {offsets = [2, 2, 0], sizes = [8, 8, 32], strides = [1, 1, 1]} : vector<11x11x32xf32> to vector<8x8x32xf32>
    %409 = vector.shape_cast %408 : vector<8x8x32xf32> to vector<64x32xf32>
    %410 = vector.extract_strided_slice %387 {offsets = [2, 3, 0], sizes = [8, 8, 32], strides = [1, 1, 1]} : vector<11x11x32xf32> to vector<8x8x32xf32>
    %411 = vector.shape_cast %410 : vector<8x8x32xf32> to vector<64x32xf32>
    %412 = vector.extract_strided_slice %387 {offsets = [3, 0, 0], sizes = [8, 8, 32], strides = [1, 1, 1]} : vector<11x11x32xf32> to vector<8x8x32xf32>
    %413 = vector.shape_cast %412 : vector<8x8x32xf32> to vector<64x32xf32>
    %414 = vector.extract_strided_slice %387 {offsets = [3, 1, 0], sizes = [8, 8, 32], strides = [1, 1, 1]} : vector<11x11x32xf32> to vector<8x8x32xf32>
    %415 = vector.shape_cast %414 : vector<8x8x32xf32> to vector<64x32xf32>
    %416 = vector.extract_strided_slice %387 {offsets = [3, 2, 0], sizes = [8, 8, 32], strides = [1, 1, 1]} : vector<11x11x32xf32> to vector<8x8x32xf32>
    %417 = vector.shape_cast %416 : vector<8x8x32xf32> to vector<64x32xf32>
    %418 = vector.extract_strided_slice %387 {offsets = [3, 3, 0], sizes = [8, 8, 32], strides = [1, 1, 1]} : vector<11x11x32xf32> to vector<8x8x32xf32>
    %419 = vector.shape_cast %418 : vector<8x8x32xf32> to vector<64x32xf32>
    %420 = tpu.concatenate %389, %391, %393, %395, %397, %399, %401, %403, %405, %407, %409, %411, %413, %415, %417, %419 in 1 : vector<64x32xf32>, vector<64x32xf32>, vector<64x32xf32>, vector<64x32xf32>, vector<64x32xf32>, vector<64x32xf32>, vector<64x32xf32>, vector<64x32xf32>, vector<64x32xf32>, vector<64x32xf32>, vector<64x32xf32>, vector<64x32xf32>, vector<64x32xf32>, vector<64x32xf32>, vector<64x32xf32>, vector<64x32xf32> -> vector<64x512xf32>
    %cst_187 = arith.constant dense<0.000000e+00> : vector<64x16xf32>
    %421 = tpu.matmul %420, %8, %cst_187 {dimension_numbers = #tpu.dot_dimension_numbers<[1], [0], [0], [1], [0, 0, 1, 1], [], []>} : vector<64x512xf32>, vector<512x16xf32>, vector<64x16xf32> -> vector<64x16xf32>
    %422 = arith.addf %385, %421 : vector<64x16xf32>
    %cst_188 = arith.constant dense<0.000000e+00> : vector<16xf32>
    %423 = vector.multi_reduction <add>, %422, %cst_188 [0] : vector<64x16xf32> to vector<16xf32>
    %424 = vector.shape_cast %423 : vector<16xf32> to vector<1x16xf32>
    %cst_189 = arith.constant 7.812500e-03 : f32
    %425 = vector.broadcast %cst_189 : f32 to vector<1x16xf32>
    %426 = arith.mulf %424, %425 : vector<1x16xf32>
    %427 = vector.broadcast %426 : vector<1x16xf32> to vector<64x16xf32>
    %428 = arith.subf %385, %427 : vector<64x16xf32>
    %429 = vector.broadcast %426 : vector<1x16xf32> to vector<64x16xf32>
    %430 = arith.subf %421, %429 : vector<64x16xf32>
    %431 = arith.mulf %428, %428 : vector<64x16xf32>
    %432 = arith.mulf %430, %430 : vector<64x16xf32>
    %433 = arith.addf %431, %432 : vector<64x16xf32>
    %cst_190 = arith.constant dense<0.000000e+00> : vector<16xf32>
    %434 = vector.multi_reduction <add>, %433, %cst_190 [0] : vector<64x16xf32> to vector<16xf32>
    %435 = vector.shape_cast %434 : vector<16xf32> to vector<1x16xf32>
    %cst_191 = arith.constant 7.812500e-03 : f32
    %436 = vector.broadcast %cst_191 : f32 to vector<1x16xf32>
    %437 = arith.mulf %435, %436 : vector<1x16xf32>
    %cst_192 = arith.constant 9.99999974E-6 : f32
    %438 = vector.broadcast %cst_192 : f32 to vector<1x16xf32>
    %439 = arith.addf %437, %438 : vector<1x16xf32>
    %440 = math.rsqrt %439 : vector<1x16xf32>
    %441 = arith.mulf %6, %440 : vector<1x16xf32>
    %442 = vector.broadcast %441 : vector<1x16xf32> to vector<64x16xf32>
    %443 = arith.mulf %428, %442 : vector<64x16xf32>
    %444 = vector.broadcast %7 : vector<1x16xf32> to vector<64x16xf32>
    %445 = arith.addf %443, %444 : vector<64x16xf32>
    %cst_193 = arith.constant 0.000000e+00 : f32
    %446 = vector.broadcast %cst_193 : f32 to vector<64x16xf32>
    %447 = arith.maximumf %445, %446 : vector<64x16xf32>
    %448 = vector.shape_cast %447 : vector<64x16xf32> to vector<8x8x16xf32>
    %c0_194 = arith.constant 0 : index
    %c1_195 = arith.constant 1 : index
    %c8_196 = arith.constant 8 : index
    %c0_197 = arith.constant 0 : index
    %449 = vector.load %arg11[%c0_194, %c1_195, %c8_196, %c0_197] : memref<2x10x24x16xf32, #tpu.memory_space<vmem>>, vector<1x8x8x16xf32>
    %450 = vector.shape_cast %449 : vector<1x8x8x16xf32> to vector<8x8x16xf32>
    %451 = vector.shape_cast %448 : vector<8x8x16xf32> to vector<1x8x8x16xf32>
    tpu.vector_store %arg11[%c0_194, %c1_195, %c8_196, %c0_197], %451 {strides = array<i32>} : memref<2x10x24x16xf32, #tpu.memory_space<vmem>>, vector<1x8x8x16xf32>,
    %452 = vector.broadcast %441 : vector<1x16xf32> to vector<64x16xf32>
    %453 = arith.mulf %430, %452 : vector<64x16xf32>
    %454 = vector.broadcast %7 : vector<1x16xf32> to vector<64x16xf32>
    %455 = arith.addf %453, %454 : vector<64x16xf32>
    %cst_198 = arith.constant 0.000000e+00 : f32
    %456 = vector.broadcast %cst_198 : f32 to vector<64x16xf32>
    %457 = arith.maximumf %455, %456 : vector<64x16xf32>
    %458 = vector.shape_cast %457 : vector<64x16xf32> to vector<8x8x16xf32>
    %c1_199 = arith.constant 1 : index
    %c1_200 = arith.constant 1 : index
    %c8_201 = arith.constant 8 : index
    %c0_202 = arith.constant 0 : index
    %459 = vector.load %arg11[%c1_199, %c1_200, %c8_201, %c0_202] : memref<2x10x24x16xf32, #tpu.memory_space<vmem>>, vector<1x8x8x16xf32>
    %460 = vector.shape_cast %459 : vector<1x8x8x16xf32> to vector<8x8x16xf32>
    %461 = vector.shape_cast %458 : vector<8x8x16xf32> to vector<1x8x8x16xf32>
    tpu.vector_store %arg11[%c1_199, %c1_200, %c8_201, %c0_202], %461 {strides = array<i32>} : memref<2x10x24x16xf32, #tpu.memory_space<vmem>>, vector<1x8x8x16xf32>,
    %c0_203 = arith.constant 0 : index
    %c0_204 = arith.constant 0 : index
    %c0_205 = arith.constant 0 : index
    %c0_206 = arith.constant 0 : index
    %462 = vector.load %arg11[%c0_203, %c0_204, %c0_205, %c0_206] : memref<2x10x24x16xf32, #tpu.memory_space<vmem>>, vector<1x10x24x16xf32>
    %463 = vector.shape_cast %462 : vector<1x10x24x16xf32> to vector<10x24x16xf32>
    %464 = vector.extract_strided_slice %463 {offsets = [0, 7, 0], sizes = [8, 8, 16], strides = [1, 1, 1]} : vector<10x24x16xf32> to vector<8x8x16xf32>
    %465 = vector.shape_cast %464 : vector<8x8x16xf32> to vector<64x16xf32>
    %466 = vector.extract_strided_slice %463 {offsets = [0, 8, 0], sizes = [8, 8, 16], strides = [1, 1, 1]} : vector<10x24x16xf32> to vector<8x8x16xf32>
    %467 = vector.shape_cast %466 : vector<8x8x16xf32> to vector<64x16xf32>
    %468 = vector.extract_strided_slice %463 {offsets = [1, 7, 0], sizes = [8, 8, 16], strides = [1, 1, 1]} : vector<10x24x16xf32> to vector<8x8x16xf32>
    %469 = vector.shape_cast %468 : vector<8x8x16xf32> to vector<64x16xf32>
    %470 = vector.extract_strided_slice %463 {offsets = [1, 8, 0], sizes = [8, 8, 16], strides = [1, 1, 1]} : vector<10x24x16xf32> to vector<8x8x16xf32>
    %471 = vector.shape_cast %470 : vector<8x8x16xf32> to vector<64x16xf32>
    %472 = tpu.concatenate %465, %467, %469, %471 in 1 : vector<64x16xf32>, vector<64x16xf32>, vector<64x16xf32>, vector<64x16xf32> -> vector<64x64xf32>
    %cst_207 = arith.constant dense<0.000000e+00> : vector<64x1xf32>
    %473 = tpu.matmul %472, %10, %cst_207 {dimension_numbers = #tpu.dot_dimension_numbers<[1], [0], [0], [1], [0, 0, 1, 1], [], []>} : vector<64x64xf32>, vector<64x1xf32>, vector<64x1xf32> -> vector<64x1xf32>
    %474 = vector.extract_strided_slice %463 {offsets = [0, 8, 0], sizes = [8, 8, 16], strides = [1, 1, 1]} : vector<10x24x16xf32> to vector<8x8x16xf32>
    %475 = vector.shape_cast %474 : vector<8x8x16xf32> to vector<64x16xf32>
    %476 = vector.extract_strided_slice %463 {offsets = [0, 9, 0], sizes = [8, 8, 16], strides = [1, 1, 1]} : vector<10x24x16xf32> to vector<8x8x16xf32>
    %477 = vector.shape_cast %476 : vector<8x8x16xf32> to vector<64x16xf32>
    %478 = vector.extract_strided_slice %463 {offsets = [1, 8, 0], sizes = [8, 8, 16], strides = [1, 1, 1]} : vector<10x24x16xf32> to vector<8x8x16xf32>
    %479 = vector.shape_cast %478 : vector<8x8x16xf32> to vector<64x16xf32>
    %480 = vector.extract_strided_slice %463 {offsets = [1, 9, 0], sizes = [8, 8, 16], strides = [1, 1, 1]} : vector<10x24x16xf32> to vector<8x8x16xf32>
    %481 = vector.shape_cast %480 : vector<8x8x16xf32> to vector<64x16xf32>
    %482 = tpu.concatenate %475, %477, %479, %481 in 1 : vector<64x16xf32>, vector<64x16xf32>, vector<64x16xf32>, vector<64x16xf32> -> vector<64x64xf32>
    %cst_208 = arith.constant dense<0.000000e+00> : vector<64x1xf32>
    %483 = tpu.matmul %482, %12, %cst_208 {dimension_numbers = #tpu.dot_dimension_numbers<[1], [0], [0], [1], [0, 0, 1, 1], [], []>} : vector<64x64xf32>, vector<64x1xf32>, vector<64x1xf32> -> vector<64x1xf32>
    %484 = vector.extract_strided_slice %463 {offsets = [1, 7, 0], sizes = [8, 8, 16], strides = [1, 1, 1]} : vector<10x24x16xf32> to vector<8x8x16xf32>
    %485 = vector.shape_cast %484 : vector<8x8x16xf32> to vector<64x16xf32>
    %486 = vector.extract_strided_slice %463 {offsets = [1, 8, 0], sizes = [8, 8, 16], strides = [1, 1, 1]} : vector<10x24x16xf32> to vector<8x8x16xf32>
    %487 = vector.shape_cast %486 : vector<8x8x16xf32> to vector<64x16xf32>
    %488 = vector.extract_strided_slice %463 {offsets = [2, 7, 0], sizes = [8, 8, 16], strides = [1, 1, 1]} : vector<10x24x16xf32> to vector<8x8x16xf32>
    %489 = vector.shape_cast %488 : vector<8x8x16xf32> to vector<64x16xf32>
    %490 = vector.extract_strided_slice %463 {offsets = [2, 8, 0], sizes = [8, 8, 16], strides = [1, 1, 1]} : vector<10x24x16xf32> to vector<8x8x16xf32>
    %491 = vector.shape_cast %490 : vector<8x8x16xf32> to vector<64x16xf32>
    %492 = tpu.concatenate %485, %487, %489, %491 in 1 : vector<64x16xf32>, vector<64x16xf32>, vector<64x16xf32>, vector<64x16xf32> -> vector<64x64xf32>
    %cst_209 = arith.constant dense<0.000000e+00> : vector<64x1xf32>
    %493 = tpu.matmul %492, %14, %cst_209 {dimension_numbers = #tpu.dot_dimension_numbers<[1], [0], [0], [1], [0, 0, 1, 1], [], []>} : vector<64x64xf32>, vector<64x1xf32>, vector<64x1xf32> -> vector<64x1xf32>
    %494 = vector.extract_strided_slice %463 {offsets = [1, 8, 0], sizes = [8, 8, 16], strides = [1, 1, 1]} : vector<10x24x16xf32> to vector<8x8x16xf32>
    %495 = vector.shape_cast %494 : vector<8x8x16xf32> to vector<64x16xf32>
    %496 = vector.extract_strided_slice %463 {offsets = [1, 9, 0], sizes = [8, 8, 16], strides = [1, 1, 1]} : vector<10x24x16xf32> to vector<8x8x16xf32>
    %497 = vector.shape_cast %496 : vector<8x8x16xf32> to vector<64x16xf32>
    %498 = vector.extract_strided_slice %463 {offsets = [2, 8, 0], sizes = [8, 8, 16], strides = [1, 1, 1]} : vector<10x24x16xf32> to vector<8x8x16xf32>
    %499 = vector.shape_cast %498 : vector<8x8x16xf32> to vector<64x16xf32>
    %500 = vector.extract_strided_slice %463 {offsets = [2, 9, 0], sizes = [8, 8, 16], strides = [1, 1, 1]} : vector<10x24x16xf32> to vector<8x8x16xf32>
    %501 = vector.shape_cast %500 : vector<8x8x16xf32> to vector<64x16xf32>
    %502 = tpu.concatenate %495, %497, %499, %501 in 1 : vector<64x16xf32>, vector<64x16xf32>, vector<64x16xf32>, vector<64x16xf32> -> vector<64x64xf32>
    %cst_210 = arith.constant dense<0.000000e+00> : vector<64x1xf32>
    %503 = tpu.matmul %502, %16, %cst_210 {dimension_numbers = #tpu.dot_dimension_numbers<[1], [0], [0], [1], [0, 0, 1, 1], [], []>} : vector<64x64xf32>, vector<64x1xf32>, vector<64x1xf32> -> vector<64x1xf32>
    %c1_211 = arith.constant 1 : index
    %c0_212 = arith.constant 0 : index
    %c0_213 = arith.constant 0 : index
    %c0_214 = arith.constant 0 : index
    %504 = vector.load %arg11[%c1_211, %c0_212, %c0_213, %c0_214] : memref<2x10x24x16xf32, #tpu.memory_space<vmem>>, vector<1x10x24x16xf32>
    %505 = vector.shape_cast %504 : vector<1x10x24x16xf32> to vector<10x24x16xf32>
    %506 = vector.extract_strided_slice %505 {offsets = [0, 7, 0], sizes = [8, 8, 16], strides = [1, 1, 1]} : vector<10x24x16xf32> to vector<8x8x16xf32>
    %507 = vector.shape_cast %506 : vector<8x8x16xf32> to vector<64x16xf32>
    %508 = vector.extract_strided_slice %505 {offsets = [0, 8, 0], sizes = [8, 8, 16], strides = [1, 1, 1]} : vector<10x24x16xf32> to vector<8x8x16xf32>
    %509 = vector.shape_cast %508 : vector<8x8x16xf32> to vector<64x16xf32>
    %510 = vector.extract_strided_slice %505 {offsets = [1, 7, 0], sizes = [8, 8, 16], strides = [1, 1, 1]} : vector<10x24x16xf32> to vector<8x8x16xf32>
    %511 = vector.shape_cast %510 : vector<8x8x16xf32> to vector<64x16xf32>
    %512 = vector.extract_strided_slice %505 {offsets = [1, 8, 0], sizes = [8, 8, 16], strides = [1, 1, 1]} : vector<10x24x16xf32> to vector<8x8x16xf32>
    %513 = vector.shape_cast %512 : vector<8x8x16xf32> to vector<64x16xf32>
    %514 = tpu.concatenate %507, %509, %511, %513 in 1 : vector<64x16xf32>, vector<64x16xf32>, vector<64x16xf32>, vector<64x16xf32> -> vector<64x64xf32>
    %cst_215 = arith.constant dense<0.000000e+00> : vector<64x1xf32>
    %515 = tpu.matmul %514, %10, %cst_215 {dimension_numbers = #tpu.dot_dimension_numbers<[1], [0], [0], [1], [0, 0, 1, 1], [], []>} : vector<64x64xf32>, vector<64x1xf32>, vector<64x1xf32> -> vector<64x1xf32>
    %516 = vector.extract_strided_slice %505 {offsets = [0, 8, 0], sizes = [8, 8, 16], strides = [1, 1, 1]} : vector<10x24x16xf32> to vector<8x8x16xf32>
    %517 = vector.shape_cast %516 : vector<8x8x16xf32> to vector<64x16xf32>
    %518 = vector.extract_strided_slice %505 {offsets = [0, 9, 0], sizes = [8, 8, 16], strides = [1, 1, 1]} : vector<10x24x16xf32> to vector<8x8x16xf32>
    %519 = vector.shape_cast %518 : vector<8x8x16xf32> to vector<64x16xf32>
    %520 = vector.extract_strided_slice %505 {offsets = [1, 8, 0], sizes = [8, 8, 16], strides = [1, 1, 1]} : vector<10x24x16xf32> to vector<8x8x16xf32>
    %521 = vector.shape_cast %520 : vector<8x8x16xf32> to vector<64x16xf32>
    %522 = vector.extract_strided_slice %505 {offsets = [1, 9, 0], sizes = [8, 8, 16], strides = [1, 1, 1]} : vector<10x24x16xf32> to vector<8x8x16xf32>
    %523 = vector.shape_cast %522 : vector<8x8x16xf32> to vector<64x16xf32>
    %524 = tpu.concatenate %517, %519, %521, %523 in 1 : vector<64x16xf32>, vector<64x16xf32>, vector<64x16xf32>, vector<64x16xf32> -> vector<64x64xf32>
    %cst_216 = arith.constant dense<0.000000e+00> : vector<64x1xf32>
    %525 = tpu.matmul %524, %12, %cst_216 {dimension_numbers = #tpu.dot_dimension_numbers<[1], [0], [0], [1], [0, 0, 1, 1], [], []>} : vector<64x64xf32>, vector<64x1xf32>, vector<64x1xf32> -> vector<64x1xf32>
    %526 = vector.extract_strided_slice %505 {offsets = [1, 7, 0], sizes = [8, 8, 16], strides = [1, 1, 1]} : vector<10x24x16xf32> to vector<8x8x16xf32>
    %527 = vector.shape_cast %526 : vector<8x8x16xf32> to vector<64x16xf32>
    %528 = vector.extract_strided_slice %505 {offsets = [1, 8, 0], sizes = [8, 8, 16], strides = [1, 1, 1]} : vector<10x24x16xf32> to vector<8x8x16xf32>
    %529 = vector.shape_cast %528 : vector<8x8x16xf32> to vector<64x16xf32>
    %530 = vector.extract_strided_slice %505 {offsets = [2, 7, 0], sizes = [8, 8, 16], strides = [1, 1, 1]} : vector<10x24x16xf32> to vector<8x8x16xf32>
    %531 = vector.shape_cast %530 : vector<8x8x16xf32> to vector<64x16xf32>
    %532 = vector.extract_strided_slice %505 {offsets = [2, 8, 0], sizes = [8, 8, 16], strides = [1, 1, 1]} : vector<10x24x16xf32> to vector<8x8x16xf32>
    %533 = vector.shape_cast %532 : vector<8x8x16xf32> to vector<64x16xf32>
    %534 = tpu.concatenate %527, %529, %531, %533 in 1 : vector<64x16xf32>, vector<64x16xf32>, vector<64x16xf32>, vector<64x16xf32> -> vector<64x64xf32>
    %cst_217 = arith.constant dense<0.000000e+00> : vector<64x1xf32>
    %535 = tpu.matmul %534, %14, %cst_217 {dimension_numbers = #tpu.dot_dimension_numbers<[1], [0], [0], [1], [0, 0, 1, 1], [], []>} : vector<64x64xf32>, vector<64x1xf32>, vector<64x1xf32> -> vector<64x1xf32>
    %536 = vector.extract_strided_slice %505 {offsets = [1, 8, 0], sizes = [8, 8, 16], strides = [1, 1, 1]} : vector<10x24x16xf32> to vector<8x8x16xf32>
    %537 = vector.shape_cast %536 : vector<8x8x16xf32> to vector<64x16xf32>
    %538 = vector.extract_strided_slice %505 {offsets = [1, 9, 0], sizes = [8, 8, 16], strides = [1, 1, 1]} : vector<10x24x16xf32> to vector<8x8x16xf32>
    %539 = vector.shape_cast %538 : vector<8x8x16xf32> to vector<64x16xf32>
    %540 = vector.extract_strided_slice %505 {offsets = [2, 8, 0], sizes = [8, 8, 16], strides = [1, 1, 1]} : vector<10x24x16xf32> to vector<8x8x16xf32>
    %541 = vector.shape_cast %540 : vector<8x8x16xf32> to vector<64x16xf32>
    %542 = vector.extract_strided_slice %505 {offsets = [2, 9, 0], sizes = [8, 8, 16], strides = [1, 1, 1]} : vector<10x24x16xf32> to vector<8x8x16xf32>
    %543 = vector.shape_cast %542 : vector<8x8x16xf32> to vector<64x16xf32>
    %544 = tpu.concatenate %537, %539, %541, %543 in 1 : vector<64x16xf32>, vector<64x16xf32>, vector<64x16xf32>, vector<64x16xf32> -> vector<64x64xf32>
    %cst_218 = arith.constant dense<0.000000e+00> : vector<64x1xf32>
    %545 = tpu.matmul %544, %16, %cst_218 {dimension_numbers = #tpu.dot_dimension_numbers<[1], [0], [0], [1], [0, 0, 1, 1], [], []>} : vector<64x64xf32>, vector<64x1xf32>, vector<64x1xf32> -> vector<64x1xf32>
    %546 = tpu.concatenate %473, %483, %493, %503, %515, %525, %535, %545 in 1 : vector<64x1xf32>, vector<64x1xf32>, vector<64x1xf32>, vector<64x1xf32>, vector<64x1xf32>, vector<64x1xf32>, vector<64x1xf32>, vector<64x1xf32> -> vector<64x8xf32>
    %547 = math.tanh %546 : vector<64x8xf32>
    %c0_219 = arith.constant 0 : index
    %c0_220 = arith.constant 0 : index
    %548 = vector.load %arg9[%c0_219, %c0_220] : memref<64x8xf32, #tpu.memory_space<vmem>>, vector<64x8xf32>
    tpu.vector_store %arg9[%c0_219, %c0_220], %547 {strides = array<i32>} : memref<64x8xf32, #tpu.memory_space<vmem>>, vector<64x8xf32>,
    return
  }
  func.func @transform_0(%arg0: i32) -> (i32, i32) {
    %c0_i32 = arith.constant 0 : i32
    %c0_i32_0 = arith.constant 0 : i32
    %c0_i32_1 = arith.constant 0 : i32
    return %c0_i32, %c0_i32_0 : i32, i32
  }
  func.func @transform_1(%arg0: i32) -> (i32, i32) {
    %c0_i32 = arith.constant 0 : i32
    %c0_i32_0 = arith.constant 0 : i32
    %c0_i32_1 = arith.constant 0 : i32
    return %c0_i32, %c0_i32_0 : i32, i32
  }
  func.func @transform_2(%arg0: i32) -> (i32, i32) {
    %c0_i32 = arith.constant 0 : i32
    %c0_i32_0 = arith.constant 0 : i32
    %c0_i32_1 = arith.constant 0 : i32
    return %c0_i32, %c0_i32_0 : i32, i32
  }
  func.func @transform_3(%arg0: i32) -> (i32, i32, i32) {
    %c0_i32 = arith.constant 0 : i32
    %c0_i32_0 = arith.constant 0 : i32
    %c0_i32_1 = arith.constant 0 : i32
    %c0_i32_2 = arith.constant 0 : i32
    return %c0_i32, %c0_i32_0, %c0_i32_1 : i32, i32, i32
  }
  func.func @transform_4(%arg0: i32) -> (i32, i32) {
    %c0_i32 = arith.constant 0 : i32
    %c0_i32_0 = arith.constant 0 : i32
    %c0_i32_1 = arith.constant 0 : i32
    return %c0_i32, %c0_i32_0 : i32, i32
  }
  func.func @transform_5(%arg0: i32) -> (i32, i32) {
    %c0_i32 = arith.constant 0 : i32
    %c0_i32_0 = arith.constant 0 : i32
    %c0_i32_1 = arith.constant 0 : i32
    return %c0_i32, %c0_i32_0 : i32, i32
  }
  func.func @transform_6(%arg0: i32) -> (i32, i32) {
    %c0_i32 = arith.constant 0 : i32
    %c0_i32_0 = arith.constant 0 : i32
    %c0_i32_1 = arith.constant 0 : i32
    return %c0_i32, %c0_i32_0 : i32, i32
  }
  func.func @transform_7(%arg0: i32) -> (i32, i32) {
    %c0_i32 = arith.constant 0 : i32
    %c0_i32_0 = arith.constant 0 : i32
    %c0_i32_1 = arith.constant 0 : i32
    return %c0_i32, %c0_i32_0 : i32, i32
  }
  func.func @transform_8(%arg0: i32) -> (i32, i32) {
    %c0_i32 = arith.constant 0 : i32
    %c0_i32_0 = arith.constant 0 : i32
    %c0_i32_1 = arith.constant 0 : i32
    return %c0_i32, %c0_i32_0 : i32, i32
  }
}

</mosaic_0001>

<llo_original>
// kernel: tpu_custom_call.1
$region0: #{tpu_custom_call.1}
  #allocation0 [shape = 'u32[]', space=smem, size = 0x4, offset = 0x4, fixed_abs, tag = 'smem constant byte address 0x4 - core index']
  #allocation1 [shape = 'u32[144,128]{1,0:T(1,128)}', space=vmem, size = 0x12000, scoped, tag = 'internal scratch']
  #allocation2 [shape = 'f32[2,11,11,32]{3,2,1,0:T(8,128)}', space=vmem, size = 0x2c000, scoped, tag = 'scratch operand']
  #allocation3 [shape = 'f32[2,10,24,16]{3,2,1,0:T(8,128)}', space=vmem, size = 0x3c000, scoped, tag = 'scratch operand']
  %s0 = inlined_call_operand.vmem [shape: f32[2,16], index: 0, kind: input, shape index: {}]
  %s1 = inlined_call_operand.vmem [shape: f32[16,512], index: 1, kind: input, shape index: {}]
  %s2 = inlined_call_operand.vmem [shape: f32[512,16], index: 2, kind: input, shape index: {}]
  %s3 = inlined_call_operand.vmem [shape: f32[4,64,1], index: 3, kind: input, shape index: {}]
  %s4 = inlined_call_operand.vmem [shape: f32[1,32], index: 4, kind: input, shape index: {}]
  %s5 = inlined_call_operand.vmem [shape: f32[1,32], index: 5, kind: input, shape index: {}]
  %s6 = inlined_call_operand.vmem [shape: f32[1,16], index: 6, kind: input, shape index: {}]
  %s7 = inlined_call_operand.vmem [shape: f32[1,16], index: 7, kind: input, shape index: {}]
  %s8 = inlined_call_operand.vmem [shape: f32[64,8], index: 8, kind: output, shape index: {}]
  %s9 = sld [smem:[#allocation0]]
  $region42: #{tpu_custom_call.1} parent=0
    _
  %s11 = ssub.s32 1, %s9
  %s12 = scalar_select 0, %s11, %s9
  // Predicated region
  $region2: #{tpu_custom_call.1} parent=0 // pred_check
    _
  $region3: #{tpu_custom_call.1} parent=0 // pred_check_branch
    %14 = sbr.rel (0) target = $region5
  $region4: #{tpu_custom_call.1} parent=0 // pred_region
    _
  $region5: #{tpu_custom_call.1} parent=0 // pred_fallthru
    _
  // Predicated region
  $region6: #{tpu_custom_call.1} parent=0 // pred_check
    _
  $region7: #{tpu_custom_call.1} parent=0 // pred_check_branch
    %16 = sbr.rel (0) target = $region9
  $region8: #{tpu_custom_call.1} parent=0 // pred_region
    _
  $region9: #{tpu_custom_call.1} parent=0 // pred_fallthru
    _
  // Predicated region
  $region10: #{tpu_custom_call.1} parent=0 // pred_check
    _
  $region11: #{tpu_custom_call.1} parent=0 // pred_check_branch
    %18 = sbr.rel (0) target = $region13
  $region12: #{tpu_custom_call.1} parent=0 // pred_region
    _
  $region13: #{tpu_custom_call.1} parent=0 // pred_fallthru
    _
  // Predicated region
  $region14: #{tpu_custom_call.1} parent=0 // pred_check
    _
  $region15: #{tpu_custom_call.1} parent=0 // pred_check_branch
    %20 = sbr.rel (0) target = $region17
  $region16: #{tpu_custom_call.1} parent=0 // pred_region
    _
  $region17: #{tpu_custom_call.1} parent=0 // pred_fallthru
    _
  // Predicated region
  $region18: #{tpu_custom_call.1} parent=0 // pred_check
    _
  $region19: #{tpu_custom_call.1} parent=0 // pred_check_branch
    %22 = sbr.rel (0) target = $region21
  $region20: #{tpu_custom_call.1} parent=0 // pred_region
    _
  $region21: #{tpu_custom_call.1} parent=0 // pred_fallthru
    _
  // Predicated region
  $region22: #{tpu_custom_call.1} parent=0 // pred_check
    _
  $region23: #{tpu_custom_call.1} parent=0 // pred_check_branch
    %24 = sbr.rel (0) target = $region25
  $region24: #{tpu_custom_call.1} parent=0 // pred_region
    _
  $region25: #{tpu_custom_call.1} parent=0 // pred_fallthru
    _
  // Predicated region
  $region26: #{tpu_custom_call.1} parent=0 // pred_check
    _
  $region27: #{tpu_custom_call.1} parent=0 // pred_check_branch
    %26 = sbr.rel (0) target = $region29
  $region28: #{tpu_custom_call.1} parent=0 // pred_region
    _
  $region29: #{tpu_custom_call.1} parent=0 // pred_fallthru
    _
  // Predicated region
  $region30: #{tpu_custom_call.1} parent=0 // pred_check
    _
  $region31: #{tpu_custom_call.1} parent=0 // pred_check_branch
    %28 = sbr.rel (0) target = $region33
  $region32: #{tpu_custom_call.1} parent=0 // pred_region
    _
  $region33: #{tpu_custom_call.1} parent=0 // pred_fallthru
    _
  %vm29 = vcmask 261120
  %30 = vst.msk [vmem:[#allocation2] sm:$0xff] %vm29, 0.0
  %vm31 = vcmask 256000
  %32 = vst.msk [vmem:[#allocation2 + $0x8] sm:$0x7] %vm31, 0.0
  %33 = vst.msk [vmem:[#allocation2 + $0x10] sm:$0xff] %vm29, 0.0
  %34 = vst.msk [vmem:[#allocation2 + $0x18] sm:$0x7] %vm31, 0.0
  %35 = vst.msk [vmem:[#allocation2 + $0x20] sm:$0xff] %vm29, 0.0
  %36 = vst.msk [vmem:[#allocation2 + $0x28] sm:$0x7] %vm31, 0.0
  %37 = vst.msk [vmem:[#allocation2 + $0x30] sm:$0xff] %vm29, 0.0
  %38 = vst.msk [vmem:[#allocation2 + $0x38] sm:$0x7] %vm31, 0.0
  %39 = vst.msk [vmem:[#allocation2 + $0x40] sm:$0xff] %vm29, 0.0
  %40 = vst.msk [vmem:[#allocation2 + $0x48] sm:$0x7] %vm31, 0.0
  %41 = vst.msk [vmem:[#allocation2 + $0x50] sm:$0xff] %vm29, 0.0
  %42 = vst.msk [vmem:[#allocation2 + $0x58] sm:$0x7] %vm31, 0.0
  %43 = vst.msk [vmem:[#allocation2 + $0x60] sm:$0xff] %vm29, 0.0
  %44 = vst.msk [vmem:[#allocation2 + $0x68] sm:$0x7] %vm31, 0.0
  %45 = vst.msk [vmem:[#allocation2 + $0x70] sm:$0xff] %vm29, 0.0
  %46 = vst.msk [vmem:[#allocation2 + $0x78] sm:$0x7] %vm31, 0.0
  %47 = vst.msk [vmem:[#allocation2 + $0x80] sm:$0xff] %vm29, 0.0
  %48 = vst.msk [vmem:[#allocation2 + $0x88] sm:$0x7] %vm31, 0.0
  %49 = vst.msk [vmem:[#allocation2 + $0x90] sm:$0xff] %vm29, 0.0
  %50 = vst.msk [vmem:[#allocation2 + $0x98] sm:$0x7] %vm31, 0.0
  %51 = vst.msk [vmem:[#allocation2 + $0xa0] sm:$0xff] %vm29, 0.0
  %52 = vst.msk [vmem:[#allocation2 + $0xa8] sm:$0x7] %vm31, 0.0
  %53 = vst.msk [vmem:[#allocation2 + $0xb0] sm:$0xff] %vm29, 0.0
  %54 = vst.msk [vmem:[#allocation2 + $0xb8] sm:$0x7] %vm31, 0.0
  %55 = vst.msk [vmem:[#allocation2 + $0xc0] sm:$0xff] %vm29, 0.0
  %56 = vst.msk [vmem:[#allocation2 + $0xc8] sm:$0x7] %vm31, 0.0
  %57 = vst.msk [vmem:[#allocation2 + $0xd0] sm:$0xff] %vm29, 0.0
  %58 = vst.msk [vmem:[#allocation2 + $0xd8] sm:$0x7] %vm31, 0.0
  %59 = vst.msk [vmem:[#allocation2 + $0xe0] sm:$0xff] %vm29, 0.0
  %60 = vst.msk [vmem:[#allocation2 + $0xe8] sm:$0x7] %vm31, 0.0
  %61 = vst.msk [vmem:[#allocation2 + $0xf0] sm:$0xff] %vm29, 0.0
  %62 = vst.msk [vmem:[#allocation2 + $0xf8] sm:$0x7] %vm31, 0.0
  %63 = vst.msk [vmem:[#allocation2 + $0x100] sm:$0xff] %vm29, 0.0
  %64 = vst.msk [vmem:[#allocation2 + $0x108] sm:$0x7] %vm31, 0.0
  %65 = vst.msk [vmem:[#allocation2 + $0x110] sm:$0xff] %vm29, 0.0
  %66 = vst.msk [vmem:[#allocation2 + $0x118] sm:$0x7] %vm31, 0.0
  %67 = vst.msk [vmem:[#allocation2 + $0x120] sm:$0xff] %vm29, 0.0
  %68 = vst.msk [vmem:[#allocation2 + $0x128] sm:$0x7] %vm31, 0.0
  %69 = vst.msk [vmem:[#allocation2 + $0x130] sm:$0xff] %vm29, 0.0
  %70 = vst.msk [vmem:[#allocation2 + $0x138] sm:$0x7] %vm31, 0.0
  %71 = vst.msk [vmem:[#allocation2 + $0x140] sm:$0xff] %vm29, 0.0
  %72 = vst.msk [vmem:[#allocation2 + $0x148] sm:$0x7] %vm31, 0.0
  %73 = vst.msk [vmem:[#allocation2 + $0x150] sm:$0xff] %vm29, 0.0
  %74 = vst.msk [vmem:[#allocation2 + $0x158] sm:$0x7] %vm31, 0.0
  %vm75 = vcmask 130048
  %76 = vst.msk [vmem:[#allocation3] sm:$0xff] %vm75, 0.0
  %77 = vst.msk [vmem:[#allocation3 + $0x8] sm:$0xff] %vm75, 0.0
  %78 = vst.msk [vmem:[#allocation3 + $0x10] sm:$0xff] %vm75, 0.0
  %79 = vst.msk [vmem:[#allocation3 + $0x18] sm:$0xff] %vm75, 0.0
  %80 = vst.msk [vmem:[#allocation3 + $0x20] sm:$0xff] %vm75, 0.0
  %81 = vst.msk [vmem:[#allocation3 + $0x28] sm:$0xff] %vm75, 0.0
  %82 = vst.msk [vmem:[#allocation3 + $0x30] sm:$0xff] %vm75, 0.0
  %83 = vst.msk [vmem:[#allocation3 + $0x38] sm:$0xff] %vm75, 0.0
  %84 = vst.msk [vmem:[#allocation3 + $0x40] sm:$0xff] %vm75, 0.0
  %85 = vst.msk [vmem:[#allocation3 + $0x48] sm:$0xff] %vm75, 0.0
  %86 = vst.msk [vmem:[#allocation3 + $0x50] sm:$0xff] %vm75, 0.0
  %87 = vst.msk [vmem:[#allocation3 + $0x58] sm:$0xff] %vm75, 0.0
  %88 = vst.msk [vmem:[#allocation3 + $0x60] sm:$0xff] %vm75, 0.0
  %89 = vst.msk [vmem:[#allocation3 + $0x68] sm:$0xff] %vm75, 0.0
  %90 = vst.msk [vmem:[#allocation3 + $0x70] sm:$0xff] %vm75, 0.0
  %91 = vst.msk [vmem:[#allocation3 + $0x78] sm:$0xff] %vm75, 0.0
  %92 = vst.msk [vmem:[#allocation3 + $0x80] sm:$0xff] %vm75, 0.0
  %93 = vst.msk [vmem:[#allocation3 + $0x88] sm:$0xff] %vm75, 0.0
  %94 = vst.msk [vmem:[#allocation3 + $0x90] sm:$0xff] %vm75, 0.0
  %95 = vst.msk [vmem:[#allocation3 + $0x98] sm:$0xff] %vm75, 0.0
  %96 = vst.msk [vmem:[#allocation3 + $0xa0] sm:$0xff] %vm75, 0.0
  %97 = vst.msk [vmem:[#allocation3 + $0xa8] sm:$0xff] %vm75, 0.0
  %98 = vst.msk [vmem:[#allocation3 + $0xb0] sm:$0xff] %vm75, 0.0
  %99 = vst.msk [vmem:[#allocation3 + $0xb8] sm:$0xff] %vm75, 0.0
  %100 = vst.msk [vmem:[#allocation3 + $0xc0] sm:$0xff] %vm75, 0.0
  %101 = vst.msk [vmem:[#allocation3 + $0xc8] sm:$0xff] %vm75, 0.0
  %102 = vst.msk [vmem:[#allocation3 + $0xd0] sm:$0xff] %vm75, 0.0
  %103 = vst.msk [vmem:[#allocation3 + $0xd8] sm:$0xff] %vm75, 0.0
  %104 = vst.msk [vmem:[#allocation3 + $0xe0] sm:$0xff] %vm75, 0.0
  %105 = vst.msk [vmem:[#allocation3 + $0xe8] sm:$0xff] %vm75, 0.0
  %106 = vst.msk [vmem:[#allocation3 + $0xf0] sm:$0xff] %vm75, 0.0
  %107 = vst.msk [vmem:[#allocation3 + $0xf8] sm:$0xff] %vm75, 0.0
  %108 = vst.msk [vmem:[#allocation3 + $0x100] sm:$0xff] %vm75, 0.0
  %109 = vst.msk [vmem:[#allocation3 + $0x108] sm:$0xff] %vm75, 0.0
  %110 = vst.msk [vmem:[#allocation3 + $0x110] sm:$0xff] %vm75, 0.0
  %111 = vst.msk [vmem:[#allocation3 + $0x118] sm:$0xff] %vm75, 0.0
  %112 = vst.msk [vmem:[#allocation3 + $0x120] sm:$0xff] %vm75, 0.0
  %113 = vst.msk [vmem:[#allocation3 + $0x128] sm:$0xff] %vm75, 0.0
  %114 = vst.msk [vmem:[#allocation3 + $0x130] sm:$0xff] %vm75, 0.0
  %115 = vst.msk [vmem:[#allocation3 + $0x138] sm:$0xff] %vm75, 0.0
  %116 = vst.msk [vmem:[#allocation3 + $0x140] sm:$0xff] %vm75, 0.0
  %117 = vst.msk [vmem:[#allocation3 + $0x148] sm:$0xff] %vm75, 0.0
  %118 = vst.msk [vmem:[#allocation3 + $0x150] sm:$0xff] %vm75, 0.0
  %119 = vst.msk [vmem:[#allocation3 + $0x158] sm:$0xff] %vm75, 0.0
  %120 = vst.msk [vmem:[#allocation3 + $0x160] sm:$0xff] %vm75, 0.0
  %121 = vst.msk [vmem:[#allocation3 + $0x168] sm:$0xff] %vm75, 0.0
  %122 = vst.msk [vmem:[#allocation3 + $0x170] sm:$0xff] %vm75, 0.0
  %123 = vst.msk [vmem:[#allocation3 + $0x178] sm:$0xff] %vm75, 0.0
  %124 = vst.msk [vmem:[#allocation3 + $0x180] sm:$0xff] %vm75, 0.0
  %125 = vst.msk [vmem:[#allocation3 + $0x188] sm:$0xff] %vm75, 0.0
  %126 = vst.msk [vmem:[#allocation3 + $0x190] sm:$0xff] %vm75, 0.0
  %127 = vst.msk [vmem:[#allocation3 + $0x198] sm:$0xff] %vm75, 0.0
  %128 = vst.msk [vmem:[#allocation3 + $0x1a0] sm:$0xff] %vm75, 0.0
  %129 = vst.msk [vmem:[#allocation3 + $0x1a8] sm:$0xff] %vm75, 0.0
  %130 = vst.msk [vmem:[#allocation3 + $0x1b0] sm:$0xff] %vm75, 0.0
  %131 = vst.msk [vmem:[#allocation3 + $0x1b8] sm:$0xff] %vm75, 0.0
  %132 = vst.msk [vmem:[#allocation3 + $0x1c0] sm:$0xff] %vm75, 0.0
  %133 = vst.msk [vmem:[#allocation3 + $0x1c8] sm:$0xff] %vm75, 0.0
  %134 = vst.msk [vmem:[#allocation3 + $0x1d0] sm:$0xff] %vm75, 0.0
  %135 = vst.msk [vmem:[#allocation3 + $0x1d8] sm:$0xff] %vm75, 0.0
  %v136 = vld [vmem:[%s4] sm:$0x1]
  %v137 = vld [vmem:[%s5] sm:$0x1]
  %v138 = vld [vmem:[%s6] sm:$0x1]
  %v139 = vld [vmem:[%s7] sm:$0x1]
  %v140 = vld [vmem:[%s2] sm:$0xff]
  %v141 = vld [vmem:[%s2 + $0x8] sm:$0xff]
  %v142 = vld [vmem:[%s2 + $0x10] sm:$0xff]
  %v143 = vld [vmem:[%s2 + $0x18] sm:$0xff]
  %v144 = vld [vmem:[%s2 + $0x20] sm:$0xff]
  %v145 = vld [vmem:[%s2 + $0x28] sm:$0xff]
  %v146 = vld [vmem:[%s2 + $0x30] sm:$0xff]
  %v147 = vld [vmem:[%s2 + $0x38] sm:$0xff]
  %v148 = vld [vmem:[%s2 + $0x40] sm:$0xff]
  %v149 = vld [vmem:[%s2 + $0x48] sm:$0xff]
  %v150 = vld [vmem:[%s2 + $0x50] sm:$0xff]
  %v151 = vld [vmem:[%s2 + $0x58] sm:$0xff]
  %v152 = vld [vmem:[%s2 + $0x60] sm:$0xff]
  %v153 = vld [vmem:[%s2 + $0x68] sm:$0xff]
  %v154 = vld [vmem:[%s2 + $0x70] sm:$0xff]
  %v155 = vld [vmem:[%s2 + $0x78] sm:$0xff]
  %v156 = vld [vmem:[%s2 + $0x80] sm:$0xff]
  %v157 = vld [vmem:[%s2 + $0x88] sm:$0xff]
  %v158 = vld [vmem:[%s2 + $0x90] sm:$0xff]
  %v159 = vld [vmem:[%s2 + $0x98] sm:$0xff]
  %v160 = vld [vmem:[%s2 + $0xa0] sm:$0xff]
  %v161 = vld [vmem:[%s2 + $0xa8] sm:$0xff]
  %v162 = vld [vmem:[%s2 + $0xb0] sm:$0xff]
  %v163 = vld [vmem:[%s2 + $0xb8] sm:$0xff]
  %v164 = vld [vmem:[%s2 + $0xc0] sm:$0xff]
  %v165 = vld [vmem:[%s2 + $0xc8] sm:$0xff]
  %v166 = vld [vmem:[%s2 + $0xd0] sm:$0xff]
  %v167 = vld [vmem:[%s2 + $0xd8] sm:$0xff]
  %v168 = vld [vmem:[%s2 + $0xe0] sm:$0xff]
  %v169 = vld [vmem:[%s2 + $0xe8] sm:$0xff]
  %v170 = vld [vmem:[%s2 + $0xf0] sm:$0xff]
  %v171 = vld [vmem:[%s2 + $0xf8] sm:$0xff]
  %v172 = vld [vmem:[%s2 + $0x100] sm:$0xff]
  %v173 = vld [vmem:[%s2 + $0x108] sm:$0xff]
  %v174 = vld [vmem:[%s2 + $0x110] sm:$0xff]
  %v175 = vld [vmem:[%s2 + $0x118] sm:$0xff]
  %v176 = vld [vmem:[%s2 + $0x120] sm:$0xff]
  %v177 = vld [vmem:[%s2 + $0x128] sm:$0xff]
  %v178 = vld [vmem:[%s2 + $0x130] sm:$0xff]
  %v179 = vld [vmem:[%s2 + $0x138] sm:$0xff]
  %v180 = vld [vmem:[%s2 + $0x140] sm:$0xff]
  %v181 = vld [vmem:[%s2 + $0x148] sm:$0xff]
  %v182 = vld [vmem:[%s2 + $0x150] sm:$0xff]
  %v183 = vld [vmem:[%s2 + $0x158] sm:$0xff]
  %v184 = vld [vmem:[%s2 + $0x160] sm:$0xff]
  %v185 = vld [vmem:[%s2 + $0x168] sm:$0xff]
  %v186 = vld [vmem:[%s2 + $0x170] sm:$0xff]
  %v187 = vld [vmem:[%s2 + $0x178] sm:$0xff]
  %v188 = vld [vmem:[%s2 + $0x180] sm:$0xff]
  %v189 = vld [vmem:[%s2 + $0x188] sm:$0xff]
  %v190 = vld [vmem:[%s2 + $0x190] sm:$0xff]
  %v191 = vld [vmem:[%s2 + $0x198] sm:$0xff]
  %v192 = vld [vmem:[%s2 + $0x1a0] sm:$0xff]
  %v193 = vld [vmem:[%s2 + $0x1a8] sm:$0xff]
  %v194 = vld [vmem:[%s2 + $0x1b0] sm:$0xff]
  %v195 = vld [vmem:[%s2 + $0x1b8] sm:$0xff]
  %v196 = vld [vmem:[%s2 + $0x1c0] sm:$0xff]
  %v197 = vld [vmem:[%s2 + $0x1c8] sm:$0xff]
  %v198 = vld [vmem:[%s2 + $0x1d0] sm:$0xff]
  %v199 = vld [vmem:[%s2 + $0x1d8] sm:$0xff]
  %v200 = vld [vmem:[%s2 + $0x1e0] sm:$0xff]
  %v201 = vld [vmem:[%s2 + $0x1e8] sm:$0xff]
  %v202 = vld [vmem:[%s2 + $0x1f0] sm:$0xff]
  %v203 = vld [vmem:[%s2 + $0x1f8] sm:$0xff]
  %v204 = vld [vmem:[%s3] sm:$0xff]
  %v205 = vld [vmem:[%s3 + $0x8] sm:$0xff]
  %v206 = vld [vmem:[%s3 + $0x10] sm:$0xff]
  %v207 = vld [vmem:[%s3 + $0x18] sm:$0xff]
  %v208 = vld [vmem:[%s3 + $0x20] sm:$0xff]
  %v209 = vld [vmem:[%s3 + $0x28] sm:$0xff]
  %v210 = vld [vmem:[%s3 + $0x30] sm:$0xff]
  %v211 = vld [vmem:[%s3 + $0x38] sm:$0xff]
  %s212 = scalar_lea.vmem %s3, 64
  %v213 = vld [vmem:[%s212] sm:$0xff]
  %v214 = vld [vmem:[%s212 + $0x8] sm:$0xff]
  %v215 = vld [vmem:[%s212 + $0x10] sm:$0xff]
  %v216 = vld [vmem:[%s212 + $0x18] sm:$0xff]
  %v217 = vld [vmem:[%s212 + $0x20] sm:$0xff]
  %v218 = vld [vmem:[%s212 + $0x28] sm:$0xff]
  %v219 = vld [vmem:[%s212 + $0x30] sm:$0xff]
  %v220 = vld [vmem:[%s212 + $0x38] sm:$0xff]
  %s221 = scalar_lea.vmem %s3, 128
  %v222 = vld [vmem:[%s221] sm:$0xff]
  %v223 = vld [vmem:[%s221 + $0x8] sm:$0xff]
  %v224 = vld [vmem:[%s221 + $0x10] sm:$0xff]
  %v225 = vld [vmem:[%s221 + $0x18] sm:$0xff]
  %v226 = vld [vmem:[%s221 + $0x20] sm:$0xff]
  %v227 = vld [vmem:[%s221 + $0x28] sm:$0xff]
  %v228 = vld [vmem:[%s221 + $0x30] sm:$0xff]
  %v229 = vld [vmem:[%s221 + $0x38] sm:$0xff]
  %s230 = scalar_lea.vmem %s3, 192
  %v231 = vld [vmem:[%s230] sm:$0xff]
  %v232 = vld [vmem:[%s230 + $0x8] sm:$0xff]
  %v233 = vld [vmem:[%s230 + $0x10] sm:$0xff]
  %v234 = vld [vmem:[%s230 + $0x18] sm:$0xff]
  %v235 = vld [vmem:[%s230 + $0x20] sm:$0xff]
  %v236 = vld [vmem:[%s230 + $0x28] sm:$0xff]
  %v237 = vld [vmem:[%s230 + $0x30] sm:$0xff]
  %v238 = vld [vmem:[%s230 + $0x38] sm:$0xff]
  %v239 = vld [vmem:[%s0] sm:$0x3]
  %v240 = vld [vmem:[%s1] sm:$0xff]
  %v241 = vld [vmem:[%s1 + $0x8] sm:$0xff]
  %v242 = vld [vmem:[%s1 + $0x10] sm:$0xff]
  %v243 = vld [vmem:[%s1 + $0x18] sm:$0xff]
  %v244 = vld [vmem:[%s1 + $0x20] sm:$0xff]
  %v245 = vld [vmem:[%s1 + $0x28] sm:$0xff]
  %v246 = vld [vmem:[%s1 + $0x30] sm:$0xff]
  %v247 = vld [vmem:[%s1 + $0x38] sm:$0xff]
  %v249 = vsel %vm75, %v239, 0
  %251 = vmatprep.subr.mxu0 %v241
  %252 = vmatpush1.msra.mxu0 %v240
  %253 = vmatprep.subr.mxu0 %v245
  %254 = vmatpush1.msra.mxu0 %v244
  %255 = vmatprep.subr.mxu0 0.0
  %256 = vmatpush1.msra.mxu0 0.0
  %257 = vmatprep.subr.mxu0 0.0
  %258 = vmatpush1.msra.mxu0 0.0
  %259 = vmatprep.subr.mxu0 0.0
  %260 = vmatpush1.msra.mxu0 0.0
  %261 = vmatprep.subr.mxu0 0.0
  %262 = vmatpush1.msra.mxu0 0.0
  %263 = vmatprep.subr.mxu0 0.0
  %264 = vmatpush1.msra.mxu0 0.0
  %265 = vmatprep.subr.mxu0 0.0
  %266 = vmatpush1.msra.mxu0 0.0
  %267 = vmatprep.subr.mxu0 0.0
  %268 = vmatpush1.msra.mxu0 0.0
  %269 = vmatprep.subr.mxu0 0.0
  %270 = vmatpush1.msra.mxu0 0.0
  %271 = vmatprep.subr.mxu0 0.0
  %272 = vmatpush1.msra.mxu0 0.0
  %273 = vmatprep.subr.mxu0 0.0
  %274 = vmatpush1.msra.mxu0 0.0
  %275 = vmatprep.subr.mxu0 0.0
  %276 = vmatpush1.msra.mxu0 0.0
  %277 = vmatprep.subr.mxu0 0.0
  %278 = vmatpush1.msra.mxu0 0.0
  %279 = vmatprep.subr.mxu0 0.0
  %280 = vmatpush1.msra.mxu0 0.0
  %281 = vmatprep.subr.mxu0 0.0
  %282 = vmatpush1.msra.mxu0 0.0
  %283 = vmatprep.subr.mxu0 0.0
  %284 = vmatpush1.msra.mxu0 0.0
  %285 = vmatprep.subr.mxu0 0.0
  %286 = vmatpush1.msra.mxu0 0.0
  %287 = vmatprep.subr.mxu0 0.0
  %288 = vmatpush1.msra.mxu0 0.0
  %289 = vmatprep.subr.mxu0 0.0
  %290 = vmatpush1.msra.mxu0 0.0
  %291 = vmatprep.subr.mxu0 0.0
  %292 = vmatpush1.msra.mxu0 0.0
  %293 = vmatprep.subr.mxu0 0.0
  %294 = vmatpush1.msra.mxu0 0.0
  %295 = vmatprep.subr.mxu0 0.0
  %296 = vmatpush1.msra.mxu0 0.0
  %297 = vmatprep.subr.mxu0 0.0
  %298 = vmatpush1.msra.mxu0 0.0
  %299 = vmatprep.subr.mxu0 0.0
  %300 = vmatpush1.msra.mxu0 0.0
  %301 = vmatprep.subr.mxu0 0.0
  %302 = vmatpush1.msra.mxu0 0.0
  %303 = vmatprep.subr.mxu0 0.0
  %304 = vmatpush1.msra.mxu0 0.0
  %305 = vmatprep.subr.mxu0 0.0
  %306 = vmatpush1.msra.mxu0 0.0
  %307 = vmatprep.subr.mxu0 0.0
  %308 = vmatpush1.msra.mxu0 0.0
  %309 = vmatprep.subr.mxu0 0.0
  %310 = vmatpush1.msra.mxu0 0.0
  %311 = vmatprep.subr.mxu0 0.0
  %312 = vmatpush1.msra.mxu0 0.0
  %313 = vmatprep.subr.mxu0 0.0
  %314 = vmatpush1.msra.mxu0 0.0
  %315 = vmatprep.mubr.f32.mxu0 0.0
  %316 = vmatmul.mubr.f32.gmra.mrb[0].mxu0 %v249
  %v317 = vpop.f32.mrb[0].mxu0
  %v318 = vadd.f32 0.0, %v317
  %v319 = vpop.f32.mrb[0].mxu0
  %v320 = vadd.f32 0.0, %v319
  %321 = vdwg.mxu0
  %322 = vmatprep.subr.mxu0 %v243
  %323 = vmatpush1.msra.mxu0 %v242
  %324 = vmatprep.subr.mxu0 %v247
  %325 = vmatpush1.msra.mxu0 %v246
  %326 = vmatprep.subr.mxu0 0.0
  %327 = vmatpush1.msra.mxu0 0.0
  %328 = vmatprep.subr.mxu0 0.0
  %329 = vmatpush1.msra.mxu0 0.0
  %330 = vmatprep.subr.mxu0 0.0
  %331 = vmatpush1.msra.mxu0 0.0
  %332 = vmatprep.subr.mxu0 0.0
  %333 = vmatpush1.msra.mxu0 0.0
  %334 = vmatprep.subr.mxu0 0.0
  %335 = vmatpush1.msra.mxu0 0.0
  %336 = vmatprep.subr.mxu0 0.0
  %337 = vmatpush1.msra.mxu0 0.0
  %338 = vmatprep.subr.mxu0 0.0
  %339 = vmatpush1.msra.mxu0 0.0
  %340 = vmatprep.subr.mxu0 0.0
  %341 = vmatpush1.msra.mxu0 0.0
  %342 = vmatprep.subr.mxu0 0.0
  %343 = vmatpush1.msra.mxu0 0.0
  %344 = vmatprep.subr.mxu0 0.0
  %345 = vmatpush1.msra.mxu0 0.0
  %346 = vmatprep.subr.mxu0 0.0
  %347 = vmatpush1.msra.mxu0 0.0
  %348 = vmatprep.subr.mxu0 0.0
  %349 = vmatpush1.msra.mxu0 0.0
  %350 = vmatprep.subr.mxu0 0.0
  %351 = vmatpush1.msra.mxu0 0.0
  %352 = vmatprep.subr.mxu0 0.0
  %353 = vmatpush1.msra.mxu0 0.0
  %354 = vmatprep.subr.mxu0 0.0
  %355 = vmatpush1.msra.mxu0 0.0
  %356 = vmatprep.subr.mxu0 0.0
  %357 = vmatpush1.msra.mxu0 0.0
  %358 = vmatprep.subr.mxu0 0.0
  %359 = vmatpush1.msra.mxu0 0.0
  %360 = vmatprep.subr.mxu0 0.0
  %361 = vmatpush1.msra.mxu0 0.0
  %362 = vmatprep.subr.mxu0 0.0
  %363 = vmatpush1.msra.mxu0 0.0
  %364 = vmatprep.subr.mxu0 0.0
  %365 = vmatpush1.msra.mxu0 0.0
  %366 = vmatprep.subr.mxu0 0.0
  %367 = vmatpush1.msra.mxu0 0.0
  %368 = vmatprep.subr.mxu0 0.0
  %369 = vmatpush1.msra.mxu0 0.0
  %370 = vmatprep.subr.mxu0 0.0
  %371 = vmatpush1.msra.mxu0 0.0
  %372 = vmatprep.subr.mxu0 0.0
  %373 = vmatpush1.msra.mxu0 0.0
  %374 = vmatprep.subr.mxu0 0.0
  %375 = vmatpush1.msra.mxu0 0.0
  %376 = vmatprep.subr.mxu0 0.0
  %377 = vmatpush1.msra.mxu0 0.0
  %378 = vmatprep.subr.mxu0 0.0
  %379 = vmatpush1.msra.mxu0 0.0
  %380 = vmatprep.subr.mxu0 0.0
  %381 = vmatpush1.msra.mxu0 0.0
  %382 = vmatprep.subr.mxu0 0.0
  %383 = vmatpush1.msra.mxu0 0.0
  %384 = vmatprep.subr.mxu0 0.0
  %385 = vmatpush1.msra.mxu0 0.0
  %386 = vmatprep.mubr.f32.mxu0 0.0
  %387 = vmatmul.mubr.f32.gmra.mrb[0].mxu0 %v249
  %v388 = vpop.f32.mrb[0].mxu0
  %v389 = vadd.f32 0.0, %v388
  %v390 = vpop.f32.mrb[0].mxu0
  %v391 = vadd.f32 0.0, %v390
  %392 = vdwg.mxu0
  %394 = vrot.lane.b32.xlu0 %v318, 96
  %v395 = vpop.permute.xlu0 %394
  %v397 = vadd.f32 %v318, %v395
  %398 = vrot.lane.b32.xlu0 %v318, 64
  %v399 = vpop.permute.xlu0 %398
  %v401 = vadd.f32 %v397, %v399
  %402 = vrot.lane.b32.xlu0 %v318, 32
  %v403 = vpop.permute.xlu0 %402
  %v405 = vadd.f32 %v401, %v403
  %v406 = vadd.f32 %v405, %v320
  %408 = vrot.lane.b32.xlu0 %v320, 96
  %v409 = vpop.permute.xlu0 %408
  %v411 = vadd.f32 %v406, %v409
  %412 = vrot.lane.b32.xlu0 %v320, 64
  %v413 = vpop.permute.xlu0 %412
  %v415 = vadd.f32 %v411, %v413
  %416 = vrot.lane.b32.xlu0 %v320, 32
  %v417 = vpop.permute.xlu0 %416
  %v419 = vadd.f32 %v415, %v417
  %v420 = vadd.f32 %v419, %v389
  %422 = vrot.lane.b32.xlu0 %v389, 96
  %v423 = vpop.permute.xlu0 %422
  %v425 = vadd.f32 %v420, %v423
  %426 = vrot.lane.b32.xlu0 %v389, 64
  %v427 = vpop.permute.xlu0 %426
  %v429 = vadd.f32 %v425, %v427
  %430 = vrot.lane.b32.xlu0 %v389, 32
  %v431 = vpop.permute.xlu0 %430
  %v433 = vadd.f32 %v429, %v431
  %v434 = vadd.f32 %v433, %v391
  %436 = vrot.lane.b32.xlu0 %v391, 96
  %v437 = vpop.permute.xlu0 %436
  %v439 = vadd.f32 %v434, %v437
  %440 = vrot.lane.b32.xlu0 %v391, 64
  %v441 = vpop.permute.xlu0 %440
  %v443 = vadd.f32 %v439, %v441
  %444 = vrot.lane.b32.xlu0 %v391, 32
  %v445 = vpop.permute.xlu0 %444
  %v447 = vadd.f32 %v443, %v445
  %vm448 = vcmask 254976
  %v449 = vsel %vm448, %v447, 0.0
  %v450 = vrot.slane %v449, 4
  %v451 = vadd.f32 %v449, %v450
  %v452 = vrot.slane %v451, 2
  %v453 = vadd.f32 %v451, %v452
  %v454 = vrot.slane %v453, 1
  %v455 = vadd.f32 %v453, %v454
  %v456 = vmul.f32 %v455, 0.03125
  %v457 = vsub.f32 %v318, %v456
  %459 = vrot.lane.b32.xlu0 %v456, 32
  %v460 = vpop.permute.xlu0 %459
  %v462 = vsub.f32 %v318, %v460
  %463 = vrot.lane.b32.xlu0 %v456, 64
  %v464 = vpop.permute.xlu0 %463
  %v466 = vsub.f32 %v318, %v464
  %467 = vrot.lane.b32.xlu0 %v456, 96
  %v468 = vpop.permute.xlu0 %467
  %v470 = vsub.f32 %v318, %v468
  %v471 = vsub.f32 %v320, %v456
  %v472 = vsub.f32 %v320, %v460
  %v473 = vsub.f32 %v320, %v464
  %v474 = vsub.f32 %v320, %v468
  %v475 = vsub.f32 %v389, %v456
  %v476 = vsub.f32 %v389, %v460
  %v477 = vsub.f32 %v389, %v464
  %v478 = vsub.f32 %v389, %v468
  %v479 = vsub.f32 %v391, %v456
  %v480 = vsub.f32 %v391, %v460
  %v481 = vsub.f32 %v391, %v464
  %v482 = vsub.f32 %v391, %v468
  %v483 = vmul.f32 %v457, %v457
  %v484 = vmul.f32 %v462, %v462
  %486 = vrot.lane.b32.xlu0 %v484, 96
  %v487 = vpop.permute.xlu0 %486
  %v489 = vadd.f32 %v483, %v487
  %v490 = vmul.f32 %v466, %v466
  %492 = vrot.lane.b32.xlu0 %v490, 64
  %v493 = vpop.permute.xlu0 %492
  %v495 = vadd.f32 %v489, %v493
  %v496 = vmul.f32 %v470, %v470
  %498 = vrot.lane.b32.xlu0 %v496, 32
  %v499 = vpop.permute.xlu0 %498
  %v501 = vadd.f32 %v495, %v499
  %v502 = vmul.f32 %v471, %v471
  %v503 = vadd.f32 %v501, %v502
  %v504 = vmul.f32 %v472, %v472
  %506 = vrot.lane.b32.xlu0 %v504, 96
  %v507 = vpop.permute.xlu0 %506
  %v509 = vadd.f32 %v503, %v507
  %v510 = vmul.f32 %v473, %v473
  %512 = vrot.lane.b32.xlu0 %v510, 64
  %v513 = vpop.permute.xlu0 %512
  %v515 = vadd.f32 %v509, %v513
  %v516 = vmul.f32 %v474, %v474
  %518 = vrot.lane.b32.xlu0 %v516, 32
  %v519 = vpop.permute.xlu0 %518
  %v521 = vadd.f32 %v515, %v519
  %v522 = vmul.f32 %v475, %v475
  %v523 = vadd.f32 %v521, %v522
  %v524 = vmul.f32 %v476, %v476
  %526 = vrot.lane.b32.xlu0 %v524, 96
  %v527 = vpop.permute.xlu0 %526
  %v529 = vadd.f32 %v523, %v527
  %v530 = vmul.f32 %v477, %v477
  %532 = vrot.lane.b32.xlu0 %v530, 64
  %v533 = vpop.permute.xlu0 %532
  %v535 = vadd.f32 %v529, %v533
  %v536 = vmul.f32 %v478, %v478
  %538 = vrot.lane.b32.xlu0 %v536, 32
  %v539 = vpop.permute.xlu0 %538
  %v541 = vadd.f32 %v535, %v539
  %v542 = vmul.f32 %v479, %v479
  %v543 = vadd.f32 %v541, %v542
  %v544 = vmul.f32 %v480, %v480
  %546 = vrot.lane.b32.xlu0 %v544, 96
  %v547 = vpop.permute.xlu0 %546
  %v549 = vadd.f32 %v543, %v547
  %v550 = vmul.f32 %v481, %v481
  %552 = vrot.lane.b32.xlu0 %v550, 64
  %v553 = vpop.permute.xlu0 %552
  %v555 = vadd.f32 %v549, %v553
  %v556 = vmul.f32 %v482, %v482
  %558 = vrot.lane.b32.xlu0 %v556, 32
  %v559 = vpop.permute.xlu0 %558
  %v561 = vadd.f32 %v555, %v559
  %v562 = vsel %vm448, %v561, 0.0
  %v563 = vrot.slane %v562, 4
  %v564 = vadd.f32 %v562, %v563
  %v565 = vrot.slane %v564, 2
  %v566 = vadd.f32 %v564, %v565
  %v567 = vrot.slane %v566, 1
  %v568 = vadd.f32 %v566, %v567
  %v569 = vmul.f32 %v568, 0.03125
  %v570 = vadd.f32 %v569, 1e-05
  %v571 = vrsqrt.pop %v570
  %v572 = vmul.f32 %v136, %v571
  %v574 = vlaneseq
  %v575 = vshrl.u32 %v574, 7
  %v576 = vsub.s32 0, %v575
  %v577 = vrot.slane %v572, %v576
  %v579 = vmul.f32 %v457, %v577
  %v581 = vlaneseq
  %v582 = vshrl.u32 %v581, 7
  %v583 = vsub.s32 0, %v582
  %v584 = vrot.slane %v137, %v583
  %v586 = vadd.f32 %v579, %v584
  %v587 = vmax.f32 %v586, 0.0
  %s588 = scalar_lea.vmem [#allocation2], 32
  %vm589 = vcmask 253952
  %590 = vst.msk [vmem:[%s588 + $0x2] sm:$0x1] %vm589, %v587
  %s591 = scalar_lea.vmem [#allocation2], 208
  %vm592 = vcmask 254977
  %593 = vst.msk [vmem:[%s591 + $0x1] sm:$0x2] %vm592, %v587
  %594 = vrot.lane.b32.xlu0 %v577, 32
  %v595 = vpop.permute.xlu0 %594
  %v597 = vmul.f32 %v462, %v595
  %598 = vrot.lane.b32.xlu0 %v584, 32
  %v599 = vpop.permute.xlu0 %598
  %v601 = vadd.f32 %v597, %v599
  %v602 = vmax.f32 %v601, 0.0
  %604 = vrot.lane.b32.xlu0 %v602, 96
  %v605 = vpop.permute.xlu0 %604
  %607 = vst.msk [vmem:[%s588 + $0x4] sm:$0x1] %vm589, %v605
  %608 = vst.msk [vmem:[%s591 + $0x3] sm:$0x2] %vm592, %v605
  %609 = vrot.lane.b32.xlu0 %v577, 64
  %v610 = vpop.permute.xlu0 %609
  %v612 = vmul.f32 %v466, %v610
  %613 = vrot.lane.b32.xlu0 %v584, 64
  %v614 = vpop.permute.xlu0 %613
  %v616 = vadd.f32 %v612, %v614
  %v617 = vmax.f32 %v616, 0.0
  %619 = vrot.lane.b32.xlu0 %v617, 64
  %v620 = vpop.permute.xlu0 %619
  %622 = vst.msk [vmem:[%s588 + $0x6] sm:$0x1] %vm589, %v620
  %623 = vst.msk [vmem:[%s591 + $0x5] sm:$0x2] %vm592, %v620
  %624 = vrot.lane.b32.xlu0 %v577, 96
  %v625 = vpop.permute.xlu0 %624
  %v627 = vmul.f32 %v470, %v625
  %628 = vrot.lane.b32.xlu0 %v584, 96
  %v629 = vpop.permute.xlu0 %628
  %v631 = vadd.f32 %v627, %v629
  %v632 = vmax.f32 %v631, 0.0
  %634 = vrot.lane.b32.xlu0 %v632, 32
  %v635 = vpop.permute.xlu0 %634
  %637 = vst.msk [vmem:[%s588 + $0x8] sm:$0x1] %vm589, %v635
  %638 = vst.msk [vmem:[%s591 + $0x7] sm:$0x2] %vm592, %v635
  %v639 = vmul.f32 %v471, %v577
  %v640 = vadd.f32 %v639, %v584
  %v641 = vmax.f32 %v640, 0.0
  %s642 = scalar_lea.vmem [#allocation2], 64
  %643 = vst.msk [vmem:[%s642 + $0x2] sm:$0x1] %vm589, %v641
  %s644 = scalar_lea.vmem [#allocation2], 240
  %645 = vst.msk [vmem:[%s644 + $0x1] sm:$0x2] %vm592, %v641
  %v646 = vmul.f32 %v472, %v595
  %v647 = vadd.f32 %v646, %v599
  %v648 = vmax.f32 %v647, 0.0
  %650 = vrot.lane.b32.xlu0 %v648, 96
  %v651 = vpop.permute.xlu0 %650
  %653 = vst.msk [vmem:[%s642 + $0x4] sm:$0x1] %vm589, %v651
  %654 = vst.msk [vmem:[%s644 + $0x3] sm:$0x2] %vm592, %v651
  %v655 = vmul.f32 %v473, %v610
  %v656 = vadd.f32 %v655, %v614
  %v657 = vmax.f32 %v656, 0.0
  %659 = vrot.lane.b32.xlu0 %v657, 64
  %v660 = vpop.permute.xlu0 %659
  %662 = vst.msk [vmem:[%s642 + $0x6] sm:$0x1] %vm589, %v660
  %663 = vst.msk [vmem:[%s644 + $0x5] sm:$0x2] %vm592, %v660
  %v664 = vmul.f32 %v474, %v625
  %v665 = vadd.f32 %v664, %v629
  %v666 = vmax.f32 %v665, 0.0
  %668 = vrot.lane.b32.xlu0 %v666, 32
  %v669 = vpop.permute.xlu0 %668
  %671 = vst.msk [vmem:[%s642 + $0x8] sm:$0x1] %vm589, %v669
  %672 = vst.msk [vmem:[%s644 + $0x7] sm:$0x2] %vm592, %v669
  %v673 = vmul.f32 %v475, %v577
  %v674 = vadd.f32 %v673, %v584
  %v675 = vmax.f32 %v674, 0.0
  %s676 = scalar_lea.vmem [#allocation2], 96
  %677 = vst.msk [vmem:[%s676 + $0x2] sm:$0x1] %vm589, %v675
  %s678 = scalar_lea.vmem [#allocation2], 272
  %679 = vst.msk [vmem:[%s678 + $0x1] sm:$0x2] %vm592, %v675
  %v680 = vmul.f32 %v476, %v595
  %v681 = vadd.f32 %v680, %v599
  %v682 = vmax.f32 %v681, 0.0
  %684 = vrot.lane.b32.xlu0 %v682, 96
  %v685 = vpop.permute.xlu0 %684
  %687 = vst.msk [vmem:[%s676 + $0x4] sm:$0x1] %vm589, %v685
  %688 = vst.msk [vmem:[%s678 + $0x3] sm:$0x2] %vm592, %v685
  %v689 = vmul.f32 %v477, %v610
  %v690 = vadd.f32 %v689, %v614
  %v691 = vmax.f32 %v690, 0.0
  %693 = vrot.lane.b32.xlu0 %v691, 64
  %v694 = vpop.permute.xlu0 %693
  %696 = vst.msk [vmem:[%s676 + $0x6] sm:$0x1] %vm589, %v694
  %697 = vst.msk [vmem:[%s678 + $0x5] sm:$0x2] %vm592, %v694
  %v698 = vmul.f32 %v478, %v625
  %v699 = vadd.f32 %v698, %v629
  %v700 = vmax.f32 %v699, 0.0
  %702 = vrot.lane.b32.xlu0 %v700, 32
  %v703 = vpop.permute.xlu0 %702
  %705 = vst.msk [vmem:[%s676 + $0x8] sm:$0x1] %vm589, %v703
  %706 = vst.msk [vmem:[%s678 + $0x7] sm:$0x2] %vm592, %v703
  %v707 = vmul.f32 %v479, %v577
  %v708 = vadd.f32 %v707, %v584
  %v709 = vmax.f32 %v708, 0.0
  %s710 = scalar_lea.vmem [#allocation2], 128
  %711 = vst.msk [vmem:[%s710 + $0x2] sm:$0x1] %vm589, %v709
  %s712 = scalar_lea.vmem [#allocation2], 304
  %713 = vst.msk [vmem:[%s712 + $0x1] sm:$0x2] %vm592, %v709
  %v714 = vmul.f32 %v480, %v595
  %v715 = vadd.f32 %v714, %v599
  %v716 = vmax.f32 %v715, 0.0
  %718 = vrot.lane.b32.xlu0 %v716, 96
  %v719 = vpop.permute.xlu0 %718
  %721 = vst.msk [vmem:[%s710 + $0x4] sm:$0x1] %vm589, %v719
  %722 = vst.msk [vmem:[%s712 + $0x3] sm:$0x2] %vm592, %v719
  %v723 = vmul.f32 %v481, %v610
  %v724 = vadd.f32 %v723, %v614
  %v725 = vmax.f32 %v724, 0.0
  %727 = vrot.lane.b32.xlu0 %v725, 64
  %v728 = vpop.permute.xlu0 %727
  %730 = vst.msk [vmem:[%s710 + $0x6] sm:$0x1] %vm589, %v728
  %731 = vst.msk [vmem:[%s712 + $0x5] sm:$0x2] %vm592, %v728
  %v732 = vmul.f32 %v482, %v625
  %v733 = vadd.f32 %v732, %v629
  %v734 = vmax.f32 %v733, 0.0
  %736 = vrot.lane.b32.xlu0 %v734, 32
  %v737 = vpop.permute.xlu0 %736
  %739 = vst.msk [vmem:[%s710 + $0x8] sm:$0x1] %vm589, %v737
  %740 = vst.msk [vmem:[%s712 + $0x7] sm:$0x2] %vm592, %v737
  %v741 = vld [vmem:[#allocation2] sm:$0xff]
  %v742 = vld [vmem:[#allocation2 + $0x8] sm:$0x7]
  %v743 = vld [vmem:[#allocation2 + $0x10] sm:$0xff]
  %v744 = vld [vmem:[#allocation2 + $0x18] sm:$0x7]
  %v745 = vld [vmem:[#allocation2 + $0x20] sm:$0xff]
  %v746 = vld [vmem:[#allocation2 + $0x28] sm:$0x7]
  %v747 = vld [vmem:[#allocation2 + $0x30] sm:$0xff]
  %v748 = vld [vmem:[#allocation2 + $0x38] sm:$0x7]
  %v749 = vld [vmem:[#allocation2 + $0x40] sm:$0xff]
  %v750 = vld [vmem:[#allocation2 + $0x48] sm:$0x7]
  %v751 = vld [vmem:[#allocation2 + $0x50] sm:$0xff]
  %v752 = vld [vmem:[#allocation2 + $0x58] sm:$0x7]
  %v753 = vld [vmem:[#allocation2 + $0x60] sm:$0xff]
  %v754 = vld [vmem:[#allocation2 + $0x68] sm:$0x7]
  %v755 = vld [vmem:[#allocation2 + $0x70] sm:$0xff]
  %v756 = vld [vmem:[#allocation2 + $0x78] sm:$0x7]
  %v757 = vld [vmem:[#allocation2 + $0x80] sm:$0xff]
  %v758 = vld [vmem:[#allocation2 + $0x88] sm:$0x7]
  %v759 = vld [vmem:[#allocation2 + $0x90] sm:$0xff]
  %v760 = vld [vmem:[#allocation2 + $0x98] sm:$0x7]
  %v761 = vld [vmem:[#allocation2 + $0xa0] sm:$0xff]
  %v762 = vld [vmem:[#allocation2 + $0xa8] sm:$0x7]
  %vm779 = vcmask 1046528
  %v780 = vrot.slane %v741, 1
  %v781 = vrot.slane %v742, 1
  %v782 = vsel %vm779, %v780, %v781
  %v783 = vrot.slane %v743, 1
  %v784 = vrot.slane %v744, 1
  %v785 = vsel %vm779, %v783, %v784
  %v786 = vrot.slane %v745, 1
  %v787 = vrot.slane %v746, 1
  %v788 = vsel %vm779, %v786, %v787
  %v789 = vrot.slane %v747, 1
  %v790 = vrot.slane %v748, 1
  %v791 = vsel %vm779, %v789, %v790
  %v792 = vrot.slane %v749, 1
  %v793 = vrot.slane %v750, 1
  %v794 = vsel %vm779, %v792, %v793
  %v795 = vrot.slane %v751, 1
  %v796 = vrot.slane %v752, 1
  %v797 = vsel %vm779, %v795, %v796
  %v798 = vrot.slane %v753, 1
  %v799 = vrot.slane %v754, 1
  %v800 = vsel %vm779, %v798, %v799
  %v801 = vrot.slane %v755, 1
  %v802 = vrot.slane %v756, 1
  %v803 = vsel %vm779, %v801, %v802
  %vm804 = vcmask 1045504
  %v805 = vrot.slane %v741, 2
  %v806 = vrot.slane %v742, 2
  %v807 = vsel %vm804, %v805, %v806
  %v808 = vrot.slane %v743, 2
  %v809 = vrot.slane %v744, 2
  %v810 = vsel %vm804, %v808, %v809
  %v811 = vrot.slane %v745, 2
  %v812 = vrot.slane %v746, 2
  %v813 = vsel %vm804, %v811, %v812
  %v814 = vrot.slane %v747, 2
  %v815 = vrot.slane %v748, 2
  %v816 = vsel %vm804, %v814, %v815
  %v817 = vrot.slane %v749, 2
  %v818 = vrot.slane %v750, 2
  %v819 = vsel %vm804, %v817, %v818
  %v820 = vrot.slane %v751, 2
  %v821 = vrot.slane %v752, 2
  %v822 = vsel %vm804, %v820, %v821
  %v823 = vrot.slane %v753, 2
  %v824 = vrot.slane %v754, 2
  %v825 = vsel %vm804, %v823, %v824
  %v826 = vrot.slane %v755, 2
  %v827 = vrot.slane %v756, 2
  %v828 = vsel %vm804, %v826, %v827
  %vm829 = vcmask 1044480
  %v830 = vrot.slane %v741, 3
  %v831 = vrot.slane %v742, 3
  %v832 = vsel %vm829, %v830, %v831
  %v833 = vrot.slane %v743, 3
  %v834 = vrot.slane %v744, 3
  %v835 = vsel %vm829, %v833, %v834
  %v836 = vrot.slane %v745, 3
  %v837 = vrot.slane %v746, 3
  %v838 = vsel %vm829, %v836, %v837
  %v839 = vrot.slane %v747, 3
  %v840 = vrot.slane %v748, 3
  %v841 = vsel %vm829, %v839, %v840
  %v842 = vrot.slane %v749, 3
  %v843 = vrot.slane %v750, 3
  %v844 = vsel %vm829, %v842, %v843
  %v845 = vrot.slane %v751, 3
  %v846 = vrot.slane %v752, 3
  %v847 = vsel %vm829, %v845, %v846
  %v848 = vrot.slane %v753, 3
  %v849 = vrot.slane %v754, 3
  %v850 = vsel %vm829, %v848, %v849
  %v851 = vrot.slane %v755, 3
  %v852 = vrot.slane %v756, 3
  %v853 = vsel %vm829, %v851, %v852
  %v856 = vrot.slane %v757, 1
  %v857 = vrot.slane %v758, 1
  %v858 = vsel %vm779, %v856, %v857
  %v859 = vrot.slane %v757, 2
  %v860 = vrot.slane %v758, 2
  %v861 = vsel %vm804, %v859, %v860
  %v862 = vrot.slane %v757, 3
  %v863 = vrot.slane %v758, 3
  %v864 = vsel %vm829, %v862, %v863
  %v867 = vrot.slane %v759, 1
  %v868 = vrot.slane %v760, 1
  %v869 = vsel %vm779, %v867, %v868
  %v870 = vrot.slane %v759, 2
  %v871 = vrot.slane %v760, 2
  %v872 = vsel %vm804, %v870, %v871
  %v873 = vrot.slane %v759, 3
  %v874 = vrot.slane %v760, 3
  %v875 = vsel %vm829, %v873, %v874
  %v878 = vrot.slane %v761, 1
  %v879 = vrot.slane %v762, 1
  %v880 = vsel %vm779, %v878, %v879
  %v881 = vrot.slane %v761, 2
  %v882 = vrot.slane %v762, 2
  %v883 = vsel %vm804, %v881, %v882
  %v884 = vrot.slane %v761, 3
  %v885 = vrot.slane %v762, 3
  %v886 = vsel %vm829, %v884, %v885
  %887 = vrot.lane.b32.xlu0 %v782, 32
  %v888 = vpop.permute.xlu0 %887
  %889 = vrot.lane.b32.xlu0 %v785, 32
  %v890 = vpop.permute.xlu0 %889
  %891 = vrot.lane.b32.xlu0 %v788, 32
  %v892 = vpop.permute.xlu0 %891
  %893 = vrot.lane.b32.xlu0 %v791, 32
  %v894 = vpop.permute.xlu0 %893
  %895 = vrot.lane.b32.xlu0 %v794, 32
  %v896 = vpop.permute.xlu0 %895
  %897 = vrot.lane.b32.xlu0 %v797, 32
  %v898 = vpop.permute.xlu0 %897
  %899 = vrot.lane.b32.xlu0 %v800, 32
  %v900 = vpop.permute.xlu0 %899
  %901 = vrot.lane.b32.xlu0 %v803, 32
  %v902 = vpop.permute.xlu0 %901
  %911 = vrot.lane.b32.xlu0 %v807, 64
  %v912 = vpop.permute.xlu0 %911
  %913 = vrot.lane.b32.xlu0 %v810, 64
  %v914 = vpop.permute.xlu0 %913
  %915 = vrot.lane.b32.xlu0 %v813, 64
  %v916 = vpop.permute.xlu0 %915
  %917 = vrot.lane.b32.xlu0 %v816, 64
  %v918 = vpop.permute.xlu0 %917
  %919 = vrot.lane.b32.xlu0 %v819, 64
  %v920 = vpop.permute.xlu0 %919
  %921 = vrot.lane.b32.xlu0 %v822, 64
  %v922 = vpop.permute.xlu0 %921
  %923 = vrot.lane.b32.xlu0 %v825, 64
  %v924 = vpop.permute.xlu0 %923
  %925 = vrot.lane.b32.xlu0 %v828, 64
  %v926 = vpop.permute.xlu0 %925
  %935 = vrot.lane.b32.xlu0 %v832, 96
  %v936 = vpop.permute.xlu0 %935
  %937 = vrot.lane.b32.xlu0 %v835, 96
  %v938 = vpop.permute.xlu0 %937
  %939 = vrot.lane.b32.xlu0 %v838, 96
  %v940 = vpop.permute.xlu0 %939
  %941 = vrot.lane.b32.xlu0 %v841, 96
  %v942 = vpop.permute.xlu0 %941
  %943 = vrot.lane.b32.xlu0 %v844, 96
  %v944 = vpop.permute.xlu0 %943
  %945 = vrot.lane.b32.xlu0 %v847, 96
  %v946 = vpop.permute.xlu0 %945
  %947 = vrot.lane.b32.xlu0 %v850, 96
  %v948 = vpop.permute.xlu0 %947
  %949 = vrot.lane.b32.xlu0 %v853, 96
  %v950 = vpop.permute.xlu0 %949
  %959 = vrot.lane.b32.xlu0 %v858, 32
  %v960 = vpop.permute.xlu0 %959
  %962 = vrot.lane.b32.xlu0 %v861, 64
  %v963 = vpop.permute.xlu0 %962
  %965 = vrot.lane.b32.xlu0 %v864, 96
  %v966 = vpop.permute.xlu0 %965
  %968 = vrot.lane.b32.xlu0 %v869, 32
  %v969 = vpop.permute.xlu0 %968
  %971 = vrot.lane.b32.xlu0 %v872, 64
  %v972 = vpop.permute.xlu0 %971
  %974 = vrot.lane.b32.xlu0 %v875, 96
  %v975 = vpop.permute.xlu0 %974
  %977 = vrot.lane.b32.xlu0 %v880, 32
  %v978 = vpop.permute.xlu0 %977
  %980 = vrot.lane.b32.xlu0 %v883, 64
  %v981 = vpop.permute.xlu0 %980
  %983 = vrot.lane.b32.xlu0 %v886, 96
  %v984 = vpop.permute.xlu0 %983
  %v986 = vsel %vm29, %v741, %v888
  %v987 = vsel %vm29, %v743, %v890
  %v988 = vsel %vm29, %v745, %v892
  %v989 = vsel %vm29, %v747, %v894
  %v990 = vsel %vm29, %v749, %v896
  %v991 = vsel %vm29, %v751, %v898
  %v992 = vsel %vm29, %v753, %v900
  %v993 = vsel %vm29, %v755, %v902
  %vm994 = vcmask 523264
  %v995 = vsel %vm994, %v986, %v912
  %v996 = vsel %vm994, %v987, %v914
  %v997 = vsel %vm994, %v988, %v916
  %v998 = vsel %vm994, %v989, %v918
  %v999 = vsel %vm994, %v990, %v920
  %v1000 = vsel %vm994, %v991, %v922
  %v1001 = vsel %vm994, %v992, %v924
  %v1002 = vsel %vm994, %v993, %v926
  %vm1003 = vcmask 785408
  %v1004 = vsel %vm1003, %v995, %v936
  %v1005 = vsel %vm1003, %v996, %v938
  %v1006 = vsel %vm1003, %v997, %v940
  %v1007 = vsel %vm1003, %v998, %v942
  %v1008 = vsel %vm1003, %v999, %v944
  %v1009 = vsel %vm1003, %v1000, %v946
  %v1010 = vsel %vm1003, %v1001, %v948
  %v1011 = vsel %vm1003, %v1002, %v950
  %v1012 = vsel %vm29, %v757, %v960
  %v1013 = vsel %vm994, %v1012, %v963
  %v1014 = vsel %vm1003, %v1013, %v966
  %v1015 = vsel %vm29, %v759, %v969
  %v1016 = vsel %vm994, %v1015, %v972
  %v1017 = vsel %vm1003, %v1016, %v975
  %v1018 = vsel %vm29, %v761, %v978
  %v1019 = vsel %vm994, %v1018, %v981
  %v1020 = vsel %vm1003, %v1019, %v984
  %1021 = vmatprep.subr.mxu0 0.0
  %1022 = vmatpush1.msra.mxu0 %v140
  %1023 = vmatprep.subr.mxu0 0.0
  %1024 = vmatpush1.msra.mxu0 %v141
  %1025 = vmatprep.subr.mxu0 0.0
  %1026 = vmatpush1.msra.mxu0 %v142
  %1027 = vmatprep.subr.mxu0 0.0
  %1028 = vmatpush1.msra.mxu0 %v143
  %1029 = vmatprep.subr.mxu0 0.0
  %1030 = vmatpush1.msra.mxu0 %v144
  %1031 = vmatprep.subr.mxu0 0.0
  %1032 = vmatpush1.msra.mxu0 %v145
  %1033 = vmatprep.subr.mxu0 0.0
  %1034 = vmatpush1.msra.mxu0 %v146
  %1035 = vmatprep.subr.mxu0 0.0
  %1036 = vmatpush1.msra.mxu0 %v147
  %1037 = vmatprep.subr.mxu0 0.0
  %1038 = vmatpush1.msra.mxu0 %v148
  %1039 = vmatprep.subr.mxu0 0.0
  %1040 = vmatpush1.msra.mxu0 %v149
  %1041 = vmatprep.subr.mxu0 0.0
  %1042 = vmatpush1.msra.mxu0 %v150
  %1043 = vmatprep.subr.mxu0 0.0
  %1044 = vmatpush1.msra.mxu0 %v151
  %1045 = vmatprep.subr.mxu0 0.0
  %1046 = vmatpush1.msra.mxu0 %v152
  %1047 = vmatprep.subr.mxu0 0.0
  %1048 = vmatpush1.msra.mxu0 %v153
  %1049 = vmatprep.subr.mxu0 0.0
  %1050 = vmatpush1.msra.mxu0 %v154
  %1051 = vmatprep.subr.mxu0 0.0
  %1052 = vmatpush1.msra.mxu0 %v155
  %1053 = vmatprep.subr.mxu0 0.0
  %1054 = vmatpush1.msra.mxu0 %v156
  %1055 = vmatprep.subr.mxu0 0.0
  %1056 = vmatpush1.msra.mxu0 %v157
  %1057 = vmatprep.subr.mxu0 0.0
  %1058 = vmatpush1.msra.mxu0 %v158
  %1059 = vmatprep.subr.mxu0 0.0
  %1060 = vmatpush1.msra.mxu0 %v159
  %1061 = vmatprep.subr.mxu0 0.0
  %1062 = vmatpush1.msra.mxu0 %v160
  %1063 = vmatprep.subr.mxu0 0.0
  %1064 = vmatpush1.msra.mxu0 %v161
  %1065 = vmatprep.subr.mxu0 0.0
  %1066 = vmatpush1.msra.mxu0 %v162
  %1067 = vmatprep.subr.mxu0 0.0
  %1068 = vmatpush1.msra.mxu0 %v163
  %1069 = vmatprep.subr.mxu0 0.0
  %1070 = vmatpush1.msra.mxu0 %v164
  %1071 = vmatprep.subr.mxu0 0.0
  %1072 = vmatpush1.msra.mxu0 %v165
  %1073 = vmatprep.subr.mxu0 0.0
  %1074 = vmatpush1.msra.mxu0 %v166
  %1075 = vmatprep.subr.mxu0 0.0
  %1076 = vmatpush1.msra.mxu0 %v167
  %1077 = vmatprep.subr.mxu0 0.0
  %1078 = vmatpush1.msra.mxu0 %v168
  %1079 = vmatprep.subr.mxu0 0.0
  %1080 = vmatpush1.msra.mxu0 %v169
  %1081 = vmatprep.subr.mxu0 0.0
  %1082 = vmatpush1.msra.mxu0 %v170
  %1083 = vmatprep.subr.mxu0 0.0
  %1084 = vmatpush1.msra.mxu0 %v171
  %1085 = vmatprep.mubr.f32.mxu0 %v1005
  %1086 = vmatmul.mubr.f32.gmra.mrb[0].mxu0 %v1004
  %v1087 = vpop.f32.mrb[0].mxu0
  %v1088 = vadd.f32 0.0, %v1087
  %v1089 = vpop.f32.mrb[0].mxu0
  %1090 = vmatprep.mubr.f32.mxu0 %v1006
  %1091 = vmatmul.mubr.f32.gmra.mrb[0].mxu0 %v1005
  %v1092 = vpop.f32.mrb[0].mxu0
  %v1093 = vadd.f32 0.0, %v1092
  %v1094 = vpop.f32.mrb[0].mxu0
  %1095 = vmatprep.mubr.f32.mxu0 %v1007
  %1096 = vmatmul.mubr.f32.gmra.mrb[0].mxu0 %v1006
  %v1097 = vpop.f32.mrb[0].mxu0
  %v1098 = vadd.f32 0.0, %v1097
  %v1099 = vpop.f32.mrb[0].mxu0
  %1100 = vmatprep.mubr.f32.mxu0 %v1008
  %1101 = vmatmul.mubr.f32.gmra.mrb[0].mxu0 %v1007
  %v1102 = vpop.f32.mrb[0].mxu0
  %v1103 = vadd.f32 0.0, %v1102
  %v1104 = vpop.f32.mrb[0].mxu0
  %1105 = vmatprep.mubr.f32.mxu0 %v1009
  %1106 = vmatmul.mubr.f32.gmra.mrb[0].mxu0 %v1008
  %v1107 = vpop.f32.mrb[0].mxu0
  %v1108 = vadd.f32 0.0, %v1107
  %v1109 = vpop.f32.mrb[0].mxu0
  %1110 = vmatprep.mubr.f32.mxu0 %v1010
  %1111 = vmatmul.mubr.f32.gmra.mrb[0].mxu0 %v1009
  %v1112 = vpop.f32.mrb[0].mxu0
  %v1113 = vadd.f32 0.0, %v1112
  %v1114 = vpop.f32.mrb[0].mxu0
  %1115 = vmatprep.mubr.f32.mxu0 %v1011
  %1116 = vmatmul.mubr.f32.gmra.mrb[0].mxu0 %v1010
  %v1117 = vpop.f32.mrb[0].mxu0
  %v1118 = vadd.f32 0.0, %v1117
  %v1119 = vpop.f32.mrb[0].mxu0
  %1120 = vmatprep.mubr.f32.mxu0 %v1014
  %1121 = vmatmul.mubr.f32.gmra.mrb[0].mxu0 %v1011
  %v1122 = vpop.f32.mrb[0].mxu0
  %v1123 = vadd.f32 0.0, %v1122
  %v1124 = vpop.f32.mrb[0].mxu0
  %1125 = vdwg.mxu0
  %1126 = vmatprep.subr.mxu0 0.0
  %1127 = vmatpush1.msra.mxu0 %v172
  %1128 = vmatprep.subr.mxu0 0.0
  %1129 = vmatpush1.msra.mxu0 %v173
  %1130 = vmatprep.subr.mxu0 0.0
  %1131 = vmatpush1.msra.mxu0 %v174
  %1132 = vmatprep.subr.mxu0 0.0
  %1133 = vmatpush1.msra.mxu0 %v175
  %1134 = vmatprep.subr.mxu0 0.0
  %1135 = vmatpush1.msra.mxu0 %v176
  %1136 = vmatprep.subr.mxu0 0.0
  %1137 = vmatpush1.msra.mxu0 %v177
  %1138 = vmatprep.subr.mxu0 0.0
  %1139 = vmatpush1.msra.mxu0 %v178
  %1140 = vmatprep.subr.mxu0 0.0
  %1141 = vmatpush1.msra.mxu0 %v179
  %1142 = vmatprep.subr.mxu0 0.0
  %1143 = vmatpush1.msra.mxu0 %v180
  %1144 = vmatprep.subr.mxu0 0.0
  %1145 = vmatpush1.msra.mxu0 %v181
  %1146 = vmatprep.subr.mxu0 0.0
  %1147 = vmatpush1.msra.mxu0 %v182
  %1148 = vmatprep.subr.mxu0 0.0
  %1149 = vmatpush1.msra.mxu0 %v183
  %1150 = vmatprep.subr.mxu0 0.0
  %1151 = vmatpush1.msra.mxu0 %v184
  %1152 = vmatprep.subr.mxu0 0.0
  %1153 = vmatpush1.msra.mxu0 %v185
  %1154 = vmatprep.subr.mxu0 0.0
  %1155 = vmatpush1.msra.mxu0 %v186
  %1156 = vmatprep.subr.mxu0 0.0
  %1157 = vmatpush1.msra.mxu0 %v187
  %1158 = vmatprep.subr.mxu0 0.0
  %1159 = vmatpush1.msra.mxu0 %v188
  %1160 = vmatprep.subr.mxu0 0.0
  %1161 = vmatpush1.msra.mxu0 %v189
  %1162 = vmatprep.subr.mxu0 0.0
  %1163 = vmatpush1.msra.mxu0 %v190
  %1164 = vmatprep.subr.mxu0 0.0
  %1165 = vmatpush1.msra.mxu0 %v191
  %1166 = vmatprep.subr.mxu0 0.0
  %1167 = vmatpush1.msra.mxu0 %v192
  %1168 = vmatprep.subr.mxu0 0.0
  %1169 = vmatpush1.msra.mxu0 %v193
  %1170 = vmatprep.subr.mxu0 0.0
  %1171 = vmatpush1.msra.mxu0 %v194
  %1172 = vmatprep.subr.mxu0 0.0
  %1173 = vmatpush1.msra.mxu0 %v195
  %1174 = vmatprep.subr.mxu0 0.0
  %1175 = vmatpush1.msra.mxu0 %v196
  %1176 = vmatprep.subr.mxu0 0.0
  %1177 = vmatpush1.msra.mxu0 %v197
  %1178 = vmatprep.subr.mxu0 0.0
  %1179 = vmatpush1.msra.mxu0 %v198
  %1180 = vmatprep.subr.mxu0 0.0
  %1181 = vmatpush1.msra.mxu0 %v199
  %1182 = vmatprep.subr.mxu0 0.0
  %1183 = vmatpush1.msra.mxu0 %v200
  %1184 = vmatprep.subr.mxu0 0.0
  %1185 = vmatpush1.msra.mxu0 %v201
  %1186 = vmatprep.subr.mxu0 0.0
  %1187 = vmatpush1.msra.mxu0 %v202
  %1188 = vmatprep.subr.mxu0 0.0
  %1189 = vmatpush1.msra.mxu0 %v203
  %1190 = vmatprep.mubr.f32.mxu0 %v1007
  %1191 = vmatmul.mubr.f32.gmra.mrb[0].mxu0 %v1006
  %v1192 = vpop.f32.mrb[0].mxu0
  %v1193 = vadd.f32 %v1088, %v1192
  %v1194 = vpop.f32.mrb[0].mxu0
  %1195 = vmatprep.mubr.f32.mxu0 %v1008
  %1196 = vmatmul.mubr.f32.gmra.mrb[0].mxu0 %v1007
  %v1197 = vpop.f32.mrb[0].mxu0
  %v1198 = vadd.f32 %v1093, %v1197
  %v1199 = vpop.f32.mrb[0].mxu0
  %1200 = vmatprep.mubr.f32.mxu0 %v1009
  %1201 = vmatmul.mubr.f32.gmra.mrb[0].mxu0 %v1008
  %v1202 = vpop.f32.mrb[0].mxu0
  %v1203 = vadd.f32 %v1098, %v1202
  %v1204 = vpop.f32.mrb[0].mxu0
  %1205 = vmatprep.mubr.f32.mxu0 %v1010
  %1206 = vmatmul.mubr.f32.gmra.mrb[0].mxu0 %v1009
  %v1207 = vpop.f32.mrb[0].mxu0
  %v1208 = vadd.f32 %v1103, %v1207
  %v1209 = vpop.f32.mrb[0].mxu0
  %1210 = vmatprep.mubr.f32.mxu0 %v1011
  %1211 = vmatmul.mubr.f32.gmra.mrb[0].mxu0 %v1010
  %v1212 = vpop.f32.mrb[0].mxu0
  %v1213 = vadd.f32 %v1108, %v1212
  %v1214 = vpop.f32.mrb[0].mxu0
  %1215 = vmatprep.mubr.f32.mxu0 %v1014
  %1216 = vmatmul.mubr.f32.gmra.mrb[0].mxu0 %v1011
  %v1217 = vpop.f32.mrb[0].mxu0
  %v1218 = vadd.f32 %v1113, %v1217
  %v1219 = vpop.f32.mrb[0].mxu0
  %1220 = vmatprep.mubr.f32.mxu0 %v1017
  %1221 = vmatmul.mubr.f32.gmra.mrb[0].mxu0 %v1014
  %v1222 = vpop.f32.mrb[0].mxu0
  %v1223 = vadd.f32 %v1118, %v1222
  %v1224 = vpop.f32.mrb[0].mxu0
  %1225 = vmatprep.mubr.f32.mxu0 %v1020
  %1226 = vmatmul.mubr.f32.gmra.mrb[0].mxu0 %v1017
  %v1227 = vpop.f32.mrb[0].mxu0
  %v1228 = vadd.f32 %v1123, %v1227
  %v1229 = vpop.f32.mrb[0].mxu0
  %1230 = vdwg.mxu0
  %s1231 = scalar_lea.vmem [#allocation2], 176
  %v1232 = vld [vmem:[%s1231] sm:$0xff]
  %v1233 = vld [vmem:[%s1231 + $0x8] sm:$0x7]
  %v1234 = vld [vmem:[%s1231 + $0x10] sm:$0xff]
  %v1235 = vld [vmem:[%s1231 + $0x18] sm:$0x7]
  %v1236 = vld [vmem:[%s1231 + $0x20] sm:$0xff]
  %v1237 = vld [vmem:[%s1231 + $0x28] sm:$0x7]
  %v1238 = vld [vmem:[%s1231 + $0x30] sm:$0xff]
  %v1239 = vld [vmem:[%s1231 + $0x38] sm:$0x7]
  %v1240 = vld [vmem:[%s1231 + $0x40] sm:$0xff]
  %v1241 = vld [vmem:[%s1231 + $0x48] sm:$0x7]
  %v1242 = vld [vmem:[%s1231 + $0x50] sm:$0xff]
  %v1243 = vld [vmem:[%s1231 + $0x58] sm:$0x7]
  %v1244 = vld [vmem:[%s1231 + $0x60] sm:$0xff]
  %v1245 = vld [vmem:[%s1231 + $0x68] sm:$0x7]
  %v1246 = vld [vmem:[%s1231 + $0x70] sm:$0xff]
  %v1247 = vld [vmem:[%s1231 + $0x78] sm:$0x7]
  %v1248 = vld [vmem:[%s1231 + $0x80] sm:$0xff]
  %v1249 = vld [vmem:[%s1231 + $0x88] sm:$0x7]
  %v1250 = vld [vmem:[%s1231 + $0x90] sm:$0xff]
  %v1251 = vld [vmem:[%s1231 + $0x98] sm:$0x7]
  %v1252 = vld [vmem:[%s1231 + $0xa0] sm:$0xff]
  %v1253 = vld [vmem:[%s1231 + $0xa8] sm:$0x7]
  %v1270 = vrot.slane %v1232, 1
  %v1271 = vrot.slane %v1233, 1
  %v1272 = vsel %vm779, %v1270, %v1271
  %v1273 = vrot.slane %v1234, 1
  %v1274 = vrot.slane %v1235, 1
  %v1275 = vsel %vm779, %v1273, %v1274
  %v1276 = vrot.slane %v1236, 1
  %v1277 = vrot.slane %v1237, 1
  %v1278 = vsel %vm779, %v1276, %v1277
  %v1279 = vrot.slane %v1238, 1
  %v1280 = vrot.slane %v1239, 1
  %v1281 = vsel %vm779, %v1279, %v1280
  %v1282 = vrot.slane %v1240, 1
  %v1283 = vrot.slane %v1241, 1
  %v1284 = vsel %vm779, %v1282, %v1283
  %v1285 = vrot.slane %v1242, 1
  %v1286 = vrot.slane %v1243, 1
  %v1287 = vsel %vm779, %v1285, %v1286
  %v1288 = vrot.slane %v1244, 1
  %v1289 = vrot.slane %v1245, 1
  %v1290 = vsel %vm779, %v1288, %v1289
  %v1291 = vrot.slane %v1246, 1
  %v1292 = vrot.slane %v1247, 1
  %v1293 = vsel %vm779, %v1291, %v1292
  %v1294 = vrot.slane %v1232, 2
  %v1295 = vrot.slane %v1233, 2
  %v1296 = vsel %vm804, %v1294, %v1295
  %v1297 = vrot.slane %v1234, 2
  %v1298 = vrot.slane %v1235, 2
  %v1299 = vsel %vm804, %v1297, %v1298
  %v1300 = vrot.slane %v1236, 2
  %v1301 = vrot.slane %v1237, 2
  %v1302 = vsel %vm804, %v1300, %v1301
  %v1303 = vrot.slane %v1238, 2
  %v1304 = vrot.slane %v1239, 2
  %v1305 = vsel %vm804, %v1303, %v1304
  %v1306 = vrot.slane %v1240, 2
  %v1307 = vrot.slane %v1241, 2
  %v1308 = vsel %vm804, %v1306, %v1307
  %v1309 = vrot.slane %v1242, 2
  %v1310 = vrot.slane %v1243, 2
  %v1311 = vsel %vm804, %v1309, %v1310
  %v1312 = vrot.slane %v1244, 2
  %v1313 = vrot.slane %v1245, 2
  %v1314 = vsel %vm804, %v1312, %v1313
  %v1315 = vrot.slane %v1246, 2
  %v1316 = vrot.slane %v1247, 2
  %v1317 = vsel %vm804, %v1315, %v1316
  %v1318 = vrot.slane %v1232, 3
  %v1319 = vrot.slane %v1233, 3
  %v1320 = vsel %vm829, %v1318, %v1319
  %v1321 = vrot.slane %v1234, 3
  %v1322 = vrot.slane %v1235, 3
  %v1323 = vsel %vm829, %v1321, %v1322
  %v1324 = vrot.slane %v1236, 3
  %v1325 = vrot.slane %v1237, 3
  %v1326 = vsel %vm829, %v1324, %v1325
  %v1327 = vrot.slane %v1238, 3
  %v1328 = vrot.slane %v1239, 3
  %v1329 = vsel %vm829, %v1327, %v1328
  %v1330 = vrot.slane %v1240, 3
  %v1331 = vrot.slane %v1241, 3
  %v1332 = vsel %vm829, %v1330, %v1331
  %v1333 = vrot.slane %v1242, 3
  %v1334 = vrot.slane %v1243, 3
  %v1335 = vsel %vm829, %v1333, %v1334
  %v1336 = vrot.slane %v1244, 3
  %v1337 = vrot.slane %v1245, 3
  %v1338 = vsel %vm829, %v1336, %v1337
  %v1339 = vrot.slane %v1246, 3
  %v1340 = vrot.slane %v1247, 3
  %v1341 = vsel %vm829, %v1339, %v1340
  %v1344 = vrot.slane %v1248, 1
  %v1345 = vrot.slane %v1249, 1
  %v1346 = vsel %vm779, %v1344, %v1345
  %v1347 = vrot.slane %v1248, 2
  %v1348 = vrot.slane %v1249, 2
  %v1349 = vsel %vm804, %v1347, %v1348
  %v1350 = vrot.slane %v1248, 3
  %v1351 = vrot.slane %v1249, 3
  %v1352 = vsel %vm829, %v1350, %v1351
  %v1355 = vrot.slane %v1250, 1
  %v1356 = vrot.slane %v1251, 1
  %v1357 = vsel %vm779, %v1355, %v1356
  %v1358 = vrot.slane %v1250, 2
  %v1359 = vrot.slane %v1251, 2
  %v1360 = vsel %vm804, %v1358, %v1359
  %v1361 = vrot.slane %v1250, 3
  %v1362 = vrot.slane %v1251, 3
  %v1363 = vsel %vm829, %v1361, %v1362
  %v1366 = vrot.slane %v1252, 1
  %v1367 = vrot.slane %v1253, 1
  %v1368 = vsel %vm779, %v1366, %v1367
  %v1369 = vrot.slane %v1252, 2
  %v1370 = vrot.slane %v1253, 2
  %v1371 = vsel %vm804, %v1369, %v1370
  %v1372 = vrot.slane %v1252, 3
  %v1373 = vrot.slane %v1253, 3
  %v1374 = vsel %vm829, %v1372, %v1373
  %1375 = vrot.lane.b32.xlu0 %v1272, 32
  %v1376 = vpop.permute.xlu0 %1375
  %1377 = vrot.lane.b32.xlu0 %v1275, 32
  %v1378 = vpop.permute.xlu0 %1377
  %1379 = vrot.lane.b32.xlu0 %v1278, 32
  %v1380 = vpop.permute.xlu0 %1379
  %1381 = vrot.lane.b32.xlu0 %v1281, 32
  %v1382 = vpop.permute.xlu0 %1381
  %1383 = vrot.lane.b32.xlu0 %v1284, 32
  %v1384 = vpop.permute.xlu0 %1383
  %1385 = vrot.lane.b32.xlu0 %v1287, 32
  %v1386 = vpop.permute.xlu0 %1385
  %1387 = vrot.lane.b32.xlu0 %v1290, 32
  %v1388 = vpop.permute.xlu0 %1387
  %1389 = vrot.lane.b32.xlu0 %v1293, 32
  %v1390 = vpop.permute.xlu0 %1389
  %1399 = vrot.lane.b32.xlu0 %v1296, 64
  %v1400 = vpop.permute.xlu0 %1399
  %1401 = vrot.lane.b32.xlu0 %v1299, 64
  %v1402 = vpop.permute.xlu0 %1401
  %1403 = vrot.lane.b32.xlu0 %v1302, 64
  %v1404 = vpop.permute.xlu0 %1403
  %1405 = vrot.lane.b32.xlu0 %v1305, 64
  %v1406 = vpop.permute.xlu0 %1405
  %1407 = vrot.lane.b32.xlu0 %v1308, 64
  %v1408 = vpop.permute.xlu0 %1407
  %1409 = vrot.lane.b32.xlu0 %v1311, 64
  %v1410 = vpop.permute.xlu0 %1409
  %1411 = vrot.lane.b32.xlu0 %v1314, 64
  %v1412 = vpop.permute.xlu0 %1411
  %1413 = vrot.lane.b32.xlu0 %v1317, 64
  %v1414 = vpop.permute.xlu0 %1413
  %1423 = vrot.lane.b32.xlu0 %v1320, 96
  %v1424 = vpop.permute.xlu0 %1423
  %1425 = vrot.lane.b32.xlu0 %v1323, 96
  %v1426 = vpop.permute.xlu0 %1425
  %1427 = vrot.lane.b32.xlu0 %v1326, 96
  %v1428 = vpop.permute.xlu0 %1427
  %1429 = vrot.lane.b32.xlu0 %v1329, 96
  %v1430 = vpop.permute.xlu0 %1429
  %1431 = vrot.lane.b32.xlu0 %v1332, 96
  %v1432 = vpop.permute.xlu0 %1431
  %1433 = vrot.lane.b32.xlu0 %v1335, 96
  %v1434 = vpop.permute.xlu0 %1433
  %1435 = vrot.lane.b32.xlu0 %v1338, 96
  %v1436 = vpop.permute.xlu0 %1435
  %1437 = vrot.lane.b32.xlu0 %v1341, 96
  %v1438 = vpop.permute.xlu0 %1437
  %1447 = vrot.lane.b32.xlu0 %v1346, 32
  %v1448 = vpop.permute.xlu0 %1447
  %1450 = vrot.lane.b32.xlu0 %v1349, 64
  %v1451 = vpop.permute.xlu0 %1450
  %1453 = vrot.lane.b32.xlu0 %v1352, 96
  %v1454 = vpop.permute.xlu0 %1453
  %1456 = vrot.lane.b32.xlu0 %v1357, 32
  %v1457 = vpop.permute.xlu0 %1456
  %1459 = vrot.lane.b32.xlu0 %v1360, 64
  %v1460 = vpop.permute.xlu0 %1459
  %1462 = vrot.lane.b32.xlu0 %v1363, 96
  %v1463 = vpop.permute.xlu0 %1462
  %1465 = vrot.lane.b32.xlu0 %v1368, 32
  %v1466 = vpop.permute.xlu0 %1465
  %1468 = vrot.lane.b32.xlu0 %v1371, 64
  %v1469 = vpop.permute.xlu0 %1468
  %1471 = vrot.lane.b32.xlu0 %v1374, 96
  %v1472 = vpop.permute.xlu0 %1471
  %v1474 = vsel %vm29, %v1232, %v1376
  %v1475 = vsel %vm29, %v1234, %v1378
  %v1476 = vsel %vm29, %v1236, %v1380
  %v1477 = vsel %vm29, %v1238, %v1382
  %v1478 = vsel %vm29, %v1240, %v1384
  %v1479 = vsel %vm29, %v1242, %v1386
  %v1480 = vsel %vm29, %v1244, %v1388
  %v1481 = vsel %vm29, %v1246, %v1390
  %v1482 = vsel %vm994, %v1474, %v1400
  %v1483 = vsel %vm994, %v1475, %v1402
  %v1484 = vsel %vm994, %v1476, %v1404
  %v1485 = vsel %vm994, %v1477, %v1406
  %v1486 = vsel %vm994, %v1478, %v1408
  %v1487 = vsel %vm994, %v1479, %v1410
  %v1488 = vsel %vm994, %v1480, %v1412
  %v1489 = vsel %vm994, %v1481, %v1414
  %v1490 = vsel %vm1003, %v1482, %v1424
  %v1491 = vsel %vm1003, %v1483, %v1426
  %v1492 = vsel %vm1003, %v1484, %v1428
  %v1493 = vsel %vm1003, %v1485, %v1430
  %v1494 = vsel %vm1003, %v1486, %v1432
  %v1495 = vsel %vm1003, %v1487, %v1434
  %v1496 = vsel %vm1003, %v1488, %v1436
  %v1497 = vsel %vm1003, %v1489, %v1438
  %v1498 = vsel %vm29, %v1248, %v1448
  %v1499 = vsel %vm994, %v1498, %v1451
  %v1500 = vsel %vm1003, %v1499, %v1454
  %v1501 = vsel %vm29, %v1250, %v1457
  %v1502 = vsel %vm994, %v1501, %v1460
  %v1503 = vsel %vm1003, %v1502, %v1463
  %v1504 = vsel %vm29, %v1252, %v1466
  %v1505 = vsel %vm994, %v1504, %v1469
  %v1506 = vsel %vm1003, %v1505, %v1472
  %1507 = vmatprep.subr.mxu0 0.0
  %1508 = vmatpush1.msra.mxu0 %v140
  %1509 = vmatprep.subr.mxu0 0.0
  %1510 = vmatpush1.msra.mxu0 %v141
  %1511 = vmatprep.subr.mxu0 0.0
  %1512 = vmatpush1.msra.mxu0 %v142
  %1513 = vmatprep.subr.mxu0 0.0
  %1514 = vmatpush1.msra.mxu0 %v143
  %1515 = vmatprep.subr.mxu0 0.0
  %1516 = vmatpush1.msra.mxu0 %v144
  %1517 = vmatprep.subr.mxu0 0.0
  %1518 = vmatpush1.msra.mxu0 %v145
  %1519 = vmatprep.subr.mxu0 0.0
  %1520 = vmatpush1.msra.mxu0 %v146
  %1521 = vmatprep.subr.mxu0 0.0
  %1522 = vmatpush1.msra.mxu0 %v147
  %1523 = vmatprep.subr.mxu0 0.0
  %1524 = vmatpush1.msra.mxu0 %v148
  %1525 = vmatprep.subr.mxu0 0.0
  %1526 = vmatpush1.msra.mxu0 %v149
  %1527 = vmatprep.subr.mxu0 0.0
  %1528 = vmatpush1.msra.mxu0 %v150
  %1529 = vmatprep.subr.mxu0 0.0
  %1530 = vmatpush1.msra.mxu0 %v151
  %1531 = vmatprep.subr.mxu0 0.0
  %1532 = vmatpush1.msra.mxu0 %v152
  %1533 = vmatprep.subr.mxu0 0.0
  %1534 = vmatpush1.msra.mxu0 %v153
  %1535 = vmatprep.subr.mxu0 0.0
  %1536 = vmatpush1.msra.mxu0 %v154
  %1537 = vmatprep.subr.mxu0 0.0
  %1538 = vmatpush1.msra.mxu0 %v155
  %1539 = vmatprep.subr.mxu0 0.0
  %1540 = vmatpush1.msra.mxu0 %v156
  %1541 = vmatprep.subr.mxu0 0.0
  %1542 = vmatpush1.msra.mxu0 %v157
  %1543 = vmatprep.subr.mxu0 0.0
  %1544 = vmatpush1.msra.mxu0 %v158
  %1545 = vmatprep.subr.mxu0 0.0
  %1546 = vmatpush1.msra.mxu0 %v159
  %1547 = vmatprep.subr.mxu0 0.0
  %1548 = vmatpush1.msra.mxu0 %v160
  %1549 = vmatprep.subr.mxu0 0.0
  %1550 = vmatpush1.msra.mxu0 %v161
  %1551 = vmatprep.subr.mxu0 0.0
  %1552 = vmatpush1.msra.mxu0 %v162
  %1553 = vmatprep.subr.mxu0 0.0
  %1554 = vmatpush1.msra.mxu0 %v163
  %1555 = vmatprep.subr.mxu0 0.0
  %1556 = vmatpush1.msra.mxu0 %v164
  %1557 = vmatprep.subr.mxu0 0.0
  %1558 = vmatpush1.msra.mxu0 %v165
  %1559 = vmatprep.subr.mxu0 0.0
  %1560 = vmatpush1.msra.mxu0 %v166
  %1561 = vmatprep.subr.mxu0 0.0
  %1562 = vmatpush1.msra.mxu0 %v167
  %1563 = vmatprep.subr.mxu0 0.0
  %1564 = vmatpush1.msra.mxu0 %v168
  %1565 = vmatprep.subr.mxu0 0.0
  %1566 = vmatpush1.msra.mxu0 %v169
  %1567 = vmatprep.subr.mxu0 0.0
  %1568 = vmatpush1.msra.mxu0 %v170
  %1569 = vmatprep.subr.mxu0 0.0
  %1570 = vmatpush1.msra.mxu0 %v171
  %1571 = vmatprep.mubr.f32.mxu0 %v1491
  %1572 = vmatmul.mubr.f32.gmra.mrb[0].mxu0 %v1490
  %v1573 = vpop.f32.mrb[0].mxu0
  %v1574 = vadd.f32 0.0, %v1573
  %v1575 = vpop.f32.mrb[0].mxu0
  %1576 = vmatprep.mubr.f32.mxu0 %v1492
  %1577 = vmatmul.mubr.f32.gmra.mrb[0].mxu0 %v1491
  %v1578 = vpop.f32.mrb[0].mxu0
  %v1579 = vadd.f32 0.0, %v1578
  %v1580 = vpop.f32.mrb[0].mxu0
  %1581 = vmatprep.mubr.f32.mxu0 %v1493
  %1582 = vmatmul.mubr.f32.gmra.mrb[0].mxu0 %v1492
  %v1583 = vpop.f32.mrb[0].mxu0
  %v1584 = vadd.f32 0.0, %v1583
  %v1585 = vpop.f32.mrb[0].mxu0
  %1586 = vmatprep.mubr.f32.mxu0 %v1494
  %1587 = vmatmul.mubr.f32.gmra.mrb[0].mxu0 %v1493
  %v1588 = vpop.f32.mrb[0].mxu0
  %v1589 = vadd.f32 0.0, %v1588
  %v1590 = vpop.f32.mrb[0].mxu0
  %1591 = vmatprep.mubr.f32.mxu0 %v1495
  %1592 = vmatmul.mubr.f32.gmra.mrb[0].mxu0 %v1494
  %v1593 = vpop.f32.mrb[0].mxu0
  %v1594 = vadd.f32 0.0, %v1593
  %v1595 = vpop.f32.mrb[0].mxu0
  %1596 = vmatprep.mubr.f32.mxu0 %v1496
  %1597 = vmatmul.mubr.f32.gmra.mrb[0].mxu0 %v1495
  %v1598 = vpop.f32.mrb[0].mxu0
  %v1599 = vadd.f32 0.0, %v1598
  %v1600 = vpop.f32.mrb[0].mxu0
  %1601 = vmatprep.mubr.f32.mxu0 %v1497
  %1602 = vmatmul.mubr.f32.gmra.mrb[0].mxu0 %v1496
  %v1603 = vpop.f32.mrb[0].mxu0
  %v1604 = vadd.f32 0.0, %v1603
  %v1605 = vpop.f32.mrb[0].mxu0
  %1606 = vmatprep.mubr.f32.mxu0 %v1500
  %1607 = vmatmul.mubr.f32.gmra.mrb[0].mxu0 %v1497
  %v1608 = vpop.f32.mrb[0].mxu0
  %v1609 = vadd.f32 0.0, %v1608
  %v1610 = vpop.f32.mrb[0].mxu0
  %1611 = vdwg.mxu0
  %1612 = vmatprep.subr.mxu0 0.0
  %1613 = vmatpush1.msra.mxu0 %v172
  %1614 = vmatprep.subr.mxu0 0.0
  %1615 = vmatpush1.msra.mxu0 %v173
  %1616 = vmatprep.subr.mxu0 0.0
  %1617 = vmatpush1.msra.mxu0 %v174
  %1618 = vmatprep.subr.mxu0 0.0
  %1619 = vmatpush1.msra.mxu0 %v175
  %1620 = vmatprep.subr.mxu0 0.0
  %1621 = vmatpush1.msra.mxu0 %v176
  %1622 = vmatprep.subr.mxu0 0.0
  %1623 = vmatpush1.msra.mxu0 %v177
  %1624 = vmatprep.subr.mxu0 0.0
  %1625 = vmatpush1.msra.mxu0 %v178
  %1626 = vmatprep.subr.mxu0 0.0
  %1627 = vmatpush1.msra.mxu0 %v179
  %1628 = vmatprep.subr.mxu0 0.0
  %1629 = vmatpush1.msra.mxu0 %v180
  %1630 = vmatprep.subr.mxu0 0.0
  %1631 = vmatpush1.msra.mxu0 %v181
  %1632 = vmatprep.subr.mxu0 0.0
  %1633 = vmatpush1.msra.mxu0 %v182
  %1634 = vmatprep.subr.mxu0 0.0
  %1635 = vmatpush1.msra.mxu0 %v183
  %1636 = vmatprep.subr.mxu0 0.0
  %1637 = vmatpush1.msra.mxu0 %v184
  %1638 = vmatprep.subr.mxu0 0.0
  %1639 = vmatpush1.msra.mxu0 %v185
  %1640 = vmatprep.subr.mxu0 0.0
  %1641 = vmatpush1.msra.mxu0 %v186
  %1642 = vmatprep.subr.mxu0 0.0
  %1643 = vmatpush1.msra.mxu0 %v187
  %1644 = vmatprep.subr.mxu0 0.0
  %1645 = vmatpush1.msra.mxu0 %v188
  %1646 = vmatprep.subr.mxu0 0.0
  %1647 = vmatpush1.msra.mxu0 %v189
  %1648 = vmatprep.subr.mxu0 0.0
  %1649 = vmatpush1.msra.mxu0 %v190
  %1650 = vmatprep.subr.mxu0 0.0
  %1651 = vmatpush1.msra.mxu0 %v191
  %1652 = vmatprep.subr.mxu0 0.0
  %1653 = vmatpush1.msra.mxu0 %v192
  %1654 = vmatprep.subr.mxu0 0.0
  %1655 = vmatpush1.msra.mxu0 %v193
  %1656 = vmatprep.subr.mxu0 0.0
  %1657 = vmatpush1.msra.mxu0 %v194
  %1658 = vmatprep.subr.mxu0 0.0
  %1659 = vmatpush1.msra.mxu0 %v195
  %1660 = vmatprep.subr.mxu0 0.0
  %1661 = vmatpush1.msra.mxu0 %v196
  %1662 = vmatprep.subr.mxu0 0.0
  %1663 = vmatpush1.msra.mxu0 %v197
  %1664 = vmatprep.subr.mxu0 0.0
  %1665 = vmatpush1.msra.mxu0 %v198
  %1666 = vmatprep.subr.mxu0 0.0
  %1667 = vmatpush1.msra.mxu0 %v199
  %1668 = vmatprep.subr.mxu0 0.0
  %1669 = vmatpush1.msra.mxu0 %v200
  %1670 = vmatprep.subr.mxu0 0.0
  %1671 = vmatpush1.msra.mxu0 %v201
  %1672 = vmatprep.subr.mxu0 0.0
  %1673 = vmatpush1.msra.mxu0 %v202
  %1674 = vmatprep.subr.mxu0 0.0
  %1675 = vmatpush1.msra.mxu0 %v203
  %1676 = vmatprep.mubr.f32.mxu0 %v1493
  %1677 = vmatmul.mubr.f32.gmra.mrb[0].mxu0 %v1492
  %v1678 = vpop.f32.mrb[0].mxu0
  %v1679 = vadd.f32 %v1574, %v1678
  %v1680 = vpop.f32.mrb[0].mxu0
  %1681 = vmatprep.mubr.f32.mxu0 %v1494
  %1682 = vmatmul.mubr.f32.gmra.mrb[0].mxu0 %v1493
  %v1683 = vpop.f32.mrb[0].mxu0
  %v1684 = vadd.f32 %v1579, %v1683
  %v1685 = vpop.f32.mrb[0].mxu0
  %1686 = vmatprep.mubr.f32.mxu0 %v1495
  %1687 = vmatmul.mubr.f32.gmra.mrb[0].mxu0 %v1494
  %v1688 = vpop.f32.mrb[0].mxu0
  %v1689 = vadd.f32 %v1584, %v1688
  %v1690 = vpop.f32.mrb[0].mxu0
  %1691 = vmatprep.mubr.f32.mxu0 %v1496
  %1692 = vmatmul.mubr.f32.gmra.mrb[0].mxu0 %v1495
  %v1693 = vpop.f32.mrb[0].mxu0
  %v1694 = vadd.f32 %v1589, %v1693
  %v1695 = vpop.f32.mrb[0].mxu0
  %1696 = vmatprep.mubr.f32.mxu0 %v1497
  %1697 = vmatmul.mubr.f32.gmra.mrb[0].mxu0 %v1496
  %v1698 = vpop.f32.mrb[0].mxu0
  %v1699 = vadd.f32 %v1594, %v1698
  %v1700 = vpop.f32.mrb[0].mxu0
  %1701 = vmatprep.mubr.f32.mxu0 %v1500
  %1702 = vmatmul.mubr.f32.gmra.mrb[0].mxu0 %v1497
  %v1703 = vpop.f32.mrb[0].mxu0
  %v1704 = vadd.f32 %v1599, %v1703
  %v1705 = vpop.f32.mrb[0].mxu0
  %1706 = vmatprep.mubr.f32.mxu0 %v1503
  %1707 = vmatmul.mubr.f32.gmra.mrb[0].mxu0 %v1500
  %v1708 = vpop.f32.mrb[0].mxu0
  %v1709 = vadd.f32 %v1604, %v1708
  %v1710 = vpop.f32.mrb[0].mxu0
  %1711 = vmatprep.mubr.f32.mxu0 %v1506
  %1712 = vmatmul.mubr.f32.gmra.mrb[0].mxu0 %v1503
  %v1713 = vpop.f32.mrb[0].mxu0
  %v1714 = vadd.f32 %v1609, %v1713
  %v1715 = vpop.f32.mrb[0].mxu0
  %1716 = vdwg.mxu0
  %v1717 = vadd.f32 %v1193, %v1679
  %v1718 = vadd.f32 %v1198, %v1684
  %v1719 = vadd.f32 %v1203, %v1689
  %v1720 = vadd.f32 %v1208, %v1694
  %v1721 = vadd.f32 %v1213, %v1699
  %v1722 = vadd.f32 %v1218, %v1704
  %v1723 = vadd.f32 %v1223, %v1709
  %v1724 = vadd.f32 %v1228, %v1714
  %v1725 = vsel %vm75, %v1717, 0.0
  %v1726 = vsel %vm75, %v1718, 0.0
  %v1727 = vadd.f32 %v1725, %v1726
  %v1728 = vsel %vm75, %v1719, 0.0
  %v1729 = vadd.f32 %v1727, %v1728
  %v1730 = vsel %vm75, %v1720, 0.0
  %v1731 = vadd.f32 %v1729, %v1730
  %v1732 = vsel %vm75, %v1721, 0.0
  %v1733 = vadd.f32 %v1731, %v1732
  %v1734 = vsel %vm75, %v1722, 0.0
  %v1735 = vadd.f32 %v1733, %v1734
  %v1736 = vsel %vm75, %v1723, 0.0
  %v1737 = vadd.f32 %v1735, %v1736
  %v1738 = vsel %vm75, %v1724, 0.0
  %v1739 = vadd.f32 %v1737, %v1738
  %v1740 = vrot.slane %v1739, 4
  %v1741 = vadd.f32 %v1739, %v1740
  %v1742 = vrot.slane %v1741, 2
  %v1743 = vadd.f32 %v1741, %v1742
  %v1744 = vrot.slane %v1743, 1
  %v1745 = vadd.f32 %v1743, %v1744
  %v1746 = vmul.f32 %v1745, 0.0078125
  %v1747 = vsub.f32 %v1193, %v1746
  %v1748 = vsub.f32 %v1198, %v1746
  %v1749 = vsub.f32 %v1203, %v1746
  %v1750 = vsub.f32 %v1208, %v1746
  %v1751 = vsub.f32 %v1213, %v1746
  %v1752 = vsub.f32 %v1218, %v1746
  %v1753 = vsub.f32 %v1223, %v1746
  %v1754 = vsub.f32 %v1228, %v1746
  %v1755 = vsub.f32 %v1679, %v1746
  %v1756 = vsub.f32 %v1684, %v1746
  %v1757 = vsub.f32 %v1689, %v1746
  %v1758 = vsub.f32 %v1694, %v1746
  %v1759 = vsub.f32 %v1699, %v1746
  %v1760 = vsub.f32 %v1704, %v1746
  %v1761 = vsub.f32 %v1709, %v1746
  %v1762 = vsub.f32 %v1714, %v1746
  %v1763 = vmul.f32 %v1747, %v1747
  %v1764 = vmul.f32 %v1748, %v1748
  %v1765 = vmul.f32 %v1749, %v1749
  %v1766 = vmul.f32 %v1750, %v1750
  %v1767 = vmul.f32 %v1751, %v1751
  %v1768 = vmul.f32 %v1752, %v1752
  %v1769 = vmul.f32 %v1753, %v1753
  %v1770 = vmul.f32 %v1754, %v1754
  %v1771 = vmul.f32 %v1755, %v1755
  %v1772 = vmul.f32 %v1756, %v1756
  %v1773 = vmul.f32 %v1757, %v1757
  %v1774 = vmul.f32 %v1758, %v1758
  %v1775 = vmul.f32 %v1759, %v1759
  %v1776 = vmul.f32 %v1760, %v1760
  %v1777 = vmul.f32 %v1761, %v1761
  %v1778 = vmul.f32 %v1762, %v1762
  %v1779 = vadd.f32 %v1763, %v1771
  %v1780 = vadd.f32 %v1764, %v1772
  %v1781 = vadd.f32 %v1765, %v1773
  %v1782 = vadd.f32 %v1766, %v1774
  %v1783 = vadd.f32 %v1767, %v1775
  %v1784 = vadd.f32 %v1768, %v1776
  %v1785 = vadd.f32 %v1769, %v1777
  %v1786 = vadd.f32 %v1770, %v1778
  %v1787 = vsel %vm75, %v1779, 0.0
  %v1788 = vsel %vm75, %v1780, 0.0
  %v1789 = vadd.f32 %v1787, %v1788
  %v1790 = vsel %vm75, %v1781, 0.0
  %v1791 = vadd.f32 %v1789, %v1790
  %v1792 = vsel %vm75, %v1782, 0.0
  %v1793 = vadd.f32 %v1791, %v1792
  %v1794 = vsel %vm75, %v1783, 0.0
  %v1795 = vadd.f32 %v1793, %v1794
  %v1796 = vsel %vm75, %v1784, 0.0
  %v1797 = vadd.f32 %v1795, %v1796
  %v1798 = vsel %vm75, %v1785, 0.0
  %v1799 = vadd.f32 %v1797, %v1798
  %v1800 = vsel %vm75, %v1786, 0.0
  %v1801 = vadd.f32 %v1799, %v1800
  %v1802 = vrot.slane %v1801, 4
  %v1803 = vadd.f32 %v1801, %v1802
  %v1804 = vrot.slane %v1803, 2
  %v1805 = vadd.f32 %v1803, %v1804
  %v1806 = vrot.slane %v1805, 1
  %v1807 = vadd.f32 %v1805, %v1806
  %v1808 = vmul.f32 %v1807, 0.0078125
  %v1809 = vadd.f32 %v1808, 1e-05
  %v1810 = vrsqrt.pop %v1809
  %v1811 = vmul.f32 %v138, %v1810
  %v1813 = vlaneseq
  %v1814 = vshrl.u32 %v1813, 7
  %v1815 = vsub.s32 0, %v1814
  %v1816 = vrot.slane %v1811, %v1815
  %v1818 = vmul.f32 %v1747, %v1816
  %v1819 = vmul.f32 %v1748, %v1816
  %v1820 = vmul.f32 %v1749, %v1816
  %v1821 = vmul.f32 %v1750, %v1816
  %v1822 = vmul.f32 %v1751, %v1816
  %v1823 = vmul.f32 %v1752, %v1816
  %v1824 = vmul.f32 %v1753, %v1816
  %v1825 = vmul.f32 %v1754, %v1816
  %v1827 = vlaneseq
  %v1828 = vshrl.u32 %v1827, 7
  %v1829 = vsub.s32 0, %v1828
  %v1830 = vrot.slane %v139, %v1829
  %v1832 = vadd.f32 %v1818, %v1830
  %v1833 = vadd.f32 %v1819, %v1830
  %v1834 = vadd.f32 %v1820, %v1830
  %v1835 = vadd.f32 %v1821, %v1830
  %v1836 = vadd.f32 %v1822, %v1830
  %v1837 = vadd.f32 %v1823, %v1830
  %v1838 = vadd.f32 %v1824, %v1830
  %v1839 = vadd.f32 %v1825, %v1830
  %v1840 = vmax.f32 %v1832, 0.0
  %v1841 = vmax.f32 %v1833, 0.0
  %v1842 = vmax.f32 %v1834, 0.0
  %v1843 = vmax.f32 %v1835, 0.0
  %v1844 = vmax.f32 %v1836, 0.0
  %v1845 = vmax.f32 %v1837, 0.0
  %v1846 = vmax.f32 %v1838, 0.0
  %v1847 = vmax.f32 %v1839, 0.0
  %s1848 = scalar_lea.vmem [#allocation3], 24
  %1849 = vst.msk [vmem:[%s1848 + $0x8] sm:$0xff] %vm75, %v1840
  %1850 = vst.msk [vmem:[%s1848 + $0x20] sm:$0xff] %vm75, %v1841
  %1851 = vst.msk [vmem:[%s1848 + $0x38] sm:$0xff] %vm75, %v1842
  %1852 = vst.msk [vmem:[%s1848 + $0x50] sm:$0xff] %vm75, %v1843
  %1853 = vst.msk [vmem:[%s1848 + $0x68] sm:$0xff] %vm75, %v1844
  %1854 = vst.msk [vmem:[%s1848 + $0x80] sm:$0xff] %vm75, %v1845
  %1855 = vst.msk [vmem:[%s1848 + $0x98] sm:$0xff] %vm75, %v1846
  %1856 = vst.msk [vmem:[%s1848 + $0xb0] sm:$0xff] %vm75, %v1847
  %v1857 = vmul.f32 %v1755, %v1816
  %v1858 = vmul.f32 %v1756, %v1816
  %v1859 = vmul.f32 %v1757, %v1816
  %v1860 = vmul.f32 %v1758, %v1816
  %v1861 = vmul.f32 %v1759, %v1816
  %v1862 = vmul.f32 %v1760, %v1816
  %v1863 = vmul.f32 %v1761, %v1816
  %v1864 = vmul.f32 %v1762, %v1816
  %v1865 = vadd.f32 %v1857, %v1830
  %v1866 = vadd.f32 %v1858, %v1830
  %v1867 = vadd.f32 %v1859, %v1830
  %v1868 = vadd.f32 %v1860, %v1830
  %v1869 = vadd.f32 %v1861, %v1830
  %v1870 = vadd.f32 %v1862, %v1830
  %v1871 = vadd.f32 %v1863, %v1830
  %v1872 = vadd.f32 %v1864, %v1830
  %v1873 = vmax.f32 %v1865, 0.0
  %v1874 = vmax.f32 %v1866, 0.0
  %v1875 = vmax.f32 %v1867, 0.0
  %v1876 = vmax.f32 %v1868, 0.0
  %v1877 = vmax.f32 %v1869, 0.0
  %v1878 = vmax.f32 %v1870, 0.0
  %v1879 = vmax.f32 %v1871, 0.0
  %v1880 = vmax.f32 %v1872, 0.0
  %s1881 = scalar_lea.vmem [#allocation3], 264
  %1882 = vst.msk [vmem:[%s1881 + $0x8] sm:$0xff] %vm75, %v1873
  %1883 = vst.msk [vmem:[%s1881 + $0x20] sm:$0xff] %vm75, %v1874
  %1884 = vst.msk [vmem:[%s1881 + $0x38] sm:$0xff] %vm75, %v1875
  %1885 = vst.msk [vmem:[%s1881 + $0x50] sm:$0xff] %vm75, %v1876
  %1886 = vst.msk [vmem:[%s1881 + $0x68] sm:$0xff] %vm75, %v1877
  %1887 = vst.msk [vmem:[%s1881 + $0x80] sm:$0xff] %vm75, %v1878
  %1888 = vst.msk [vmem:[%s1881 + $0x98] sm:$0xff] %vm75, %v1879
  %1889 = vst.msk [vmem:[%s1881 + $0xb0] sm:$0xff] %vm75, %v1880
  %v1890 = vld [vmem:[#allocation3] sm:$0xff]
  %v1891 = vld [vmem:[#allocation3 + $0x8] sm:$0xff]
  %v1892 = vld [vmem:[#allocation3 + $0x10] sm:$0xff]
  %v1893 = vld [vmem:[#allocation3 + $0x18] sm:$0xff]
  %v1894 = vld [vmem:[#allocation3 + $0x20] sm:$0xff]
  %v1895 = vld [vmem:[#allocation3 + $0x28] sm:$0xff]
  %v1896 = vld [vmem:[#allocation3 + $0x30] sm:$0xff]
  %v1897 = vld [vmem:[#allocation3 + $0x38] sm:$0xff]
  %v1898 = vld [vmem:[#allocation3 + $0x40] sm:$0xff]
  %v1899 = vld [vmem:[#allocation3 + $0x48] sm:$0xff]
  %v1900 = vld [vmem:[#allocation3 + $0x50] sm:$0xff]
  %v1901 = vld [vmem:[#allocation3 + $0x58] sm:$0xff]
  %v1902 = vld [vmem:[#allocation3 + $0x60] sm:$0xff]
  %v1903 = vld [vmem:[#allocation3 + $0x68] sm:$0xff]
  %v1904 = vld [vmem:[#allocation3 + $0x70] sm:$0xff]
  %v1905 = vld [vmem:[#allocation3 + $0x78] sm:$0xff]
  %v1906 = vld [vmem:[#allocation3 + $0x80] sm:$0xff]
  %v1907 = vld [vmem:[#allocation3 + $0x88] sm:$0xff]
  %v1908 = vld [vmem:[#allocation3 + $0x90] sm:$0xff]
  %v1909 = vld [vmem:[#allocation3 + $0x98] sm:$0xff]
  %v1910 = vld [vmem:[#allocation3 + $0xa0] sm:$0xff]
  %v1911 = vld [vmem:[#allocation3 + $0xa8] sm:$0xff]
  %v1912 = vld [vmem:[#allocation3 + $0xb0] sm:$0xff]
  %v1913 = vld [vmem:[#allocation3 + $0xb8] sm:$0xff]
  %v1914 = vld [vmem:[#allocation3 + $0xc0] sm:$0xff]
  %v1915 = vld [vmem:[#allocation3 + $0xc8] sm:$0xff]
  %v1916 = vld [vmem:[#allocation3 + $0xd0] sm:$0xff]
  %v1917 = vld [vmem:[#allocation3 + $0xd8] sm:$0xff]
  %v1918 = vld [vmem:[#allocation3 + $0xe0] sm:$0xff]
  %v1919 = vld [vmem:[#allocation3 + $0xe8] sm:$0xff]
  %vm1936 = vcmask 1040384
  %v1937 = vrot.slane %v1890, 7
  %v1938 = vrot.slane %v1891, 7
  %v1939 = vsel %vm1936, %v1937, %v1938
  %v1940 = vrot.slane %v1893, 7
  %v1941 = vrot.slane %v1894, 7
  %v1942 = vsel %vm1936, %v1940, %v1941
  %v1943 = vrot.slane %v1896, 7
  %v1944 = vrot.slane %v1897, 7
  %v1945 = vsel %vm1936, %v1943, %v1944
  %v1946 = vrot.slane %v1899, 7
  %v1947 = vrot.slane %v1900, 7
  %v1948 = vsel %vm1936, %v1946, %v1947
  %v1949 = vrot.slane %v1902, 7
  %v1950 = vrot.slane %v1903, 7
  %v1951 = vsel %vm1936, %v1949, %v1950
  %v1952 = vrot.slane %v1905, 7
  %v1953 = vrot.slane %v1906, 7
  %v1954 = vsel %vm1936, %v1952, %v1953
  %v1955 = vrot.slane %v1908, 7
  %v1956 = vrot.slane %v1909, 7
  %v1957 = vsel %vm1936, %v1955, %v1956
  %v1958 = vrot.slane %v1911, 7
  %v1959 = vrot.slane %v1912, 7
  %v1960 = vsel %vm1936, %v1958, %v1959
  %v1971 = vrot.slane %v1914, 7
  %v1972 = vrot.slane %v1915, 7
  %v1973 = vsel %vm1936, %v1971, %v1972
  %1975 = vrot.lane.b32.xlu0 %v1891, 16
  %v1976 = vpop.permute.xlu0 %1975
  %1977 = vrot.lane.b32.xlu0 %v1894, 16
  %v1978 = vpop.permute.xlu0 %1977
  %1979 = vrot.lane.b32.xlu0 %v1897, 16
  %v1980 = vpop.permute.xlu0 %1979
  %1981 = vrot.lane.b32.xlu0 %v1900, 16
  %v1982 = vpop.permute.xlu0 %1981
  %1983 = vrot.lane.b32.xlu0 %v1903, 16
  %v1984 = vpop.permute.xlu0 %1983
  %1985 = vrot.lane.b32.xlu0 %v1906, 16
  %v1986 = vpop.permute.xlu0 %1985
  %1987 = vrot.lane.b32.xlu0 %v1909, 16
  %v1988 = vpop.permute.xlu0 %1987
  %1989 = vrot.lane.b32.xlu0 %v1912, 16
  %v1990 = vpop.permute.xlu0 %1989
  %1999 = vrot.lane.b32.xlu0 %v1942, 32
  %v2000 = vpop.permute.xlu0 %1999
  %2001 = vrot.lane.b32.xlu0 %v1945, 32
  %v2002 = vpop.permute.xlu0 %2001
  %2003 = vrot.lane.b32.xlu0 %v1948, 32
  %v2004 = vpop.permute.xlu0 %2003
  %2005 = vrot.lane.b32.xlu0 %v1951, 32
  %v2006 = vpop.permute.xlu0 %2005
  %2007 = vrot.lane.b32.xlu0 %v1954, 32
  %v2008 = vpop.permute.xlu0 %2007
  %2009 = vrot.lane.b32.xlu0 %v1957, 32
  %v2010 = vpop.permute.xlu0 %2009
  %2011 = vrot.lane.b32.xlu0 %v1960, 32
  %v2012 = vpop.permute.xlu0 %2011
  %2013 = vrot.lane.b32.xlu0 %v1973, 32
  %v2014 = vpop.permute.xlu0 %2013
  %2023 = vrot.lane.b32.xlu0 %v1894, 48
  %v2024 = vpop.permute.xlu0 %2023
  %2025 = vrot.lane.b32.xlu0 %v1897, 48
  %v2026 = vpop.permute.xlu0 %2025
  %2027 = vrot.lane.b32.xlu0 %v1900, 48
  %v2028 = vpop.permute.xlu0 %2027
  %2029 = vrot.lane.b32.xlu0 %v1903, 48
  %v2030 = vpop.permute.xlu0 %2029
  %2031 = vrot.lane.b32.xlu0 %v1906, 48
  %v2032 = vpop.permute.xlu0 %2031
  %2033 = vrot.lane.b32.xlu0 %v1909, 48
  %v2034 = vpop.permute.xlu0 %2033
  %2035 = vrot.lane.b32.xlu0 %v1912, 48
  %v2036 = vpop.permute.xlu0 %2035
  %2037 = vrot.lane.b32.xlu0 %v1915, 48
  %v2038 = vpop.permute.xlu0 %2037
  %v2047 = vsel %vm75, %v1939, %v1976
  %v2048 = vsel %vm75, %v1942, %v1978
  %v2049 = vsel %vm75, %v1945, %v1980
  %v2050 = vsel %vm75, %v1948, %v1982
  %v2051 = vsel %vm75, %v1951, %v1984
  %v2052 = vsel %vm75, %v1954, %v1986
  %v2053 = vsel %vm75, %v1957, %v1988
  %v2054 = vsel %vm75, %v1960, %v1990
  %v2055 = vsel %vm29, %v2047, %v2000
  %v2056 = vsel %vm29, %v2048, %v2002
  %v2057 = vsel %vm29, %v2049, %v2004
  %v2058 = vsel %vm29, %v2050, %v2006
  %v2059 = vsel %vm29, %v2051, %v2008
  %v2060 = vsel %vm29, %v2052, %v2010
  %v2061 = vsel %vm29, %v2053, %v2012
  %v2062 = vsel %vm29, %v2054, %v2014
  %vm2063 = vcmask 392192
  %v2064 = vsel %vm2063, %v2055, %v2024
  %v2065 = vsel %vm2063, %v2056, %v2026
  %v2066 = vsel %vm2063, %v2057, %v2028
  %v2067 = vsel %vm2063, %v2058, %v2030
  %v2068 = vsel %vm2063, %v2059, %v2032
  %v2069 = vsel %vm2063, %v2060, %v2034
  %v2070 = vsel %vm2063, %v2061, %v2036
  %v2071 = vsel %vm2063, %v2062, %v2038
  %v2073 = vsel %vm994, %v2064, 0
  %v2076 = vsel %vm994, %v2065, 0
  %v2079 = vsel %vm994, %v2066, 0
  %v2082 = vsel %vm994, %v2067, 0
  %v2085 = vsel %vm994, %v2068, 0
  %v2088 = vsel %vm994, %v2069, 0
  %v2091 = vsel %vm994, %v2070, 0
  %v2094 = vsel %vm994, %v2071, 0
  %2096 = vmatprep.subr.mxu0 0.0
  %2097 = vmatpush1.msra.mxu0 %v204
  %2098 = vmatprep.subr.mxu0 0.0
  %2099 = vmatpush1.msra.mxu0 %v205
  %2100 = vmatprep.subr.mxu0 0.0
  %2101 = vmatpush1.msra.mxu0 %v206
  %2102 = vmatprep.subr.mxu0 0.0
  %2103 = vmatpush1.msra.mxu0 %v207
  %2104 = vmatprep.subr.mxu0 0.0
  %2105 = vmatpush1.msra.mxu0 %v208
  %2106 = vmatprep.subr.mxu0 0.0
  %2107 = vmatpush1.msra.mxu0 %v209
  %2108 = vmatprep.subr.mxu0 0.0
  %2109 = vmatpush1.msra.mxu0 %v210
  %2110 = vmatprep.subr.mxu0 0.0
  %2111 = vmatpush1.msra.mxu0 %v211
  %2112 = vmatprep.subr.mxu0 0.0
  %2113 = vmatpush1.msra.mxu0 0.0
  %2114 = vmatprep.subr.mxu0 0.0
  %2115 = vmatpush1.msra.mxu0 0.0
  %2116 = vmatprep.subr.mxu0 0.0
  %2117 = vmatpush1.msra.mxu0 0.0
  %2118 = vmatprep.subr.mxu0 0.0
  %2119 = vmatpush1.msra.mxu0 0.0
  %2120 = vmatprep.subr.mxu0 0.0
  %2121 = vmatpush1.msra.mxu0 0.0
  %2122 = vmatprep.subr.mxu0 0.0
  %2123 = vmatpush1.msra.mxu0 0.0
  %2124 = vmatprep.subr.mxu0 0.0
  %2125 = vmatpush1.msra.mxu0 0.0
  %2126 = vmatprep.subr.mxu0 0.0
  %2127 = vmatpush1.msra.mxu0 0.0
  %2128 = vmatprep.subr.mxu0 0.0
  %2129 = vmatpush1.msra.mxu0 0.0
  %2130 = vmatprep.subr.mxu0 0.0
  %2131 = vmatpush1.msra.mxu0 0.0
  %2132 = vmatprep.subr.mxu0 0.0
  %2133 = vmatpush1.msra.mxu0 0.0
  %2134 = vmatprep.subr.mxu0 0.0
  %2135 = vmatpush1.msra.mxu0 0.0
  %2136 = vmatprep.subr.mxu0 0.0
  %2137 = vmatpush1.msra.mxu0 0.0
  %2138 = vmatprep.subr.mxu0 0.0
  %2139 = vmatpush1.msra.mxu0 0.0
  %2140 = vmatprep.subr.mxu0 0.0
  %2141 = vmatpush1.msra.mxu0 0.0
  %2142 = vmatprep.subr.mxu0 0.0
  %2143 = vmatpush1.msra.mxu0 0.0
  %2144 = vmatprep.subr.mxu0 0.0
  %2145 = vmatpush1.msra.mxu0 0.0
  %2146 = vmatprep.subr.mxu0 0.0
  %2147 = vmatpush1.msra.mxu0 0.0
  %2148 = vmatprep.subr.mxu0 0.0
  %2149 = vmatpush1.msra.mxu0 0.0
  %2150 = vmatprep.subr.mxu0 0.0
  %2151 = vmatpush1.msra.mxu0 0.0
  %2152 = vmatprep.subr.mxu0 0.0
  %2153 = vmatpush1.msra.mxu0 0.0
  %2154 = vmatprep.subr.mxu0 0.0
  %2155 = vmatpush1.msra.mxu0 0.0
  %2156 = vmatprep.subr.mxu0 0.0
  %2157 = vmatpush1.msra.mxu0 0.0
  %2158 = vmatprep.subr.mxu0 0.0
  %2159 = vmatpush1.msra.mxu0 0.0
  %2160 = vmatprep.mubr.f32.mxu0 0.0
  %2161 = vmatmul.mubr.f32.gmra.mrb[0].mxu0 %v2073
  %v2162 = vpop.f32.mrb[0].mxu0
  %v2163 = vadd.f32 0.0, %v2162
  %v2164 = vpop.f32.mrb[0].mxu0
  %2165 = vmatprep.mubr.f32.mxu0 0.0
  %2166 = vmatmul.mubr.f32.gmra.mrb[0].mxu0 %v2076
  %v2167 = vpop.f32.mrb[0].mxu0
  %v2168 = vadd.f32 0.0, %v2167
  %v2169 = vpop.f32.mrb[0].mxu0
  %2170 = vmatprep.mubr.f32.mxu0 0.0
  %2171 = vmatmul.mubr.f32.gmra.mrb[0].mxu0 %v2079
  %v2172 = vpop.f32.mrb[0].mxu0
  %v2173 = vadd.f32 0.0, %v2172
  %v2174 = vpop.f32.mrb[0].mxu0
  %2175 = vmatprep.mubr.f32.mxu0 0.0
  %2176 = vmatmul.mubr.f32.gmra.mrb[0].mxu0 %v2082
  %v2177 = vpop.f32.mrb[0].mxu0
  %v2178 = vadd.f32 0.0, %v2177
  %v2179 = vpop.f32.mrb[0].mxu0
  %2180 = vmatprep.mubr.f32.mxu0 0.0
  %2181 = vmatmul.mubr.f32.gmra.mrb[0].mxu0 %v2085
  %v2182 = vpop.f32.mrb[0].mxu0
  %v2183 = vadd.f32 0.0, %v2182
  %v2184 = vpop.f32.mrb[0].mxu0
  %2185 = vmatprep.mubr.f32.mxu0 0.0
  %2186 = vmatmul.mubr.f32.gmra.mrb[0].mxu0 %v2088
  %v2187 = vpop.f32.mrb[0].mxu0
  %v2188 = vadd.f32 0.0, %v2187
  %v2189 = vpop.f32.mrb[0].mxu0
  %2190 = vmatprep.mubr.f32.mxu0 0.0
  %2191 = vmatmul.mubr.f32.gmra.mrb[0].mxu0 %v2091
  %v2192 = vpop.f32.mrb[0].mxu0
  %v2193 = vadd.f32 0.0, %v2192
  %v2194 = vpop.f32.mrb[0].mxu0
  %2195 = vmatprep.mubr.f32.mxu0 0.0
  %2196 = vmatmul.mubr.f32.gmra.mrb[0].mxu0 %v2094
  %v2197 = vpop.f32.mrb[0].mxu0
  %v2198 = vadd.f32 0.0, %v2197
  %v2199 = vpop.f32.mrb[0].mxu0
  %2200 = vdwg.mxu0
  %v2209 = vrot.slane %v1891, 1
  %v2210 = vrot.slane %v1892, 1
  %v2211 = vsel %vm779, %v2209, %v2210
  %v2212 = vrot.slane %v1894, 1
  %v2213 = vrot.slane %v1895, 1
  %v2214 = vsel %vm779, %v2212, %v2213
  %v2215 = vrot.slane %v1897, 1
  %v2216 = vrot.slane %v1898, 1
  %v2217 = vsel %vm779, %v2215, %v2216
  %v2218 = vrot.slane %v1900, 1
  %v2219 = vrot.slane %v1901, 1
  %v2220 = vsel %vm779, %v2218, %v2219
  %v2221 = vrot.slane %v1903, 1
  %v2222 = vrot.slane %v1904, 1
  %v2223 = vsel %vm779, %v2221, %v2222
  %v2224 = vrot.slane %v1906, 1
  %v2225 = vrot.slane %v1907, 1
  %v2226 = vsel %vm779, %v2224, %v2225
  %v2227 = vrot.slane %v1909, 1
  %v2228 = vrot.slane %v1910, 1
  %v2229 = vsel %vm779, %v2227, %v2228
  %v2230 = vrot.slane %v1912, 1
  %v2231 = vrot.slane %v1913, 1
  %v2232 = vsel %vm779, %v2230, %v2231
  %v2234 = vrot.slane %v1915, 1
  %v2235 = vrot.slane %v1916, 1
  %v2236 = vsel %vm779, %v2234, %v2235
  %2237 = vrot.lane.b32.xlu0 %v2211, 16
  %v2238 = vpop.permute.xlu0 %2237
  %2239 = vrot.lane.b32.xlu0 %v2214, 16
  %v2240 = vpop.permute.xlu0 %2239
  %2241 = vrot.lane.b32.xlu0 %v2217, 16
  %v2242 = vpop.permute.xlu0 %2241
  %2243 = vrot.lane.b32.xlu0 %v2220, 16
  %v2244 = vpop.permute.xlu0 %2243
  %2245 = vrot.lane.b32.xlu0 %v2223, 16
  %v2246 = vpop.permute.xlu0 %2245
  %2247 = vrot.lane.b32.xlu0 %v2226, 16
  %v2248 = vpop.permute.xlu0 %2247
  %2249 = vrot.lane.b32.xlu0 %v2229, 16
  %v2250 = vpop.permute.xlu0 %2249
  %2251 = vrot.lane.b32.xlu0 %v2232, 16
  %v2252 = vpop.permute.xlu0 %2251
  %2261 = vrot.lane.b32.xlu0 %v1894, 32
  %v2262 = vpop.permute.xlu0 %2261
  %2263 = vrot.lane.b32.xlu0 %v1897, 32
  %v2264 = vpop.permute.xlu0 %2263
  %2265 = vrot.lane.b32.xlu0 %v1900, 32
  %v2266 = vpop.permute.xlu0 %2265
  %2267 = vrot.lane.b32.xlu0 %v1903, 32
  %v2268 = vpop.permute.xlu0 %2267
  %2269 = vrot.lane.b32.xlu0 %v1906, 32
  %v2270 = vpop.permute.xlu0 %2269
  %2271 = vrot.lane.b32.xlu0 %v1909, 32
  %v2272 = vpop.permute.xlu0 %2271
  %2273 = vrot.lane.b32.xlu0 %v1912, 32
  %v2274 = vpop.permute.xlu0 %2273
  %2275 = vrot.lane.b32.xlu0 %v1915, 32
  %v2276 = vpop.permute.xlu0 %2275
  %2285 = vrot.lane.b32.xlu0 %v2214, 48
  %v2286 = vpop.permute.xlu0 %2285
  %2287 = vrot.lane.b32.xlu0 %v2217, 48
  %v2288 = vpop.permute.xlu0 %2287
  %2289 = vrot.lane.b32.xlu0 %v2220, 48
  %v2290 = vpop.permute.xlu0 %2289
  %2291 = vrot.lane.b32.xlu0 %v2223, 48
  %v2292 = vpop.permute.xlu0 %2291
  %2293 = vrot.lane.b32.xlu0 %v2226, 48
  %v2294 = vpop.permute.xlu0 %2293
  %2295 = vrot.lane.b32.xlu0 %v2229, 48
  %v2296 = vpop.permute.xlu0 %2295
  %2297 = vrot.lane.b32.xlu0 %v2232, 48
  %v2298 = vpop.permute.xlu0 %2297
  %2299 = vrot.lane.b32.xlu0 %v2236, 48
  %v2300 = vpop.permute.xlu0 %2299
  %v2309 = vsel %vm75, %v1891, %v2238
  %v2310 = vsel %vm75, %v1894, %v2240
  %v2311 = vsel %vm75, %v1897, %v2242
  %v2312 = vsel %vm75, %v1900, %v2244
  %v2313 = vsel %vm75, %v1903, %v2246
  %v2314 = vsel %vm75, %v1906, %v2248
  %v2315 = vsel %vm75, %v1909, %v2250
  %v2316 = vsel %vm75, %v1912, %v2252
  %v2317 = vsel %vm29, %v2309, %v2262
  %v2318 = vsel %vm29, %v2310, %v2264
  %v2319 = vsel %vm29, %v2311, %v2266
  %v2320 = vsel %vm29, %v2312, %v2268
  %v2321 = vsel %vm29, %v2313, %v2270
  %v2322 = vsel %vm29, %v2314, %v2272
  %v2323 = vsel %vm29, %v2315, %v2274
  %v2324 = vsel %vm29, %v2316, %v2276
  %v2325 = vsel %vm2063, %v2317, %v2286
  %v2326 = vsel %vm2063, %v2318, %v2288
  %v2327 = vsel %vm2063, %v2319, %v2290
  %v2328 = vsel %vm2063, %v2320, %v2292
  %v2329 = vsel %vm2063, %v2321, %v2294
  %v2330 = vsel %vm2063, %v2322, %v2296
  %v2331 = vsel %vm2063, %v2323, %v2298
  %v2332 = vsel %vm2063, %v2324, %v2300
  %v2334 = vsel %vm994, %v2325, 0
  %v2337 = vsel %vm994, %v2326, 0
  %v2340 = vsel %vm994, %v2327, 0
  %v2343 = vsel %vm994, %v2328, 0
  %v2346 = vsel %vm994, %v2329, 0
  %v2349 = vsel %vm994, %v2330, 0
  %v2352 = vsel %vm994, %v2331, 0
  %v2355 = vsel %vm994, %v2332, 0
  %2357 = vmatprep.subr.mxu0 0.0
  %2358 = vmatpush1.msra.mxu0 %v213
  %2359 = vmatprep.subr.mxu0 0.0
  %2360 = vmatpush1.msra.mxu0 %v214
  %2361 = vmatprep.subr.mxu0 0.0
  %2362 = vmatpush1.msra.mxu0 %v215
  %2363 = vmatprep.subr.mxu0 0.0
  %2364 = vmatpush1.msra.mxu0 %v216
  %2365 = vmatprep.subr.mxu0 0.0
  %2366 = vmatpush1.msra.mxu0 %v217
  %2367 = vmatprep.subr.mxu0 0.0
  %2368 = vmatpush1.msra.mxu0 %v218
  %2369 = vmatprep.subr.mxu0 0.0
  %2370 = vmatpush1.msra.mxu0 %v219
  %2371 = vmatprep.subr.mxu0 0.0
  %2372 = vmatpush1.msra.mxu0 %v220
  %2373 = vmatprep.subr.mxu0 0.0
  %2374 = vmatpush1.msra.mxu0 0.0
  %2375 = vmatprep.subr.mxu0 0.0
  %2376 = vmatpush1.msra.mxu0 0.0
  %2377 = vmatprep.subr.mxu0 0.0
  %2378 = vmatpush1.msra.mxu0 0.0
  %2379 = vmatprep.subr.mxu0 0.0
  %2380 = vmatpush1.msra.mxu0 0.0
  %2381 = vmatprep.subr.mxu0 0.0
  %2382 = vmatpush1.msra.mxu0 0.0
  %2383 = vmatprep.subr.mxu0 0.0
  %2384 = vmatpush1.msra.mxu0 0.0
  %2385 = vmatprep.subr.mxu0 0.0
  %2386 = vmatpush1.msra.mxu0 0.0
  %2387 = vmatprep.subr.mxu0 0.0
  %2388 = vmatpush1.msra.mxu0 0.0
  %2389 = vmatprep.subr.mxu0 0.0
  %2390 = vmatpush1.msra.mxu0 0.0
  %2391 = vmatprep.subr.mxu0 0.0
  %2392 = vmatpush1.msra.mxu0 0.0
  %2393 = vmatprep.subr.mxu0 0.0
  %2394 = vmatpush1.msra.mxu0 0.0
  %2395 = vmatprep.subr.mxu0 0.0
  %2396 = vmatpush1.msra.mxu0 0.0
  %2397 = vmatprep.subr.mxu0 0.0
  %2398 = vmatpush1.msra.mxu0 0.0
  %2399 = vmatprep.subr.mxu0 0.0
  %2400 = vmatpush1.msra.mxu0 0.0
  %2401 = vmatprep.subr.mxu0 0.0
  %2402 = vmatpush1.msra.mxu0 0.0
  %2403 = vmatprep.subr.mxu0 0.0
  %2404 = vmatpush1.msra.mxu0 0.0
  %2405 = vmatprep.subr.mxu0 0.0
  %2406 = vmatpush1.msra.mxu0 0.0
  %2407 = vmatprep.subr.mxu0 0.0
  %2408 = vmatpush1.msra.mxu0 0.0
  %2409 = vmatprep.subr.mxu0 0.0
  %2410 = vmatpush1.msra.mxu0 0.0
  %2411 = vmatprep.subr.mxu0 0.0
  %2412 = vmatpush1.msra.mxu0 0.0
  %2413 = vmatprep.subr.mxu0 0.0
  %2414 = vmatpush1.msra.mxu0 0.0
  %2415 = vmatprep.subr.mxu0 0.0
  %2416 = vmatpush1.msra.mxu0 0.0
  %2417 = vmatprep.subr.mxu0 0.0
  %2418 = vmatpush1.msra.mxu0 0.0
  %2419 = vmatprep.subr.mxu0 0.0
  %2420 = vmatpush1.msra.mxu0 0.0
  %2421 = vmatprep.mubr.f32.mxu0 0.0
  %2422 = vmatmul.mubr.f32.gmra.mrb[0].mxu0 %v2334
  %v2423 = vpop.f32.mrb[0].mxu0
  %v2424 = vadd.f32 0.0, %v2423
  %v2425 = vpop.f32.mrb[0].mxu0
  %2426 = vmatprep.mubr.f32.mxu0 0.0
  %2427 = vmatmul.mubr.f32.gmra.mrb[0].mxu0 %v2337
  %v2428 = vpop.f32.mrb[0].mxu0
  %v2429 = vadd.f32 0.0, %v2428
  %v2430 = vpop.f32.mrb[0].mxu0
  %2431 = vmatprep.mubr.f32.mxu0 0.0
  %2432 = vmatmul.mubr.f32.gmra.mrb[0].mxu0 %v2340
  %v2433 = vpop.f32.mrb[0].mxu0
  %v2434 = vadd.f32 0.0, %v2433
  %v2435 = vpop.f32.mrb[0].mxu0
  %2436 = vmatprep.mubr.f32.mxu0 0.0
  %2437 = vmatmul.mubr.f32.gmra.mrb[0].mxu0 %v2343
  %v2438 = vpop.f32.mrb[0].mxu0
  %v2439 = vadd.f32 0.0, %v2438
  %v2440 = vpop.f32.mrb[0].mxu0
  %2441 = vmatprep.mubr.f32.mxu0 0.0
  %2442 = vmatmul.mubr.f32.gmra.mrb[0].mxu0 %v2346
  %v2443 = vpop.f32.mrb[0].mxu0
  %v2444 = vadd.f32 0.0, %v2443
  %v2445 = vpop.f32.mrb[0].mxu0
  %2446 = vmatprep.mubr.f32.mxu0 0.0
  %2447 = vmatmul.mubr.f32.gmra.mrb[0].mxu0 %v2349
  %v2448 = vpop.f32.mrb[0].mxu0
  %v2449 = vadd.f32 0.0, %v2448
  %v2450 = vpop.f32.mrb[0].mxu0
  %2451 = vmatprep.mubr.f32.mxu0 0.0
  %2452 = vmatmul.mubr.f32.gmra.mrb[0].mxu0 %v2352
  %v2453 = vpop.f32.mrb[0].mxu0
  %v2454 = vadd.f32 0.0, %v2453
  %v2455 = vpop.f32.mrb[0].mxu0
  %2456 = vmatprep.mubr.f32.mxu0 0.0
  %2457 = vmatmul.mubr.f32.gmra.mrb[0].mxu0 %v2355
  %v2458 = vpop.f32.mrb[0].mxu0
  %v2459 = vadd.f32 0.0, %v2458
  %v2460 = vpop.f32.mrb[0].mxu0
  %2461 = vdwg.mxu0
  %v2464 = vrot.slane %v1917, 7
  %v2465 = vrot.slane %v1918, 7
  %v2466 = vsel %vm1936, %v2464, %v2465
  %2467 = vrot.lane.b32.xlu0 %v1915, 16
  %v2468 = vpop.permute.xlu0 %2467
  %2470 = vrot.lane.b32.xlu0 %v2466, 32
  %v2471 = vpop.permute.xlu0 %2470
  %2473 = vrot.lane.b32.xlu0 %v1918, 48
  %v2474 = vpop.permute.xlu0 %2473
  %v2476 = vsel %vm75, %v1973, %v2468
  %v2477 = vsel %vm29, %v2476, %v2471
  %v2478 = vsel %vm2063, %v2477, %v2474
  %v2480 = vsel %vm994, %v2478, 0
  %2482 = vmatprep.subr.mxu0 0.0
  %2483 = vmatpush1.msra.mxu0 %v222
  %2484 = vmatprep.subr.mxu0 0.0
  %2485 = vmatpush1.msra.mxu0 %v223
  %2486 = vmatprep.subr.mxu0 0.0
  %2487 = vmatpush1.msra.mxu0 %v224
  %2488 = vmatprep.subr.mxu0 0.0
  %2489 = vmatpush1.msra.mxu0 %v225
  %2490 = vmatprep.subr.mxu0 0.0
  %2491 = vmatpush1.msra.mxu0 %v226
  %2492 = vmatprep.subr.mxu0 0.0
  %2493 = vmatpush1.msra.mxu0 %v227
  %2494 = vmatprep.subr.mxu0 0.0
  %2495 = vmatpush1.msra.mxu0 %v228
  %2496 = vmatprep.subr.mxu0 0.0
  %2497 = vmatpush1.msra.mxu0 %v229
  %2498 = vmatprep.subr.mxu0 0.0
  %2499 = vmatpush1.msra.mxu0 0.0
  %2500 = vmatprep.subr.mxu0 0.0
  %2501 = vmatpush1.msra.mxu0 0.0
  %2502 = vmatprep.subr.mxu0 0.0
  %2503 = vmatpush1.msra.mxu0 0.0
  %2504 = vmatprep.subr.mxu0 0.0
  %2505 = vmatpush1.msra.mxu0 0.0
  %2506 = vmatprep.subr.mxu0 0.0
  %2507 = vmatpush1.msra.mxu0 0.0
  %2508 = vmatprep.subr.mxu0 0.0
  %2509 = vmatpush1.msra.mxu0 0.0
  %2510 = vmatprep.subr.mxu0 0.0
  %2511 = vmatpush1.msra.mxu0 0.0
  %2512 = vmatprep.subr.mxu0 0.0
  %2513 = vmatpush1.msra.mxu0 0.0
  %2514 = vmatprep.subr.mxu0 0.0
  %2515 = vmatpush1.msra.mxu0 0.0
  %2516 = vmatprep.subr.mxu0 0.0
  %2517 = vmatpush1.msra.mxu0 0.0
  %2518 = vmatprep.subr.mxu0 0.0
  %2519 = vmatpush1.msra.mxu0 0.0
  %2520 = vmatprep.subr.mxu0 0.0
  %2521 = vmatpush1.msra.mxu0 0.0
  %2522 = vmatprep.subr.mxu0 0.0
  %2523 = vmatpush1.msra.mxu0 0.0
  %2524 = vmatprep.subr.mxu0 0.0
  %2525 = vmatpush1.msra.mxu0 0.0
  %2526 = vmatprep.subr.mxu0 0.0
  %2527 = vmatpush1.msra.mxu0 0.0
  %2528 = vmatprep.subr.mxu0 0.0
  %2529 = vmatpush1.msra.mxu0 0.0
  %2530 = vmatprep.subr.mxu0 0.0
  %2531 = vmatpush1.msra.mxu0 0.0
  %2532 = vmatprep.subr.mxu0 0.0
  %2533 = vmatpush1.msra.mxu0 0.0
  %2534 = vmatprep.subr.mxu0 0.0
  %2535 = vmatpush1.msra.mxu0 0.0
  %2536 = vmatprep.subr.mxu0 0.0
  %2537 = vmatpush1.msra.mxu0 0.0
  %2538 = vmatprep.subr.mxu0 0.0
  %2539 = vmatpush1.msra.mxu0 0.0
  %2540 = vmatprep.subr.mxu0 0.0
  %2541 = vmatpush1.msra.mxu0 0.0
  %2542 = vmatprep.subr.mxu0 0.0
  %2543 = vmatpush1.msra.mxu0 0.0
  %2544 = vmatprep.subr.mxu0 0.0
  %2545 = vmatpush1.msra.mxu0 0.0
  %2546 = vmatprep.mubr.f32.mxu0 0.0
  %2547 = vmatmul.mubr.f32.gmra.mrb[0].mxu0 %v2076
  %v2548 = vpop.f32.mrb[0].mxu0
  %v2549 = vadd.f32 0.0, %v2548
  %v2550 = vpop.f32.mrb[0].mxu0
  %2551 = vmatprep.mubr.f32.mxu0 0.0
  %2552 = vmatmul.mubr.f32.gmra.mrb[0].mxu0 %v2079
  %v2553 = vpop.f32.mrb[0].mxu0
  %v2554 = vadd.f32 0.0, %v2553
  %v2555 = vpop.f32.mrb[0].mxu0
  %2556 = vmatprep.mubr.f32.mxu0 0.0
  %2557 = vmatmul.mubr.f32.gmra.mrb[0].mxu0 %v2082
  %v2558 = vpop.f32.mrb[0].mxu0
  %v2559 = vadd.f32 0.0, %v2558
  %v2560 = vpop.f32.mrb[0].mxu0
  %2561 = vmatprep.mubr.f32.mxu0 0.0
  %2562 = vmatmul.mubr.f32.gmra.mrb[0].mxu0 %v2085
  %v2563 = vpop.f32.mrb[0].mxu0
  %v2564 = vadd.f32 0.0, %v2563
  %v2565 = vpop.f32.mrb[0].mxu0
  %2566 = vmatprep.mubr.f32.mxu0 0.0
  %2567 = vmatmul.mubr.f32.gmra.mrb[0].mxu0 %v2088
  %v2568 = vpop.f32.mrb[0].mxu0
  %v2569 = vadd.f32 0.0, %v2568
  %v2570 = vpop.f32.mrb[0].mxu0
  %2571 = vmatprep.mubr.f32.mxu0 0.0
  %2572 = vmatmul.mubr.f32.gmra.mrb[0].mxu0 %v2091
  %v2573 = vpop.f32.mrb[0].mxu0
  %v2574 = vadd.f32 0.0, %v2573
  %v2575 = vpop.f32.mrb[0].mxu0
  %2576 = vmatprep.mubr.f32.mxu0 0.0
  %2577 = vmatmul.mubr.f32.gmra.mrb[0].mxu0 %v2094
  %v2578 = vpop.f32.mrb[0].mxu0
  %v2579 = vadd.f32 0.0, %v2578
  %v2580 = vpop.f32.mrb[0].mxu0
  %2581 = vmatprep.mubr.f32.mxu0 0.0
  %2582 = vmatmul.mubr.f32.gmra.mrb[0].mxu0 %v2480
  %v2583 = vpop.f32.mrb[0].mxu0
  %v2584 = vadd.f32 0.0, %v2583
  %v2585 = vpop.f32.mrb[0].mxu0
  %2586 = vdwg.mxu0
  %v2588 = vrot.slane %v1918, 1
  %v2589 = vrot.slane %v1919, 1
  %v2590 = vsel %vm779, %v2588, %v2589
  %2591 = vrot.lane.b32.xlu0 %v2236, 16
  %v2592 = vpop.permute.xlu0 %2591
  %2594 = vrot.lane.b32.xlu0 %v1918, 32
  %v2595 = vpop.permute.xlu0 %2594
  %2597 = vrot.lane.b32.xlu0 %v2590, 48
  %v2598 = vpop.permute.xlu0 %2597
  %v2600 = vsel %vm75, %v1915, %v2592
  %v2601 = vsel %vm29, %v2600, %v2595
  %v2602 = vsel %vm2063, %v2601, %v2598
  %v2604 = vsel %vm994, %v2602, 0
  %2606 = vmatprep.subr.mxu0 0.0
  %2607 = vmatpush1.msra.mxu0 %v231
  %2608 = vmatprep.subr.mxu0 0.0
  %2609 = vmatpush1.msra.mxu0 %v232
  %2610 = vmatprep.subr.mxu0 0.0
  %2611 = vmatpush1.msra.mxu0 %v233
  %2612 = vmatprep.subr.mxu0 0.0
  %2613 = vmatpush1.msra.mxu0 %v234
  %2614 = vmatprep.subr.mxu0 0.0
  %2615 = vmatpush1.msra.mxu0 %v235
  %2616 = vmatprep.subr.mxu0 0.0
  %2617 = vmatpush1.msra.mxu0 %v236
  %2618 = vmatprep.subr.mxu0 0.0
  %2619 = vmatpush1.msra.mxu0 %v237
  %2620 = vmatprep.subr.mxu0 0.0
  %2621 = vmatpush1.msra.mxu0 %v238
  %2622 = vmatprep.subr.mxu0 0.0
  %2623 = vmatpush1.msra.mxu0 0.0
  %2624 = vmatprep.subr.mxu0 0.0
  %2625 = vmatpush1.msra.mxu0 0.0
  %2626 = vmatprep.subr.mxu0 0.0
  %2627 = vmatpush1.msra.mxu0 0.0
  %2628 = vmatprep.subr.mxu0 0.0
  %2629 = vmatpush1.msra.mxu0 0.0
  %2630 = vmatprep.subr.mxu0 0.0
  %2631 = vmatpush1.msra.mxu0 0.0
  %2632 = vmatprep.subr.mxu0 0.0
  %2633 = vmatpush1.msra.mxu0 0.0
  %2634 = vmatprep.subr.mxu0 0.0
  %2635 = vmatpush1.msra.mxu0 0.0
  %2636 = vmatprep.subr.mxu0 0.0
  %2637 = vmatpush1.msra.mxu0 0.0
  %2638 = vmatprep.subr.mxu0 0.0
  %2639 = vmatpush1.msra.mxu0 0.0
  %2640 = vmatprep.subr.mxu0 0.0
  %2641 = vmatpush1.msra.mxu0 0.0
  %2642 = vmatprep.subr.mxu0 0.0
  %2643 = vmatpush1.msra.mxu0 0.0
  %2644 = vmatprep.subr.mxu0 0.0
  %2645 = vmatpush1.msra.mxu0 0.0
  %2646 = vmatprep.subr.mxu0 0.0
  %2647 = vmatpush1.msra.mxu0 0.0
  %2648 = vmatprep.subr.mxu0 0.0
  %2649 = vmatpush1.msra.mxu0 0.0
  %2650 = vmatprep.subr.mxu0 0.0
  %2651 = vmatpush1.msra.mxu0 0.0
  %2652 = vmatprep.subr.mxu0 0.0
  %2653 = vmatpush1.msra.mxu0 0.0
  %2654 = vmatprep.subr.mxu0 0.0
  %2655 = vmatpush1.msra.mxu0 0.0
  %2656 = vmatprep.subr.mxu0 0.0
  %2657 = vmatpush1.msra.mxu0 0.0
  %2658 = vmatprep.subr.mxu0 0.0
  %2659 = vmatpush1.msra.mxu0 0.0
  %2660 = vmatprep.subr.mxu0 0.0
  %2661 = vmatpush1.msra.mxu0 0.0
  %2662 = vmatprep.subr.mxu0 0.0
  %2663 = vmatpush1.msra.mxu0 0.0
  %2664 = vmatprep.subr.mxu0 0.0
  %2665 = vmatpush1.msra.mxu0 0.0
  %2666 = vmatprep.subr.mxu0 0.0
  %2667 = vmatpush1.msra.mxu0 0.0
  %2668 = vmatprep.subr.mxu0 0.0
  %2669 = vmatpush1.msra.mxu0 0.0
  %2670 = vmatprep.mubr.f32.mxu0 0.0
  %2671 = vmatmul.mubr.f32.gmra.mrb[0].mxu0 %v2337
  %v2672 = vpop.f32.mrb[0].mxu0
  %v2673 = vadd.f32 0.0, %v2672
  %v2674 = vpop.f32.mrb[0].mxu0
  %2675 = vmatprep.mubr.f32.mxu0 0.0
  %2676 = vmatmul.mubr.f32.gmra.mrb[0].mxu0 %v2340
  %v2677 = vpop.f32.mrb[0].mxu0
  %v2678 = vadd.f32 0.0, %v2677
  %v2679 = vpop.f32.mrb[0].mxu0
  %2680 = vmatprep.mubr.f32.mxu0 0.0
  %2681 = vmatmul.mubr.f32.gmra.mrb[0].mxu0 %v2343
  %v2682 = vpop.f32.mrb[0].mxu0
  %v2683 = vadd.f32 0.0, %v2682
  %v2684 = vpop.f32.mrb[0].mxu0
  %2685 = vmatprep.mubr.f32.mxu0 0.0
  %2686 = vmatmul.mubr.f32.gmra.mrb[0].mxu0 %v2346
  %v2687 = vpop.f32.mrb[0].mxu0
  %v2688 = vadd.f32 0.0, %v2687
  %v2689 = vpop.f32.mrb[0].mxu0
  %2690 = vmatprep.mubr.f32.mxu0 0.0
  %2691 = vmatmul.mubr.f32.gmra.mrb[0].mxu0 %v2349
  %v2692 = vpop.f32.mrb[0].mxu0
  %v2693 = vadd.f32 0.0, %v2692
  %v2694 = vpop.f32.mrb[0].mxu0
  %2695 = vmatprep.mubr.f32.mxu0 0.0
  %2696 = vmatmul.mubr.f32.gmra.mrb[0].mxu0 %v2352
  %v2697 = vpop.f32.mrb[0].mxu0
  %v2698 = vadd.f32 0.0, %v2697
  %v2699 = vpop.f32.mrb[0].mxu0
  %2700 = vmatprep.mubr.f32.mxu0 0.0
  %2701 = vmatmul.mubr.f32.gmra.mrb[0].mxu0 %v2355
  %v2702 = vpop.f32.mrb[0].mxu0
  %v2703 = vadd.f32 0.0, %v2702
  %v2704 = vpop.f32.mrb[0].mxu0
  %2705 = vmatprep.mubr.f32.mxu0 0.0
  %2706 = vmatmul.mubr.f32.gmra.mrb[0].mxu0 %v2604
  %v2707 = vpop.f32.mrb[0].mxu0
  %v2708 = vadd.f32 0.0, %v2707
  %v2709 = vpop.f32.mrb[0].mxu0
  %2710 = vdwg.mxu0
  %s2711 = scalar_lea.vmem [#allocation3], 240
  %v2712 = vld [vmem:[%s2711] sm:$0xff]
  %v2713 = vld [vmem:[%s2711 + $0x8] sm:$0xff]
  %v2714 = vld [vmem:[%s2711 + $0x10] sm:$0xff]
  %v2715 = vld [vmem:[%s2711 + $0x18] sm:$0xff]
  %v2716 = vld [vmem:[%s2711 + $0x20] sm:$0xff]
  %v2717 = vld [vmem:[%s2711 + $0x28] sm:$0xff]
  %v2718 = vld [vmem:[%s2711 + $0x30] sm:$0xff]
  %v2719 = vld [vmem:[%s2711 + $0x38] sm:$0xff]
  %v2720 = vld [vmem:[%s2711 + $0x40] sm:$0xff]
  %v2721 = vld [vmem:[%s2711 + $0x48] sm:$0xff]
  %v2722 = vld [vmem:[%s2711 + $0x50] sm:$0xff]
  %v2723 = vld [vmem:[%s2711 + $0x58] sm:$0xff]
  %v2724 = vld [vmem:[%s2711 + $0x60] sm:$0xff]
  %v2725 = vld [vmem:[%s2711 + $0x68] sm:$0xff]
  %v2726 = vld [vmem:[%s2711 + $0x70] sm:$0xff]
  %v2727 = vld [vmem:[%s2711 + $0x78] sm:$0xff]
  %v2728 = vld [vmem:[%s2711 + $0x80] sm:$0xff]
  %v2729 = vld [vmem:[%s2711 + $0x88] sm:$0xff]
  %v2730 = vld [vmem:[%s2711 + $0x90] sm:$0xff]
  %v2731 = vld [vmem:[%s2711 + $0x98] sm:$0xff]
  %v2732 = vld [vmem:[%s2711 + $0xa0] sm:$0xff]
  %v2733 = vld [vmem:[%s2711 + $0xa8] sm:$0xff]
  %v2734 = vld [vmem:[%s2711 + $0xb0] sm:$0xff]
  %v2735 = vld [vmem:[%s2711 + $0xb8] sm:$0xff]
  %v2736 = vld [vmem:[%s2711 + $0xc0] sm:$0xff]
  %v2737 = vld [vmem:[%s2711 + $0xc8] sm:$0xff]
  %v2738 = vld [vmem:[%s2711 + $0xd0] sm:$0xff]
  %v2739 = vld [vmem:[%s2711 + $0xd8] sm:$0xff]
  %v2740 = vld [vmem:[%s2711 + $0xe0] sm:$0xff]
  %v2741 = vld [vmem:[%s2711 + $0xe8] sm:$0xff]
  %v2758 = vrot.slane %v2712, 7
  %v2759 = vrot.slane %v2713, 7
  %v2760 = vsel %vm1936, %v2758, %v2759
  %v2761 = vrot.slane %v2715, 7
  %v2762 = vrot.slane %v2716, 7
  %v2763 = vsel %vm1936, %v2761, %v2762
  %v2764 = vrot.slane %v2718, 7
  %v2765 = vrot.slane %v2719, 7
  %v2766 = vsel %vm1936, %v2764, %v2765
  %v2767 = vrot.slane %v2721, 7
  %v2768 = vrot.slane %v2722, 7
  %v2769 = vsel %vm1936, %v2767, %v2768
  %v2770 = vrot.slane %v2724, 7
  %v2771 = vrot.slane %v2725, 7
  %v2772 = vsel %vm1936, %v2770, %v2771
  %v2773 = vrot.slane %v2727, 7
  %v2774 = vrot.slane %v2728, 7
  %v2775 = vsel %vm1936, %v2773, %v2774
  %v2776 = vrot.slane %v2730, 7
  %v2777 = vrot.slane %v2731, 7
  %v2778 = vsel %vm1936, %v2776, %v2777
  %v2779 = vrot.slane %v2733, 7
  %v2780 = vrot.slane %v2734, 7
  %v2781 = vsel %vm1936, %v2779, %v2780
  %v2792 = vrot.slane %v2736, 7
  %v2793 = vrot.slane %v2737, 7
  %v2794 = vsel %vm1936, %v2792, %v2793
  %2796 = vrot.lane.b32.xlu0 %v2713, 16
  %v2797 = vpop.permute.xlu0 %2796
  %2798 = vrot.lane.b32.xlu0 %v2716, 16
  %v2799 = vpop.permute.xlu0 %2798
  %2800 = vrot.lane.b32.xlu0 %v2719, 16
  %v2801 = vpop.permute.xlu0 %2800
  %2802 = vrot.lane.b32.xlu0 %v2722, 16
  %v2803 = vpop.permute.xlu0 %2802
  %2804 = vrot.lane.b32.xlu0 %v2725, 16
  %v2805 = vpop.permute.xlu0 %2804
  %2806 = vrot.lane.b32.xlu0 %v2728, 16
  %v2807 = vpop.permute.xlu0 %2806
  %2808 = vrot.lane.b32.xlu0 %v2731, 16
  %v2809 = vpop.permute.xlu0 %2808
  %2810 = vrot.lane.b32.xlu0 %v2734, 16
  %v2811 = vpop.permute.xlu0 %2810
  %2820 = vrot.lane.b32.xlu0 %v2763, 32
  %v2821 = vpop.permute.xlu0 %2820
  %2822 = vrot.lane.b32.xlu0 %v2766, 32
  %v2823 = vpop.permute.xlu0 %2822
  %2824 = vrot.lane.b32.xlu0 %v2769, 32
  %v2825 = vpop.permute.xlu0 %2824
  %2826 = vrot.lane.b32.xlu0 %v2772, 32
  %v2827 = vpop.permute.xlu0 %2826
  %2828 = vrot.lane.b32.xlu0 %v2775, 32
  %v2829 = vpop.permute.xlu0 %2828
  %2830 = vrot.lane.b32.xlu0 %v2778, 32
  %v2831 = vpop.permute.xlu0 %2830
  %2832 = vrot.lane.b32.xlu0 %v2781, 32
  %v2833 = vpop.permute.xlu0 %2832
  %2834 = vrot.lane.b32.xlu0 %v2794, 32
  %v2835 = vpop.permute.xlu0 %2834
  %2844 = vrot.lane.b32.xlu0 %v2716, 48
  %v2845 = vpop.permute.xlu0 %2844
  %2846 = vrot.lane.b32.xlu0 %v2719, 48
  %v2847 = vpop.permute.xlu0 %2846
  %2848 = vrot.lane.b32.xlu0 %v2722, 48
  %v2849 = vpop.permute.xlu0 %2848
  %2850 = vrot.lane.b32.xlu0 %v2725, 48
  %v2851 = vpop.permute.xlu0 %2850
  %2852 = vrot.lane.b32.xlu0 %v2728, 48
  %v2853 = vpop.permute.xlu0 %2852
  %2854 = vrot.lane.b32.xlu0 %v2731, 48
  %v2855 = vpop.permute.xlu0 %2854
  %2856 = vrot.lane.b32.xlu0 %v2734, 48
  %v2857 = vpop.permute.xlu0 %2856
  %2858 = vrot.lane.b32.xlu0 %v2737, 48
  %v2859 = vpop.permute.xlu0 %2858
  %v2868 = vsel %vm75, %v2760, %v2797
  %v2869 = vsel %vm75, %v2763, %v2799
  %v2870 = vsel %vm75, %v2766, %v2801
  %v2871 = vsel %vm75, %v2769, %v2803
  %v2872 = vsel %vm75, %v2772, %v2805
  %v2873 = vsel %vm75, %v2775, %v2807
  %v2874 = vsel %vm75, %v2778, %v2809
  %v2875 = vsel %vm75, %v2781, %v2811
  %v2876 = vsel %vm29, %v2868, %v2821
  %v2877 = vsel %vm29, %v2869, %v2823
  %v2878 = vsel %vm29, %v2870, %v2825
  %v2879 = vsel %vm29, %v2871, %v2827
  %v2880 = vsel %vm29, %v2872, %v2829
  %v2881 = vsel %vm29, %v2873, %v2831
  %v2882 = vsel %vm29, %v2874, %v2833
  %v2883 = vsel %vm29, %v2875, %v2835
  %v2884 = vsel %vm2063, %v2876, %v2845
  %v2885 = vsel %vm2063, %v2877, %v2847
  %v2886 = vsel %vm2063, %v2878, %v2849
  %v2887 = vsel %vm2063, %v2879, %v2851
  %v2888 = vsel %vm2063, %v2880, %v2853
  %v2889 = vsel %vm2063, %v2881, %v2855
  %v2890 = vsel %vm2063, %v2882, %v2857
  %v2891 = vsel %vm2063, %v2883, %v2859
  %v2893 = vsel %vm994, %v2884, 0
  %v2896 = vsel %vm994, %v2885, 0
  %v2899 = vsel %vm994, %v2886, 0
  %v2902 = vsel %vm994, %v2887, 0
  %v2905 = vsel %vm994, %v2888, 0
  %v2908 = vsel %vm994, %v2889, 0
  %v2911 = vsel %vm994, %v2890, 0
  %v2914 = vsel %vm994, %v2891, 0
  %2916 = vmatprep.subr.mxu0 0.0
  %2917 = vmatpush1.msra.mxu0 %v204
  %2918 = vmatprep.subr.mxu0 0.0
  %2919 = vmatpush1.msra.mxu0 %v205
  %2920 = vmatprep.subr.mxu0 0.0
  %2921 = vmatpush1.msra.mxu0 %v206
  %2922 = vmatprep.subr.mxu0 0.0
  %2923 = vmatpush1.msra.mxu0 %v207
  %2924 = vmatprep.subr.mxu0 0.0
  %2925 = vmatpush1.msra.mxu0 %v208
  %2926 = vmatprep.subr.mxu0 0.0
  %2927 = vmatpush1.msra.mxu0 %v209
  %2928 = vmatprep.subr.mxu0 0.0
  %2929 = vmatpush1.msra.mxu0 %v210
  %2930 = vmatprep.subr.mxu0 0.0
  %2931 = vmatpush1.msra.mxu0 %v211
  %2932 = vmatprep.subr.mxu0 0.0
  %2933 = vmatpush1.msra.mxu0 0.0
  %2934 = vmatprep.subr.mxu0 0.0
  %2935 = vmatpush1.msra.mxu0 0.0
  %2936 = vmatprep.subr.mxu0 0.0
  %2937 = vmatpush1.msra.mxu0 0.0
  %2938 = vmatprep.subr.mxu0 0.0
  %2939 = vmatpush1.msra.mxu0 0.0
  %2940 = vmatprep.subr.mxu0 0.0
  %2941 = vmatpush1.msra.mxu0 0.0
  %2942 = vmatprep.subr.mxu0 0.0
  %2943 = vmatpush1.msra.mxu0 0.0
  %2944 = vmatprep.subr.mxu0 0.0
  %2945 = vmatpush1.msra.mxu0 0.0
  %2946 = vmatprep.subr.mxu0 0.0
  %2947 = vmatpush1.msra.mxu0 0.0
  %2948 = vmatprep.subr.mxu0 0.0
  %2949 = vmatpush1.msra.mxu0 0.0
  %2950 = vmatprep.subr.mxu0 0.0
  %2951 = vmatpush1.msra.mxu0 0.0
  %2952 = vmatprep.subr.mxu0 0.0
  %2953 = vmatpush1.msra.mxu0 0.0
  %2954 = vmatprep.subr.mxu0 0.0
  %2955 = vmatpush1.msra.mxu0 0.0
  %2956 = vmatprep.subr.mxu0 0.0
  %2957 = vmatpush1.msra.mxu0 0.0
  %2958 = vmatprep.subr.mxu0 0.0
  %2959 = vmatpush1.msra.mxu0 0.0
  %2960 = vmatprep.subr.mxu0 0.0
  %2961 = vmatpush1.msra.mxu0 0.0
  %2962 = vmatprep.subr.mxu0 0.0
  %2963 = vmatpush1.msra.mxu0 0.0
  %2964 = vmatprep.subr.mxu0 0.0
  %2965 = vmatpush1.msra.mxu0 0.0
  %2966 = vmatprep.subr.mxu0 0.0
  %2967 = vmatpush1.msra.mxu0 0.0
  %2968 = vmatprep.subr.mxu0 0.0
  %2969 = vmatpush1.msra.mxu0 0.0
  %2970 = vmatprep.subr.mxu0 0.0
  %2971 = vmatpush1.msra.mxu0 0.0
  %2972 = vmatprep.subr.mxu0 0.0
  %2973 = vmatpush1.msra.mxu0 0.0
  %2974 = vmatprep.subr.mxu0 0.0
  %2975 = vmatpush1.msra.mxu0 0.0
  %2976 = vmatprep.subr.mxu0 0.0
  %2977 = vmatpush1.msra.mxu0 0.0
  %2978 = vmatprep.subr.mxu0 0.0
  %2979 = vmatpush1.msra.mxu0 0.0
  %2980 = vmatprep.mubr.f32.mxu0 0.0
  %2981 = vmatmul.mubr.f32.gmra.mrb[0].mxu0 %v2893
  %v2982 = vpop.f32.mrb[0].mxu0
  %v2983 = vadd.f32 0.0, %v2982
  %v2984 = vpop.f32.mrb[0].mxu0
  %2985 = vmatprep.mubr.f32.mxu0 0.0
  %2986 = vmatmul.mubr.f32.gmra.mrb[0].mxu0 %v2896
  %v2987 = vpop.f32.mrb[0].mxu0
  %v2988 = vadd.f32 0.0, %v2987
  %v2989 = vpop.f32.mrb[0].mxu0
  %2990 = vmatprep.mubr.f32.mxu0 0.0
  %2991 = vmatmul.mubr.f32.gmra.mrb[0].mxu0 %v2899
  %v2992 = vpop.f32.mrb[0].mxu0
  %v2993 = vadd.f32 0.0, %v2992
  %v2994 = vpop.f32.mrb[0].mxu0
  %2995 = vmatprep.mubr.f32.mxu0 0.0
  %2996 = vmatmul.mubr.f32.gmra.mrb[0].mxu0 %v2902
  %v2997 = vpop.f32.mrb[0].mxu0
  %v2998 = vadd.f32 0.0, %v2997
  %v2999 = vpop.f32.mrb[0].mxu0
  %3000 = vmatprep.mubr.f32.mxu0 0.0
  %3001 = vmatmul.mubr.f32.gmra.mrb[0].mxu0 %v2905
  %v3002 = vpop.f32.mrb[0].mxu0
  %v3003 = vadd.f32 0.0, %v3002
  %v3004 = vpop.f32.mrb[0].mxu0
  %3005 = vmatprep.mubr.f32.mxu0 0.0
  %3006 = vmatmul.mubr.f32.gmra.mrb[0].mxu0 %v2908
  %v3007 = vpop.f32.mrb[0].mxu0
  %v3008 = vadd.f32 0.0, %v3007
  %v3009 = vpop.f32.mrb[0].mxu0
  %3010 = vmatprep.mubr.f32.mxu0 0.0
  %3011 = vmatmul.mubr.f32.gmra.mrb[0].mxu0 %v2911
  %v3012 = vpop.f32.mrb[0].mxu0
  %v3013 = vadd.f32 0.0, %v3012
  %v3014 = vpop.f32.mrb[0].mxu0
  %3015 = vmatprep.mubr.f32.mxu0 0.0
  %3016 = vmatmul.mubr.f32.gmra.mrb[0].mxu0 %v2914
  %v3017 = vpop.f32.mrb[0].mxu0
  %v3018 = vadd.f32 0.0, %v3017
  %v3019 = vpop.f32.mrb[0].mxu0
  %3020 = vdwg.mxu0
  %v3029 = vrot.slane %v2713, 1
  %v3030 = vrot.slane %v2714, 1
  %v3031 = vsel %vm779, %v3029, %v3030
  %v3032 = vrot.slane %v2716, 1
  %v3033 = vrot.slane %v2717, 1
  %v3034 = vsel %vm779, %v3032, %v3033
  %v3035 = vrot.slane %v2719, 1
  %v3036 = vrot.slane %v2720, 1
  %v3037 = vsel %vm779, %v3035, %v3036
  %v3038 = vrot.slane %v2722, 1
  %v3039 = vrot.slane %v2723, 1
  %v3040 = vsel %vm779, %v3038, %v3039
  %v3041 = vrot.slane %v2725, 1
  %v3042 = vrot.slane %v2726, 1
  %v3043 = vsel %vm779, %v3041, %v3042
  %v3044 = vrot.slane %v2728, 1
  %v3045 = vrot.slane %v2729, 1
  %v3046 = vsel %vm779, %v3044, %v3045
  %v3047 = vrot.slane %v2731, 1
  %v3048 = vrot.slane %v2732, 1
  %v3049 = vsel %vm779, %v3047, %v3048
  %v3050 = vrot.slane %v2734, 1
  %v3051 = vrot.slane %v2735, 1
  %v3052 = vsel %vm779, %v3050, %v3051
  %v3054 = vrot.slane %v2737, 1
  %v3055 = vrot.slane %v2738, 1
  %v3056 = vsel %vm779, %v3054, %v3055
  %3057 = vrot.lane.b32.xlu0 %v3031, 16
  %v3058 = vpop.permute.xlu0 %3057
  %3059 = vrot.lane.b32.xlu0 %v3034, 16
  %v3060 = vpop.permute.xlu0 %3059
  %3061 = vrot.lane.b32.xlu0 %v3037, 16
  %v3062 = vpop.permute.xlu0 %3061
  %3063 = vrot.lane.b32.xlu0 %v3040, 16
  %v3064 = vpop.permute.xlu0 %3063
  %3065 = vrot.lane.b32.xlu0 %v3043, 16
  %v3066 = vpop.permute.xlu0 %3065
  %3067 = vrot.lane.b32.xlu0 %v3046, 16
  %v3068 = vpop.permute.xlu0 %3067
  %3069 = vrot.lane.b32.xlu0 %v3049, 16
  %v3070 = vpop.permute.xlu0 %3069
  %3071 = vrot.lane.b32.xlu0 %v3052, 16
  %v3072 = vpop.permute.xlu0 %3071
  %3081 = vrot.lane.b32.xlu0 %v2716, 32
  %v3082 = vpop.permute.xlu0 %3081
  %3083 = vrot.lane.b32.xlu0 %v2719, 32
  %v3084 = vpop.permute.xlu0 %3083
  %3085 = vrot.lane.b32.xlu0 %v2722, 32
  %v3086 = vpop.permute.xlu0 %3085
  %3087 = vrot.lane.b32.xlu0 %v2725, 32
  %v3088 = vpop.permute.xlu0 %3087
  %3089 = vrot.lane.b32.xlu0 %v2728, 32
  %v3090 = vpop.permute.xlu0 %3089
  %3091 = vrot.lane.b32.xlu0 %v2731, 32
  %v3092 = vpop.permute.xlu0 %3091
  %3093 = vrot.lane.b32.xlu0 %v2734, 32
  %v3094 = vpop.permute.xlu0 %3093
  %3095 = vrot.lane.b32.xlu0 %v2737, 32
  %v3096 = vpop.permute.xlu0 %3095
  %3105 = vrot.lane.b32.xlu0 %v3034, 48
  %v3106 = vpop.permute.xlu0 %3105
  %3107 = vrot.lane.b32.xlu0 %v3037, 48
  %v3108 = vpop.permute.xlu0 %3107
  %3109 = vrot.lane.b32.xlu0 %v3040, 48
  %v3110 = vpop.permute.xlu0 %3109
  %3111 = vrot.lane.b32.xlu0 %v3043, 48
  %v3112 = vpop.permute.xlu0 %3111
  %3113 = vrot.lane.b32.xlu0 %v3046, 48
  %v3114 = vpop.permute.xlu0 %3113
  %3115 = vrot.lane.b32.xlu0 %v3049, 48
  %v3116 = vpop.permute.xlu0 %3115
  %3117 = vrot.lane.b32.xlu0 %v3052, 48
  %v3118 = vpop.permute.xlu0 %3117
  %3119 = vrot.lane.b32.xlu0 %v3056, 48
  %v3120 = vpop.permute.xlu0 %3119
  %v3129 = vsel %vm75, %v2713, %v3058
  %v3130 = vsel %vm75, %v2716, %v3060
  %v3131 = vsel %vm75, %v2719, %v3062
  %v3132 = vsel %vm75, %v2722, %v3064
  %v3133 = vsel %vm75, %v2725, %v3066
  %v3134 = vsel %vm75, %v2728, %v3068
  %v3135 = vsel %vm75, %v2731, %v3070
  %v3136 = vsel %vm75, %v2734, %v3072
  %v3137 = vsel %vm29, %v3129, %v3082
  %v3138 = vsel %vm29, %v3130, %v3084
  %v3139 = vsel %vm29, %v3131, %v3086
  %v3140 = vsel %vm29, %v3132, %v3088
  %v3141 = vsel %vm29, %v3133, %v3090
  %v3142 = vsel %vm29, %v3134, %v3092
  %v3143 = vsel %vm29, %v3135, %v3094
  %v3144 = vsel %vm29, %v3136, %v3096
  %v3145 = vsel %vm2063, %v3137, %v3106
  %v3146 = vsel %vm2063, %v3138, %v3108
  %v3147 = vsel %vm2063, %v3139, %v3110
  %v3148 = vsel %vm2063, %v3140, %v3112
  %v3149 = vsel %vm2063, %v3141, %v3114
  %v3150 = vsel %vm2063, %v3142, %v3116
  %v3151 = vsel %vm2063, %v3143, %v3118
  %v3152 = vsel %vm2063, %v3144, %v3120
  %v3154 = vsel %vm994, %v3145, 0
  %v3157 = vsel %vm994, %v3146, 0
  %v3160 = vsel %vm994, %v3147, 0
  %v3163 = vsel %vm994, %v3148, 0
  %v3166 = vsel %vm994, %v3149, 0
  %v3169 = vsel %vm994, %v3150, 0
  %v3172 = vsel %vm994, %v3151, 0
  %v3175 = vsel %vm994, %v3152, 0
  %3177 = vmatprep.subr.mxu0 0.0
  %3178 = vmatpush1.msra.mxu0 %v213
  %3179 = vmatprep.subr.mxu0 0.0
  %3180 = vmatpush1.msra.mxu0 %v214
  %3181 = vmatprep.subr.mxu0 0.0
  %3182 = vmatpush1.msra.mxu0 %v215
  %3183 = vmatprep.subr.mxu0 0.0
  %3184 = vmatpush1.msra.mxu0 %v216
  %3185 = vmatprep.subr.mxu0 0.0
  %3186 = vmatpush1.msra.mxu0 %v217
  %3187 = vmatprep.subr.mxu0 0.0
  %3188 = vmatpush1.msra.mxu0 %v218
  %3189 = vmatprep.subr.mxu0 0.0
  %3190 = vmatpush1.msra.mxu0 %v219
  %3191 = vmatprep.subr.mxu0 0.0
  %3192 = vmatpush1.msra.mxu0 %v220
  %3193 = vmatprep.subr.mxu0 0.0
  %3194 = vmatpush1.msra.mxu0 0.0
  %3195 = vmatprep.subr.mxu0 0.0
  %3196 = vmatpush1.msra.mxu0 0.0
  %3197 = vmatprep.subr.mxu0 0.0
  %3198 = vmatpush1.msra.mxu0 0.0
  %3199 = vmatprep.subr.mxu0 0.0
  %3200 = vmatpush1.msra.mxu0 0.0
  %3201 = vmatprep.subr.mxu0 0.0
  %3202 = vmatpush1.msra.mxu0 0.0
  %3203 = vmatprep.subr.mxu0 0.0
  %3204 = vmatpush1.msra.mxu0 0.0
  %3205 = vmatprep.subr.mxu0 0.0
  %3206 = vmatpush1.msra.mxu0 0.0
  %3207 = vmatprep.subr.mxu0 0.0
  %3208 = vmatpush1.msra.mxu0 0.0
  %3209 = vmatprep.subr.mxu0 0.0
  %3210 = vmatpush1.msra.mxu0 0.0
  %3211 = vmatprep.subr.mxu0 0.0
  %3212 = vmatpush1.msra.mxu0 0.0
  %3213 = vmatprep.subr.mxu0 0.0
  %3214 = vmatpush1.msra.mxu0 0.0
  %3215 = vmatprep.subr.mxu0 0.0
  %3216 = vmatpush1.msra.mxu0 0.0
  %3217 = vmatprep.subr.mxu0 0.0
  %3218 = vmatpush1.msra.mxu0 0.0
  %3219 = vmatprep.subr.mxu0 0.0
  %3220 = vmatpush1.msra.mxu0 0.0
  %3221 = vmatprep.subr.mxu0 0.0
  %3222 = vmatpush1.msra.mxu0 0.0
  %3223 = vmatprep.subr.mxu0 0.0
  %3224 = vmatpush1.msra.mxu0 0.0
  %3225 = vmatprep.subr.mxu0 0.0
  %3226 = vmatpush1.msra.mxu0 0.0
  %3227 = vmatprep.subr.mxu0 0.0
  %3228 = vmatpush1.msra.mxu0 0.0
  %3229 = vmatprep.subr.mxu0 0.0
  %3230 = vmatpush1.msra.mxu0 0.0
  %3231 = vmatprep.subr.mxu0 0.0
  %3232 = vmatpush1.msra.mxu0 0.0
  %3233 = vmatprep.subr.mxu0 0.0
  %3234 = vmatpush1.msra.mxu0 0.0
  %3235 = vmatprep.subr.mxu0 0.0
  %3236 = vmatpush1.msra.mxu0 0.0
  %3237 = vmatprep.subr.mxu0 0.0
  %3238 = vmatpush1.msra.mxu0 0.0
  %3239 = vmatprep.subr.mxu0 0.0
  %3240 = vmatpush1.msra.mxu0 0.0
  %3241 = vmatprep.mubr.f32.mxu0 0.0
  %3242 = vmatmul.mubr.f32.gmra.mrb[0].mxu0 %v3154
  %v3243 = vpop.f32.mrb[0].mxu0
  %v3244 = vadd.f32 0.0, %v3243
  %v3245 = vpop.f32.mrb[0].mxu0
  %3246 = vmatprep.mubr.f32.mxu0 0.0
  %3247 = vmatmul.mubr.f32.gmra.mrb[0].mxu0 %v3157
  %v3248 = vpop.f32.mrb[0].mxu0
  %v3249 = vadd.f32 0.0, %v3248
  %v3250 = vpop.f32.mrb[0].mxu0
  %3251 = vmatprep.mubr.f32.mxu0 0.0
  %3252 = vmatmul.mubr.f32.gmra.mrb[0].mxu0 %v3160
  %v3253 = vpop.f32.mrb[0].mxu0
  %v3254 = vadd.f32 0.0, %v3253
  %v3255 = vpop.f32.mrb[0].mxu0
  %3256 = vmatprep.mubr.f32.mxu0 0.0
  %3257 = vmatmul.mubr.f32.gmra.mrb[0].mxu0 %v3163
  %v3258 = vpop.f32.mrb[0].mxu0
  %v3259 = vadd.f32 0.0, %v3258
  %v3260 = vpop.f32.mrb[0].mxu0
  %3261 = vmatprep.mubr.f32.mxu0 0.0
  %3262 = vmatmul.mubr.f32.gmra.mrb[0].mxu0 %v3166
  %v3263 = vpop.f32.mrb[0].mxu0
  %v3264 = vadd.f32 0.0, %v3263
  %v3265 = vpop.f32.mrb[0].mxu0
  %3266 = vmatprep.mubr.f32.mxu0 0.0
  %3267 = vmatmul.mubr.f32.gmra.mrb[0].mxu0 %v3169
  %v3268 = vpop.f32.mrb[0].mxu0
  %v3269 = vadd.f32 0.0, %v3268
  %v3270 = vpop.f32.mrb[0].mxu0
  %3271 = vmatprep.mubr.f32.mxu0 0.0
  %3272 = vmatmul.mubr.f32.gmra.mrb[0].mxu0 %v3172
  %v3273 = vpop.f32.mrb[0].mxu0
  %v3274 = vadd.f32 0.0, %v3273
  %v3275 = vpop.f32.mrb[0].mxu0
  %3276 = vmatprep.mubr.f32.mxu0 0.0
  %3277 = vmatmul.mubr.f32.gmra.mrb[0].mxu0 %v3175
  %v3278 = vpop.f32.mrb[0].mxu0
  %v3279 = vadd.f32 0.0, %v3278
  %v3280 = vpop.f32.mrb[0].mxu0
  %3281 = vdwg.mxu0
  %v3284 = vrot.slane %v2739, 7
  %v3285 = vrot.slane %v2740, 7
  %v3286 = vsel %vm1936, %v3284, %v3285
  %3287 = vrot.lane.b32.xlu0 %v2737, 16
  %v3288 = vpop.permute.xlu0 %3287
  %3290 = vrot.lane.b32.xlu0 %v3286, 32
  %v3291 = vpop.permute.xlu0 %3290
  %3293 = vrot.lane.b32.xlu0 %v2740, 48
  %v3294 = vpop.permute.xlu0 %3293
  %v3296 = vsel %vm75, %v2794, %v3288
  %v3297 = vsel %vm29, %v3296, %v3291
  %v3298 = vsel %vm2063, %v3297, %v3294
  %v3300 = vsel %vm994, %v3298, 0
  %3302 = vmatprep.subr.mxu0 0.0
  %3303 = vmatpush1.msra.mxu0 %v222
  %3304 = vmatprep.subr.mxu0 0.0
  %3305 = vmatpush1.msra.mxu0 %v223
  %3306 = vmatprep.subr.mxu0 0.0
  %3307 = vmatpush1.msra.mxu0 %v224
  %3308 = vmatprep.subr.mxu0 0.0
  %3309 = vmatpush1.msra.mxu0 %v225
  %3310 = vmatprep.subr.mxu0 0.0
  %3311 = vmatpush1.msra.mxu0 %v226
  %3312 = vmatprep.subr.mxu0 0.0
  %3313 = vmatpush1.msra.mxu0 %v227
  %3314 = vmatprep.subr.mxu0 0.0
  %3315 = vmatpush1.msra.mxu0 %v228
  %3316 = vmatprep.subr.mxu0 0.0
  %3317 = vmatpush1.msra.mxu0 %v229
  %3318 = vmatprep.subr.mxu0 0.0
  %3319 = vmatpush1.msra.mxu0 0.0
  %3320 = vmatprep.subr.mxu0 0.0
  %3321 = vmatpush1.msra.mxu0 0.0
  %3322 = vmatprep.subr.mxu0 0.0
  %3323 = vmatpush1.msra.mxu0 0.0
  %3324 = vmatprep.subr.mxu0 0.0
  %3325 = vmatpush1.msra.mxu0 0.0
  %3326 = vmatprep.subr.mxu0 0.0
  %3327 = vmatpush1.msra.mxu0 0.0
  %3328 = vmatprep.subr.mxu0 0.0
  %3329 = vmatpush1.msra.mxu0 0.0
  %3330 = vmatprep.subr.mxu0 0.0
  %3331 = vmatpush1.msra.mxu0 0.0
  %3332 = vmatprep.subr.mxu0 0.0
  %3333 = vmatpush1.msra.mxu0 0.0
  %3334 = vmatprep.subr.mxu0 0.0
  %3335 = vmatpush1.msra.mxu0 0.0
  %3336 = vmatprep.subr.mxu0 0.0
  %3337 = vmatpush1.msra.mxu0 0.0
  %3338 = vmatprep.subr.mxu0 0.0
  %3339 = vmatpush1.msra.mxu0 0.0
  %3340 = vmatprep.subr.mxu0 0.0
  %3341 = vmatpush1.msra.mxu0 0.0
  %3342 = vmatprep.subr.mxu0 0.0
  %3343 = vmatpush1.msra.mxu0 0.0
  %3344 = vmatprep.subr.mxu0 0.0
  %3345 = vmatpush1.msra.mxu0 0.0
  %3346 = vmatprep.subr.mxu0 0.0
  %3347 = vmatpush1.msra.mxu0 0.0
  %3348 = vmatprep.subr.mxu0 0.0
  %3349 = vmatpush1.msra.mxu0 0.0
  %3350 = vmatprep.subr.mxu0 0.0
  %3351 = vmatpush1.msra.mxu0 0.0
  %3352 = vmatprep.subr.mxu0 0.0
  %3353 = vmatpush1.msra.mxu0 0.0
  %3354 = vmatprep.subr.mxu0 0.0
  %3355 = vmatpush1.msra.mxu0 0.0
  %3356 = vmatprep.subr.mxu0 0.0
  %3357 = vmatpush1.msra.mxu0 0.0
  %3358 = vmatprep.subr.mxu0 0.0
  %3359 = vmatpush1.msra.mxu0 0.0
  %3360 = vmatprep.subr.mxu0 0.0
  %3361 = vmatpush1.msra.mxu0 0.0
  %3362 = vmatprep.subr.mxu0 0.0
  %3363 = vmatpush1.msra.mxu0 0.0
  %3364 = vmatprep.subr.mxu0 0.0
  %3365 = vmatpush1.msra.mxu0 0.0
  %3366 = vmatprep.mubr.f32.mxu0 0.0
  %3367 = vmatmul.mubr.f32.gmra.mrb[0].mxu0 %v2896
  %v3368 = vpop.f32.mrb[0].mxu0
  %v3369 = vadd.f32 0.0, %v3368
  %v3370 = vpop.f32.mrb[0].mxu0
  %3371 = vmatprep.mubr.f32.mxu0 0.0
  %3372 = vmatmul.mubr.f32.gmra.mrb[0].mxu0 %v2899
  %v3373 = vpop.f32.mrb[0].mxu0
  %v3374 = vadd.f32 0.0, %v3373
  %v3375 = vpop.f32.mrb[0].mxu0
  %3376 = vmatprep.mubr.f32.mxu0 0.0
  %3377 = vmatmul.mubr.f32.gmra.mrb[0].mxu0 %v2902
  %v3378 = vpop.f32.mrb[0].mxu0
  %v3379 = vadd.f32 0.0, %v3378
  %v3380 = vpop.f32.mrb[0].mxu0
  %3381 = vmatprep.mubr.f32.mxu0 0.0
  %3382 = vmatmul.mubr.f32.gmra.mrb[0].mxu0 %v2905
  %v3383 = vpop.f32.mrb[0].mxu0
  %v3384 = vadd.f32 0.0, %v3383
  %v3385 = vpop.f32.mrb[0].mxu0
  %3386 = vmatprep.mubr.f32.mxu0 0.0
  %3387 = vmatmul.mubr.f32.gmra.mrb[0].mxu0 %v2908
  %v3388 = vpop.f32.mrb[0].mxu0
  %v3389 = vadd.f32 0.0, %v3388
  %v3390 = vpop.f32.mrb[0].mxu0
  %3391 = vmatprep.mubr.f32.mxu0 0.0
  %3392 = vmatmul.mubr.f32.gmra.mrb[0].mxu0 %v2911
  %v3393 = vpop.f32.mrb[0].mxu0
  %v3394 = vadd.f32 0.0, %v3393
  %v3395 = vpop.f32.mrb[0].mxu0
  %3396 = vmatprep.mubr.f32.mxu0 0.0
  %3397 = vmatmul.mubr.f32.gmra.mrb[0].mxu0 %v2914
  %v3398 = vpop.f32.mrb[0].mxu0
  %v3399 = vadd.f32 0.0, %v3398
  %v3400 = vpop.f32.mrb[0].mxu0
  %3401 = vmatprep.mubr.f32.mxu0 0.0
  %3402 = vmatmul.mubr.f32.gmra.mrb[0].mxu0 %v3300
  %v3403 = vpop.f32.mrb[0].mxu0
  %v3404 = vadd.f32 0.0, %v3403
  %v3405 = vpop.f32.mrb[0].mxu0
  %3406 = vdwg.mxu0
  %v3408 = vrot.slane %v2740, 1
  %v3409 = vrot.slane %v2741, 1
  %v3410 = vsel %vm779, %v3408, %v3409
  %3411 = vrot.lane.b32.xlu0 %v3056, 16
  %v3412 = vpop.permute.xlu0 %3411
  %3414 = vrot.lane.b32.xlu0 %v2740, 32
  %v3415 = vpop.permute.xlu0 %3414
  %3417 = vrot.lane.b32.xlu0 %v3410, 48
  %v3418 = vpop.permute.xlu0 %3417
  %v3420 = vsel %vm75, %v2737, %v3412
  %v3421 = vsel %vm29, %v3420, %v3415
  %v3422 = vsel %vm2063, %v3421, %v3418
  %v3424 = vsel %vm994, %v3422, 0
  %3426 = vmatprep.subr.mxu0 0.0
  %3427 = vmatpush1.msra.mxu0 %v231
  %3428 = vmatprep.subr.mxu0 0.0
  %3429 = vmatpush1.msra.mxu0 %v232
  %3430 = vmatprep.subr.mxu0 0.0
  %3431 = vmatpush1.msra.mxu0 %v233
  %3432 = vmatprep.subr.mxu0 0.0
  %3433 = vmatpush1.msra.mxu0 %v234
  %3434 = vmatprep.subr.mxu0 0.0
  %3435 = vmatpush1.msra.mxu0 %v235
  %3436 = vmatprep.subr.mxu0 0.0
  %3437 = vmatpush1.msra.mxu0 %v236
  %3438 = vmatprep.subr.mxu0 0.0
  %3439 = vmatpush1.msra.mxu0 %v237
  %3440 = vmatprep.subr.mxu0 0.0
  %3441 = vmatpush1.msra.mxu0 %v238
  %3442 = vmatprep.subr.mxu0 0.0
  %3443 = vmatpush1.msra.mxu0 0.0
  %3444 = vmatprep.subr.mxu0 0.0
  %3445 = vmatpush1.msra.mxu0 0.0
  %3446 = vmatprep.subr.mxu0 0.0
  %3447 = vmatpush1.msra.mxu0 0.0
  %3448 = vmatprep.subr.mxu0 0.0
  %3449 = vmatpush1.msra.mxu0 0.0
  %3450 = vmatprep.subr.mxu0 0.0
  %3451 = vmatpush1.msra.mxu0 0.0
  %3452 = vmatprep.subr.mxu0 0.0
  %3453 = vmatpush1.msra.mxu0 0.0
  %3454 = vmatprep.subr.mxu0 0.0
  %3455 = vmatpush1.msra.mxu0 0.0
  %3456 = vmatprep.subr.mxu0 0.0
  %3457 = vmatpush1.msra.mxu0 0.0
  %3458 = vmatprep.subr.mxu0 0.0
  %3459 = vmatpush1.msra.mxu0 0.0
  %3460 = vmatprep.subr.mxu0 0.0
  %3461 = vmatpush1.msra.mxu0 0.0
  %3462 = vmatprep.subr.mxu0 0.0
  %3463 = vmatpush1.msra.mxu0 0.0
  %3464 = vmatprep.subr.mxu0 0.0
  %3465 = vmatpush1.msra.mxu0 0.0
  %3466 = vmatprep.subr.mxu0 0.0
  %3467 = vmatpush1.msra.mxu0 0.0
  %3468 = vmatprep.subr.mxu0 0.0
  %3469 = vmatpush1.msra.mxu0 0.0
  %3470 = vmatprep.subr.mxu0 0.0
  %3471 = vmatpush1.msra.mxu0 0.0
  %3472 = vmatprep.subr.mxu0 0.0
  %3473 = vmatpush1.msra.mxu0 0.0
  %3474 = vmatprep.subr.mxu0 0.0
  %3475 = vmatpush1.msra.mxu0 0.0
  %3476 = vmatprep.subr.mxu0 0.0
  %3477 = vmatpush1.msra.mxu0 0.0
  %3478 = vmatprep.subr.mxu0 0.0
  %3479 = vmatpush1.msra.mxu0 0.0
  %3480 = vmatprep.subr.mxu0 0.0
  %3481 = vmatpush1.msra.mxu0 0.0
  %3482 = vmatprep.subr.mxu0 0.0
  %3483 = vmatpush1.msra.mxu0 0.0
  %3484 = vmatprep.subr.mxu0 0.0
  %3485 = vmatpush1.msra.mxu0 0.0
  %3486 = vmatprep.subr.mxu0 0.0
  %3487 = vmatpush1.msra.mxu0 0.0
  %3488 = vmatprep.subr.mxu0 0.0
  %3489 = vmatpush1.msra.mxu0 0.0
  %3490 = vmatprep.mubr.f32.mxu0 0.0
  %3491 = vmatmul.mubr.f32.gmra.mrb[0].mxu0 %v3157
  %v3492 = vpop.f32.mrb[0].mxu0
  %v3493 = vadd.f32 0.0, %v3492
  %v3494 = vpop.f32.mrb[0].mxu0
  %3495 = vmatprep.mubr.f32.mxu0 0.0
  %3496 = vmatmul.mubr.f32.gmra.mrb[0].mxu0 %v3160
  %v3497 = vpop.f32.mrb[0].mxu0
  %v3498 = vadd.f32 0.0, %v3497
  %v3499 = vpop.f32.mrb[0].mxu0
  %3500 = vmatprep.mubr.f32.mxu0 0.0
  %3501 = vmatmul.mubr.f32.gmra.mrb[0].mxu0 %v3163
  %v3502 = vpop.f32.mrb[0].mxu0
  %v3503 = vadd.f32 0.0, %v3502
  %v3504 = vpop.f32.mrb[0].mxu0
  %3505 = vmatprep.mubr.f32.mxu0 0.0
  %3506 = vmatmul.mubr.f32.gmra.mrb[0].mxu0 %v3166
  %v3507 = vpop.f32.mrb[0].mxu0
  %v3508 = vadd.f32 0.0, %v3507
  %v3509 = vpop.f32.mrb[0].mxu0
  %3510 = vmatprep.mubr.f32.mxu0 0.0
  %3511 = vmatmul.mubr.f32.gmra.mrb[0].mxu0 %v3169
  %v3512 = vpop.f32.mrb[0].mxu0
  %v3513 = vadd.f32 0.0, %v3512
  %v3514 = vpop.f32.mrb[0].mxu0
  %3515 = vmatprep.mubr.f32.mxu0 0.0
  %3516 = vmatmul.mubr.f32.gmra.mrb[0].mxu0 %v3172
  %v3517 = vpop.f32.mrb[0].mxu0
  %v3518 = vadd.f32 0.0, %v3517
  %v3519 = vpop.f32.mrb[0].mxu0
  %3520 = vmatprep.mubr.f32.mxu0 0.0
  %3521 = vmatmul.mubr.f32.gmra.mrb[0].mxu0 %v3175
  %v3522 = vpop.f32.mrb[0].mxu0
  %v3523 = vadd.f32 0.0, %v3522
  %v3524 = vpop.f32.mrb[0].mxu0
  %3525 = vmatprep.mubr.f32.mxu0 0.0
  %3526 = vmatmul.mubr.f32.gmra.mrb[0].mxu0 %v3424
  %v3527 = vpop.f32.mrb[0].mxu0
  %v3528 = vadd.f32 0.0, %v3527
  %v3529 = vpop.f32.mrb[0].mxu0
  %3530 = vdwg.mxu0
  %3539 = vrot.lane.b32.xlu0 %v2424, 1
  %v3540 = vpop.permute.xlu0 %3539
  %3541 = vrot.lane.b32.xlu0 %v2429, 1
  %v3542 = vpop.permute.xlu0 %3541
  %3543 = vrot.lane.b32.xlu0 %v2434, 1
  %v3544 = vpop.permute.xlu0 %3543
  %3545 = vrot.lane.b32.xlu0 %v2439, 1
  %v3546 = vpop.permute.xlu0 %3545
  %3547 = vrot.lane.b32.xlu0 %v2444, 1
  %v3548 = vpop.permute.xlu0 %3547
  %3549 = vrot.lane.b32.xlu0 %v2449, 1
  %v3550 = vpop.permute.xlu0 %3549
  %3551 = vrot.lane.b32.xlu0 %v2454, 1
  %v3552 = vpop.permute.xlu0 %3551
  %3553 = vrot.lane.b32.xlu0 %v2459, 1
  %v3554 = vpop.permute.xlu0 %3553
  %3571 = vrot.lane.b32.xlu0 %v2549, 2
  %v3572 = vpop.permute.xlu0 %3571
  %3573 = vrot.lane.b32.xlu0 %v2554, 2
  %v3574 = vpop.permute.xlu0 %3573
  %3575 = vrot.lane.b32.xlu0 %v2559, 2
  %v3576 = vpop.permute.xlu0 %3575
  %3577 = vrot.lane.b32.xlu0 %v2564, 2
  %v3578 = vpop.permute.xlu0 %3577
  %3579 = vrot.lane.b32.xlu0 %v2569, 2
  %v3580 = vpop.permute.xlu0 %3579
  %3581 = vrot.lane.b32.xlu0 %v2574, 2
  %v3582 = vpop.permute.xlu0 %3581
  %3583 = vrot.lane.b32.xlu0 %v2579, 2
  %v3584 = vpop.permute.xlu0 %3583
  %3585 = vrot.lane.b32.xlu0 %v2584, 2
  %v3586 = vpop.permute.xlu0 %3585
  %3603 = vrot.lane.b32.xlu0 %v2673, 3
  %v3604 = vpop.permute.xlu0 %3603
  %3605 = vrot.lane.b32.xlu0 %v2678, 3
  %v3606 = vpop.permute.xlu0 %3605
  %3607 = vrot.lane.b32.xlu0 %v2683, 3
  %v3608 = vpop.permute.xlu0 %3607
  %3609 = vrot.lane.b32.xlu0 %v2688, 3
  %v3610 = vpop.permute.xlu0 %3609
  %3611 = vrot.lane.b32.xlu0 %v2693, 3
  %v3612 = vpop.permute.xlu0 %3611
  %3613 = vrot.lane.b32.xlu0 %v2698, 3
  %v3614 = vpop.permute.xlu0 %3613
  %3615 = vrot.lane.b32.xlu0 %v2703, 3
  %v3616 = vpop.permute.xlu0 %3615
  %3617 = vrot.lane.b32.xlu0 %v2708, 3
  %v3618 = vpop.permute.xlu0 %3617
  %3635 = vrot.lane.b32.xlu0 %v2983, 4
  %v3636 = vpop.permute.xlu0 %3635
  %3637 = vrot.lane.b32.xlu0 %v2988, 4
  %v3638 = vpop.permute.xlu0 %3637
  %3639 = vrot.lane.b32.xlu0 %v2993, 4
  %v3640 = vpop.permute.xlu0 %3639
  %3641 = vrot.lane.b32.xlu0 %v2998, 4
  %v3642 = vpop.permute.xlu0 %3641
  %3643 = vrot.lane.b32.xlu0 %v3003, 4
  %v3644 = vpop.permute.xlu0 %3643
  %3645 = vrot.lane.b32.xlu0 %v3008, 4
  %v3646 = vpop.permute.xlu0 %3645
  %3647 = vrot.lane.b32.xlu0 %v3013, 4
  %v3648 = vpop.permute.xlu0 %3647
  %3649 = vrot.lane.b32.xlu0 %v3018, 4
  %v3650 = vpop.permute.xlu0 %3649
  %3667 = vrot.lane.b32.xlu0 %v3244, 5
  %v3668 = vpop.permute.xlu0 %3667
  %3669 = vrot.lane.b32.xlu0 %v3249, 5
  %v3670 = vpop.permute.xlu0 %3669
  %3671 = vrot.lane.b32.xlu0 %v3254, 5
  %v3672 = vpop.permute.xlu0 %3671
  %3673 = vrot.lane.b32.xlu0 %v3259, 5
  %v3674 = vpop.permute.xlu0 %3673
  %3675 = vrot.lane.b32.xlu0 %v3264, 5
  %v3676 = vpop.permute.xlu0 %3675
  %3677 = vrot.lane.b32.xlu0 %v3269, 5
  %v3678 = vpop.permute.xlu0 %3677
  %3679 = vrot.lane.b32.xlu0 %v3274, 5
  %v3680 = vpop.permute.xlu0 %3679
  %3681 = vrot.lane.b32.xlu0 %v3279, 5
  %v3682 = vpop.permute.xlu0 %3681
  %3699 = vrot.lane.b32.xlu0 %v3369, 6
  %v3700 = vpop.permute.xlu0 %3699
  %3701 = vrot.lane.b32.xlu0 %v3374, 6
  %v3702 = vpop.permute.xlu0 %3701
  %3703 = vrot.lane.b32.xlu0 %v3379, 6
  %v3704 = vpop.permute.xlu0 %3703
  %3705 = vrot.lane.b32.xlu0 %v3384, 6
  %v3706 = vpop.permute.xlu0 %3705
  %3707 = vrot.lane.b32.xlu0 %v3389, 6
  %v3708 = vpop.permute.xlu0 %3707
  %3709 = vrot.lane.b32.xlu0 %v3394, 6
  %v3710 = vpop.permute.xlu0 %3709
  %3711 = vrot.lane.b32.xlu0 %v3399, 6
  %v3712 = vpop.permute.xlu0 %3711
  %3713 = vrot.lane.b32.xlu0 %v3404, 6
  %v3714 = vpop.permute.xlu0 %3713
  %3731 = vrot.lane.b32.xlu0 %v3493, 7
  %v3732 = vpop.permute.xlu0 %3731
  %3733 = vrot.lane.b32.xlu0 %v3498, 7
  %v3734 = vpop.permute.xlu0 %3733
  %3735 = vrot.lane.b32.xlu0 %v3503, 7
  %v3736 = vpop.permute.xlu0 %3735
  %3737 = vrot.lane.b32.xlu0 %v3508, 7
  %v3738 = vpop.permute.xlu0 %3737
  %3739 = vrot.lane.b32.xlu0 %v3513, 7
  %v3740 = vpop.permute.xlu0 %3739
  %3741 = vrot.lane.b32.xlu0 %v3518, 7
  %v3742 = vpop.permute.xlu0 %3741
  %3743 = vrot.lane.b32.xlu0 %v3523, 7
  %v3744 = vpop.permute.xlu0 %3743
  %3745 = vrot.lane.b32.xlu0 %v3528, 7
  %v3746 = vpop.permute.xlu0 %3745
  %vm3755 = vcmask 7168
  %v3756 = vsel %vm3755, %v2163, %v3540
  %v3757 = vsel %vm3755, %v2168, %v3542
  %v3758 = vsel %vm3755, %v2173, %v3544
  %v3759 = vsel %vm3755, %v2178, %v3546
  %v3760 = vsel %vm3755, %v2183, %v3548
  %v3761 = vsel %vm3755, %v2188, %v3550
  %v3762 = vsel %vm3755, %v2193, %v3552
  %v3763 = vsel %vm3755, %v2198, %v3554
  %vm3764 = vcmask 15360
  %v3765 = vsel %vm3764, %v3756, %v3572
  %v3766 = vsel %vm3764, %v3757, %v3574
  %v3767 = vsel %vm3764, %v3758, %v3576
  %v3768 = vsel %vm3764, %v3759, %v3578
  %v3769 = vsel %vm3764, %v3760, %v3580
  %v3770 = vsel %vm3764, %v3761, %v3582
  %v3771 = vsel %vm3764, %v3762, %v3584
  %v3772 = vsel %vm3764, %v3763, %v3586
  %vm3773 = vcmask 23552
  %v3774 = vsel %vm3773, %v3765, %v3604
  %v3775 = vsel %vm3773, %v3766, %v3606
  %v3776 = vsel %vm3773, %v3767, %v3608
  %v3777 = vsel %vm3773, %v3768, %v3610
  %v3778 = vsel %vm3773, %v3769, %v3612
  %v3779 = vsel %vm3773, %v3770, %v3614
  %v3780 = vsel %vm3773, %v3771, %v3616
  %v3781 = vsel %vm3773, %v3772, %v3618
  %vm3782 = vcmask 31744
  %v3783 = vsel %vm3782, %v3774, %v3636
  %v3784 = vsel %vm3782, %v3775, %v3638
  %v3785 = vsel %vm3782, %v3776, %v3640
  %v3786 = vsel %vm3782, %v3777, %v3642
  %v3787 = vsel %vm3782, %v3778, %v3644
  %v3788 = vsel %vm3782, %v3779, %v3646
  %v3789 = vsel %vm3782, %v3780, %v3648
  %v3790 = vsel %vm3782, %v3781, %v3650
  %vm3791 = vcmask 39936
  %v3792 = vsel %vm3791, %v3783, %v3668
  %v3793 = vsel %vm3791, %v3784, %v3670
  %v3794 = vsel %vm3791, %v3785, %v3672
  %v3795 = vsel %vm3791, %v3786, %v3674
  %v3796 = vsel %vm3791, %v3787, %v3676
  %v3797 = vsel %vm3791, %v3788, %v3678
  %v3798 = vsel %vm3791, %v3789, %v3680
  %v3799 = vsel %vm3791, %v3790, %v3682
  %vm3800 = vcmask 48128
  %v3801 = vsel %vm3800, %v3792, %v3700
  %v3802 = vsel %vm3800, %v3793, %v3702
  %v3803 = vsel %vm3800, %v3794, %v3704
  %v3804 = vsel %vm3800, %v3795, %v3706
  %v3805 = vsel %vm3800, %v3796, %v3708
  %v3806 = vsel %vm3800, %v3797, %v3710
  %v3807 = vsel %vm3800, %v3798, %v3712
  %v3808 = vsel %vm3800, %v3799, %v3714
  %vm3809 = vcmask 56320
  %v3810 = vsel %vm3809, %v3801, %v3732
  %v3811 = vsel %vm3809, %v3802, %v3734
  %v3812 = vsel %vm3809, %v3803, %v3736
  %v3813 = vsel %vm3809, %v3804, %v3738
  %v3814 = vsel %vm3809, %v3805, %v3740
  %v3815 = vsel %vm3809, %v3806, %v3742
  %v3816 = vsel %vm3809, %v3807, %v3744
  %v3817 = vsel %vm3809, %v3808, %v3746
  %v3818 = vtanh.pop %v3810
  %v3819 = vtanh.pop %v3811
  %v3820 = vtanh.pop %v3812
  %v3821 = vtanh.pop %v3813
  %v3822 = vtanh.pop %v3814
  %v3823 = vtanh.pop %v3815
  %v3824 = vtanh.pop %v3816
  %v3825 = vtanh.pop %v3817
  %vm3826 = vcmask 64512
  %3827 = vst.msk [vmem:[%s8] sm:$0xff] %vm3826, %v3818
  %3828 = vst.msk [vmem:[%s8 + $0x8] sm:$0xff] %vm3826, %v3819
  %3829 = vst.msk [vmem:[%s8 + $0x10] sm:$0xff] %vm3826, %v3820
  %3830 = vst.msk [vmem:[%s8 + $0x18] sm:$0xff] %vm3826, %v3821
  %3831 = vst.msk [vmem:[%s8 + $0x20] sm:$0xff] %vm3826, %v3822
  %3832 = vst.msk [vmem:[%s8 + $0x28] sm:$0xff] %vm3826, %v3823
  %3833 = vst.msk [vmem:[%s8 + $0x30] sm:$0xff] %vm3826, %v3824
  %3834 = vst.msk [vmem:[%s8 + $0x38] sm:$0xff] %vm3826, %v3825
  // Predicated region
  $region34: #{tpu_custom_call.1} parent=0 // pred_check
    _
  $region35: #{tpu_custom_call.1} parent=0 // pred_check_branch
    %3836 = sbr.rel (0) target = $region37
  $region36: #{tpu_custom_call.1} parent=0 // pred_region
    _
  $region37: #{tpu_custom_call.1} parent=0 // pred_fallthru
    _
  // Predicated region
  $region38: #{tpu_custom_call.1} parent=0 // pred_check
    _
  $region39: #{tpu_custom_call.1} parent=0 // pred_check_branch
    %3838 = sbr.rel (0) target = $region41
  $region40: #{tpu_custom_call.1} parent=0 // pred_region
    _
  $region41: #{tpu_custom_call.1} parent=0 // pred_fallthru
    _

</llo_original>
